<compile_context>
chip_gen: v5e
topology: v5e:2x2
jax: 0.10.0
libtpu: 0.0.40
codegen_flags: <defaults>
</compile_context>

<pallas_src>
import jax
import jax.numpy as jnp
from jax.experimental import pallas as pl
from jax.experimental.pallas import tpu as pltpu

NUM_GROUPS = 4
GN_EPS = 1e-5


# ----------------------------------------------------------------------------- #
# GroupNorm(4), channels-last, single batch element, lane-shuffle free:
# per-group stats via a (1,C)@(C,C) matmul with the block-diagonal
# group-membership matrix gmat (gmat[c,c'] = 1 iff same group).
# ----------------------------------------------------------------------------- #
def _group_norm(y, gamma, beta, gmat):
    Tn, C = y.shape
    inv_n = 1.0 / float(Tn * (C // NUM_GROUPS))
    colsum = jnp.sum(y, axis=0, keepdims=True)                      # (1,C)
    colsq = jnp.sum(y * y, axis=0, keepdims=True)                   # (1,C)
    mean_c = jnp.dot(colsum, gmat, preferred_element_type=jnp.float32) * inv_n
    ex2_c = jnp.dot(colsq, gmat, preferred_element_type=jnp.float32) * inv_n
    var_c = ex2_c - mean_c * mean_c                                 # biased, like PyTorch
    inv_c = jax.lax.rsqrt(var_c + GN_EPS)
    return (y - mean_c) * inv_c * gamma + beta


# ----------------------------------------------------------------------------- #
# Fused forward kernel: one grid step == one batch element.
# ----------------------------------------------------------------------------- #
def fused_forward_kernel(
        len_ref,                                    # SMEM (B,) int32
        x_ref, vid_ref,                             # (1,L,E), (1,T,Cv)
        wif_ref, whf_ref, bif_ref, bhf_ref,         # GRU forward
        wib_ref, whb_ref, bib_ref, bhb_ref,         # GRU backward
        wt_ref, bt_ref,                             # global text attention
        wv_ref, bv_ref, pos_ref,                    # video encoder + pos embed
        gmat_ref,                                   # (H,H) group membership
        w0_ref, g0_ref, be0_ref,                    # scale0
        sp1_ref, se1_ref, so1_ref,                  # stride-2 tap selection (scale1)
        w1c_ref, g1a_ref, be1a_ref, w1p_ref, b1p_ref, g1b_ref, be1b_ref,
        sp2_ref, se2_ref, so2_ref,                  # stride-2 tap selection (scale2)
        w2c_ref, g2a_ref, be2a_ref, w2p_ref, b2p_ref, g2b_ref, be2b_ref,
        fea0_ref, fea1_ref, fea2_ref, tw_ref):
    b = pl.program_id(0)
    length = len_ref[b]                             # scalar int32 (SMEM)

    L = x_ref.shape[1]
    H = whf_ref.shape[0]

    x = x_ref[0]                                    # (L, E)

    # ---------------- bidirectional GRU (packed-sequence semantics) -------- #
    # Hoisted input projections (input bias folded in) for all timesteps.
    gi_f = jnp.dot(x, wif_ref[...], preferred_element_type=jnp.float32) + bif_ref[...]
    gi_b = jnp.dot(x, wib_ref[...], preferred_element_type=jnp.float32) + bib_ref[...]
    whf, bhf = whf_ref[...], bhf_ref[...]
    whb, bhb = whb_ref[...], bhb_ref[...]

    def cell(gi_t, h, whh, bhh):                    # PyTorch gate order r, z, n
        gh = jnp.dot(h, whh, preferred_element_type=jnp.float32) + bhh
        r = jax.nn.sigmoid(gi_t[:, :H] + gh[:, :H])
        z = jax.nn.sigmoid(gi_t[:, H:2 * H] + gh[:, H:2 * H])
        n = jnp.tanh(gi_t[:, 2 * H:] + r * gh[:, 2 * H:])
        return (1.0 - z) * n + z * h

    # forward direction: output zero / state frozen past the sequence length
    h = jnp.zeros((1, H), jnp.float32)
    fwd = []
    for t in range(L):                              # L static -> unrolled
        h_new = cell(gi_f[t:t + 1, :], h, whf, bhf)
        valid = (t < length).astype(jnp.float32)    # scalar 0/1 blend
        fwd.append(h_new * valid)
        h = h_new * valid + h * (1.0 - valid)

    # backward direction (starts at t = length-1 per sequence, h0 = 0)
    h = jnp.zeros((1, H), jnp.float32)
    bwd = [None] * L
    for t in range(L - 1, -1, -1):
        h_new = cell(gi_b[t:t + 1, :], h, whb, bhb)
        valid = (t < length).astype(jnp.float32)
        bwd[t] = h_new * valid
        h = h_new * valid + h * (1.0 - valid)

    # bidirectional output .view(B,L,2,-1).mean(2)  == mean of directions
    text_feal = 0.5 * (jnp.concatenate(fwd, axis=0) + jnp.concatenate(bwd, axis=0))

    # ---------------- GlobalTextPresentation: masked softmax pooling ------- #
    row = jax.lax.broadcasted_iota(jnp.int32, (L, 1), 0)
    score = jnp.dot(text_feal, wt_ref[...], preferred_element_type=jnp.float32) + bt_ref[...]
    score = jnp.where(row < length, score, -1e30)
    score = score - jnp.max(score, axis=0, keepdims=True)
    e = jnp.exp(score)
    w = e / jnp.sum(e, axis=0, keepdims=True)       # softmax over words
    tw_ref[0] = w
    text_feag = jnp.sum(text_feal * w, axis=0, keepdims=True)       # (1,H)

    gmat = gmat_ref[...]

    # ---------------- video encoder conv1x1 + text_feag + pos_embedding ---- #
    vf = (jnp.dot(vid_ref[0], wv_ref[...], preferred_element_type=jnp.float32)
          + bv_ref[...] + text_feag + pos_ref[0])                   # (T,H)

    # ---------------- scale0: conv1x1(no bias) -> GN(4) -> ReLU ------------ #
    y0 = jnp.dot(vf, w0_ref[...], preferred_element_type=jnp.float32)
    fea0 = jnp.maximum(_group_norm(y0, g0_ref[...], be0_ref[...], gmat), 0.0)
    fea0_ref[0] = fea0

    # ---------------- scale1 / scale2 -------------------------------------- #
    # conv3 s2 p1 (no bias) -> GN -> ReLU -> conv1x1(+bias) -> GN -> ReLU
    # Stride-2 tap gather (x[2j-1], x[2j], x[2j+1], zero left-pad) is done on
    # the MXU with precomputed selection matrices; the 3 taps are one matmul
    # against the stacked (3C,C) conv weight.
    def scale_s2(xin, sp, se, so, wc, ga, bea, wp, bp, gb, beb):
        xp = jnp.dot(sp, xin, preferred_element_type=jnp.float32)   # x[2j-1]
        xe = jnp.dot(se, xin, preferred_element_type=jnp.float32)   # x[2j]
        xo = jnp.dot(so, xin, preferred_element_type=jnp.float32)   # x[2j+1]
        xg = jnp.concatenate([xp, xe, xo], axis=1)                  # (To, 3C)
        y = jnp.dot(xg, wc, preferred_element_type=jnp.float32)     # conv3 == one matmul
        y = jnp.maximum(_group_norm(y, ga, bea, gmat), 0.0)
        y = jnp.dot(y, wp, preferred_element_type=jnp.float32) + bp
        return jnp.maximum(_group_norm(y, gb, beb, gmat), 0.0)

    fea1 = scale_s2(fea0, sp1_ref[...], se1_ref[...], so1_ref[...],
                    w1c_ref[...], g1a_ref[...], be1a_ref[...],
                    w1p_ref[...], b1p_ref[...], g1b_ref[...], be1b_ref[...])
    fea1_ref[0] = fea1

    fea2 = scale_s2(fea1, sp2_ref[...], se2_ref[...], so2_ref[...],
                    w2c_ref[...], g2a_ref[...], be2a_ref[...],
                    w2p_ref[...], b2p_ref[...], g2b_ref[...], be2b_ref[...])
    fea2_ref[0] = fea2


# ----------------------------------------------------------------------------- #
# Wrapper glue
# ----------------------------------------------------------------------------- #
def _stride2_select(t_in):
    """Selection matrices for conv1d k=3, s=2, p=1 taps (output j uses rows
    2j-1 / 2j / 2j+1; row 0 of `sp` is zero == left zero padding)."""
    t_out = (t_in - 1) // 2 + 1
    j = jnp.arange(t_out)[:, None]
    i = jnp.arange(t_in)[None, :]
    sp = (i == 2 * j - 1).astype(jnp.float32)
    se = (i == 2 * j).astype(jnp.float32)
    so = (i == 2 * j + 1).astype(jnp.float32)
    return sp, se, so


@jax.jit
def model_forward(params, video_fea, embedding, embedding_length):
    B, T, Cv = video_fea.shape
    L, E = embedding.shape[1], embedding.shape[2]
    H = params["gru"]["whf_t"].shape[0]
    To1 = (T - 1) // 2 + 1
    To2 = (To1 - 1) // 2 + 1

    gid = jnp.arange(H) // (H // NUM_GROUPS)
    gmat = (gid[:, None] == gid[None, :]).astype(jnp.float32)        # (H,H)
    sp1, se1, so1 = _stride2_select(T)
    sp2, se2, so2 = _stride2_select(To1)
    s1, s2 = params["scale1"], params["scale2"]
    w1c = jnp.concatenate([s1["w0"], s1["w1"], s1["w2"]], axis=0)     # (3H,H)
    w2c = jnp.concatenate([s2["w0"], s2["w1"], s2["w2"]], axis=0)     # (3H,H)

    gru, gt, vd, s0 = params["gru"], params["gtext"], params["video"], params["scale0"]

    args = (embedding_length.astype(jnp.int32),
            embedding.astype(jnp.float32), video_fea.astype(jnp.float32),
            gru["wif_t"], gru["whf_t"], gru["bif"], gru["bhf"],
            gru["wib_t"], gru["whb_t"], gru["bib"], gru["bhb"],
            gt["wt_t"], gt["bt"],
            vd["wv_t"], vd["bv"], params["pos"],
            gmat,
            s0["w"], s0["g"], s0["be"],
            sp1, se1, so1,
            w1c, s1["g1"], s1["be1"], s1["wp"], s1["bp"], s1["g2"], s1["be2"],
            sp2, se2, so2,
            w2c, s2["g1"], s2["be1"], s2["wp"], s2["bp"], s2["g2"], s2["be2"])

    smem = pl.BlockSpec(memory_space=pltpu.MemorySpace.SMEM)
    vmem = pl.BlockSpec(memory_space=pltpu.MemorySpace.VMEM)

    def blk(n, c):
        return pl.BlockSpec((1, n, c), lambda b: (b, 0, 0))

    in_specs = [smem, blk(L, E), blk(T, Cv)] + [vmem] * (len(args) - 3)

    out_shape = (jax.ShapeDtypeStruct((B, T, H), jnp.float32),
                 jax.ShapeDtypeStruct((B, To1, H), jnp.float32),
                 jax.ShapeDtypeStruct((B, To2, H), jnp.float32),
                 jax.ShapeDtypeStruct((B, L, H), jnp.float32))
    out_specs = (blk(T, H), blk(To1, H), blk(To2, H), blk(L, H))

    fea0, fea1, fea2, text_weight = pl.pallas_call(
        fused_forward_kernel,
        out_shape=out_shape,
        grid=(B,),
        in_specs=in_specs,
        out_specs=out_specs,
        compiler_params=pltpu.CompilerParams(
            dimension_semantics=("parallel",)),       # batch across TCs on v7x
    )(*args)

    # TODO(synk): TCN0/TCN1/TCN2 and AnchorBasedDecoderFPN are undefined in the
    # reference source, so the forward returns FPN features + text attention.
    return (fea0, fea1, fea2), text_weight


# ----------------------------------------------------------------------------- #
# Deterministic parameter init (synthetic, not a checkpoint load)
# ----------------------------------------------------------------------------- #
def init_params(key, *, L, E, H, Cv, T):
    ks = iter(jax.random.split(key, 64))

    def nrm(shape, scale=0.1):
        return scale * jax.random.normal(next(ks), shape, dtype=jnp.float32)

    def gn():
        return jnp.ones((1, H), jnp.float32), jnp.zeros((1, H), jnp.float32)

    gru = dict(wif_t=nrm((E, 3 * H)), whf_t=nrm((H, 3 * H)),
               bif=nrm((1, 3 * H)), bhf=nrm((1, 3 * H)),
               wib_t=nrm((E, 3 * H)), whb_t=nrm((H, 3 * H)),
               bib=nrm((1, 3 * H)), bhb=nrm((1, 3 * H)))
    gtext = dict(wt_t=nrm((H, H)), bt=nrm((1, H)))
    video = dict(wv_t=nrm((Cv, H)), bv=nrm((1, H)))
    pos = nrm((1, T, H), scale=1.0)          # nn.Parameter(torch.randn(1,C,T)) in (1,T,C)

    g0, b0 = gn()
    scale0_p = dict(w=nrm((H, H)), g=g0, be=b0)

    def scale_s2_params():
        g1, be1 = gn()
        g2, be2 = gn()
        return dict(w0=nrm((H, H)), w1=nrm((H, H)), w2=nrm((H, H)),
                    g1=g1, be1=be1, wp=nrm((H, H)), bp=nrm((1, H)),
                    g2=g2, be2=be2)

    return dict(gru=gru, gtext=gtext, video=video, pos=pos,
                scale0=scale0_p, scale1=scale_s2_params(), scale2=scale_s2_params())


# ----------------------------------------------------------------------------- #
if __name__ == "__main__":
    # config: embedding_dim=32, attention_dim=32, video_fea_dim=64,
    #         segment_num=16, gru_bidirection=True
    B, L, E, H, Cv, T = 2, 8, 32, 32, 64, 16

    key = jax.random.PRNGKey(0)
    k_param, k_vid, k_emb = jax.random.split(key, 3)
    params = init_params(k_param, L=L, E=E, H=H, Cv=Cv, T=T)

    video_fea = jax.random.normal(k_vid, (B, T, Cv), dtype=jnp.float32)   # (B, T, video_fea_dim)
    embedding = jax.random.normal(k_emb, (B, L, E), dtype=jnp.float32)    # (B, L, embedding_dim)
    embedding_length = jnp.array([8, 5], dtype=jnp.int32)

    (fea0, fea1, fea2), text_weight = model_forward(params, video_fea, embedding, embedding_length)
    jax.block_until_ready((fea0, fea1, fea2, text_weight))

    assert fea0.shape == (B, T, H)
    assert fea1.shape == (B, T // 2, H)
    assert fea2.shape == (B, T // 4, H)
    assert text_weight.shape == (B, L, H)
    assert bool(jnp.all(jnp.isfinite(fea0)))
    assert bool(jnp.all(jnp.isfinite(fea2)))
    print("KERNEL_OK")
</pallas_src>

<mosaic_0001>
module attributes {stable_mosaic.version = 11 : i64} {
  func.func @fused_forward_kernel(%arg0: i32, %arg1: memref<2xi32, #tpu.memory_space<smem>>, %arg2: memref<1x8x32xf32, #tpu.memory_space<vmem>>, %arg3: memref<1x16x64xf32, #tpu.memory_space<vmem>>, %arg4: memref<32x96xf32, #tpu.memory_space<vmem>>, %arg5: memref<32x96xf32, #tpu.memory_space<vmem>>, %arg6: memref<1x96xf32, #tpu.memory_space<vmem>>, %arg7: memref<1x96xf32, #tpu.memory_space<vmem>>, %arg8: memref<32x96xf32, #tpu.memory_space<vmem>>, %arg9: memref<32x96xf32, #tpu.memory_space<vmem>>, %arg10: memref<1x96xf32, #tpu.memory_space<vmem>>, %arg11: memref<1x96xf32, #tpu.memory_space<vmem>>, %arg12: memref<32x32xf32, #tpu.memory_space<vmem>>, %arg13: memref<1x32xf32, #tpu.memory_space<vmem>>, %arg14: memref<64x32xf32, #tpu.memory_space<vmem>>, %arg15: memref<1x32xf32, #tpu.memory_space<vmem>>, %arg16: memref<1x16x32xf32, #tpu.memory_space<vmem>>, %arg17: memref<32x32xf32, #tpu.memory_space<vmem>>, %arg18: memref<32x32xf32, #tpu.memory_space<vmem>>, %arg19: memref<1x32xf32, #tpu.memory_space<vmem>>, %arg20: memref<1x32xf32, #tpu.memory_space<vmem>>, %arg21: memref<8x16xf32, #tpu.memory_space<vmem>>, %arg22: memref<8x16xf32, #tpu.memory_space<vmem>>, %arg23: memref<8x16xf32, #tpu.memory_space<vmem>>, %arg24: memref<96x32xf32, #tpu.memory_space<vmem>>, %arg25: memref<1x32xf32, #tpu.memory_space<vmem>>, %arg26: memref<1x32xf32, #tpu.memory_space<vmem>>, %arg27: memref<32x32xf32, #tpu.memory_space<vmem>>, %arg28: memref<1x32xf32, #tpu.memory_space<vmem>>, %arg29: memref<1x32xf32, #tpu.memory_space<vmem>>, %arg30: memref<1x32xf32, #tpu.memory_space<vmem>>, %arg31: memref<4x8xf32, #tpu.memory_space<vmem>>, %arg32: memref<4x8xf32, #tpu.memory_space<vmem>>, %arg33: memref<4x8xf32, #tpu.memory_space<vmem>>, %arg34: memref<96x32xf32, #tpu.memory_space<vmem>>, %arg35: memref<1x32xf32, #tpu.memory_space<vmem>>, %arg36: memref<1x32xf32, #tpu.memory_space<vmem>>, %arg37: memref<32x32xf32, #tpu.memory_space<vmem>>, %arg38: memref<1x32xf32, #tpu.memory_space<vmem>>, %arg39: memref<1x32xf32, #tpu.memory_space<vmem>>, %arg40: memref<1x32xf32, #tpu.memory_space<vmem>>, %arg41: memref<1x16x32xf32, #tpu.memory_space<vmem>>, %arg42: memref<1x8x32xf32, #tpu.memory_space<vmem>>, %arg43: memref<1x4x32xf32, #tpu.memory_space<vmem>>, %arg44: memref<1x8x32xf32, #tpu.memory_space<vmem>>) attributes {dimension_semantics = [#tpu.dimension_semantics<parallel>], iteration_bounds = array<i64: 2>, scalar_prefetch = 0 : i64, scratch_operands = 0 : i64, tpu.core_type = #tpu.core_type<tc>, window_params = [{transform_indices = @transform_0, window_bounds = array<i64: 2>}, {transform_indices = @transform_1, window_bounds = array<i64: 1, 8, 32>}, {transform_indices = @transform_2, window_bounds = array<i64: 1, 16, 64>}, {pipeline_mode = #tpu.pipeline_mode<synchronous>, transform_indices = @transform_3, window_bounds = array<i64: 32, 96>}, {pipeline_mode = #tpu.pipeline_mode<synchronous>, transform_indices = @transform_4, window_bounds = array<i64: 32, 96>}, {pipeline_mode = #tpu.pipeline_mode<synchronous>, transform_indices = @transform_5, window_bounds = array<i64: 1, 96>}, {pipeline_mode = #tpu.pipeline_mode<synchronous>, transform_indices = @transform_6, window_bounds = array<i64: 1, 96>}, {pipeline_mode = #tpu.pipeline_mode<synchronous>, transform_indices = @transform_7, window_bounds = array<i64: 32, 96>}, {pipeline_mode = #tpu.pipeline_mode<synchronous>, transform_indices = @transform_8, window_bounds = array<i64: 32, 96>}, {pipeline_mode = #tpu.pipeline_mode<synchronous>, transform_indices = @transform_9, window_bounds = array<i64: 1, 96>}, {pipeline_mode = #tpu.pipeline_mode<synchronous>, transform_indices = @transform_10, window_bounds = array<i64: 1, 96>}, {pipeline_mode = #tpu.pipeline_mode<synchronous>, transform_indices = @transform_11, window_bounds = array<i64: 32, 32>}, {pipeline_mode = #tpu.pipeline_mode<synchronous>, transform_indices = @transform_12, window_bounds = array<i64: 1, 32>}, {pipeline_mode = #tpu.pipeline_mode<synchronous>, transform_indices = @transform_13, window_bounds = array<i64: 64, 32>}, {pipeline_mode = #tpu.pipeline_mode<synchronous>, transform_indices = @transform_14, window_bounds = array<i64: 1, 32>}, {pipeline_mode = #tpu.pipeline_mode<synchronous>, transform_indices = @transform_15, window_bounds = array<i64: 1, 16, 32>}, {pipeline_mode = #tpu.pipeline_mode<synchronous>, transform_indices = @transform_16, window_bounds = array<i64: 32, 32>}, {pipeline_mode = #tpu.pipeline_mode<synchronous>, transform_indices = @transform_17, window_bounds = array<i64: 32, 32>}, {pipeline_mode = #tpu.pipeline_mode<synchronous>, transform_indices = @transform_18, window_bounds = array<i64: 1, 32>}, {pipeline_mode = #tpu.pipeline_mode<synchronous>, transform_indices = @transform_19, window_bounds = array<i64: 1, 32>}, {pipeline_mode = #tpu.pipeline_mode<synchronous>, transform_indices = @transform_20, window_bounds = array<i64: 8, 16>}, {pipeline_mode = #tpu.pipeline_mode<synchronous>, transform_indices = @transform_21, window_bounds = array<i64: 8, 16>}, {pipeline_mode = #tpu.pipeline_mode<synchronous>, transform_indices = @transform_22, window_bounds = array<i64: 8, 16>}, {pipeline_mode = #tpu.pipeline_mode<synchronous>, transform_indices = @transform_23, window_bounds = array<i64: 96, 32>}, {pipeline_mode = #tpu.pipeline_mode<synchronous>, transform_indices = @transform_24, window_bounds = array<i64: 1, 32>}, {pipeline_mode = #tpu.pipeline_mode<synchronous>, transform_indices = @transform_25, window_bounds = array<i64: 1, 32>}, {pipeline_mode = #tpu.pipeline_mode<synchronous>, transform_indices = @transform_26, window_bounds = array<i64: 32, 32>}, {pipeline_mode = #tpu.pipeline_mode<synchronous>, transform_indices = @transform_27, window_bounds = array<i64: 1, 32>}, {pipeline_mode = #tpu.pipeline_mode<synchronous>, transform_indices = @transform_28, window_bounds = array<i64: 1, 32>}, {pipeline_mode = #tpu.pipeline_mode<synchronous>, transform_indices = @transform_29, window_bounds = array<i64: 1, 32>}, {pipeline_mode = #tpu.pipeline_mode<synchronous>, transform_indices = @transform_30, window_bounds = array<i64: 4, 8>}, {pipeline_mode = #tpu.pipeline_mode<synchronous>, transform_indices = @transform_31, window_bounds = array<i64: 4, 8>}, {pipeline_mode = #tpu.pipeline_mode<synchronous>, transform_indices = @transform_32, window_bounds = array<i64: 4, 8>}, {pipeline_mode = #tpu.pipeline_mode<synchronous>, transform_indices = @transform_33, window_bounds = array<i64: 96, 32>}, {pipeline_mode = #tpu.pipeline_mode<synchronous>, transform_indices = @transform_34, window_bounds = array<i64: 1, 32>}, {pipeline_mode = #tpu.pipeline_mode<synchronous>, transform_indices = @transform_35, window_bounds = array<i64: 1, 32>}, {pipeline_mode = #tpu.pipeline_mode<synchronous>, transform_indices = @transform_36, window_bounds = array<i64: 32, 32>}, {pipeline_mode = #tpu.pipeline_mode<synchronous>, transform_indices = @transform_37, window_bounds = array<i64: 1, 32>}, {pipeline_mode = #tpu.pipeline_mode<synchronous>, transform_indices = @transform_38, window_bounds = array<i64: 1, 32>}, {pipeline_mode = #tpu.pipeline_mode<synchronous>, transform_indices = @transform_39, window_bounds = array<i64: 1, 32>}, {transform_indices = @transform_40, window_bounds = array<i64: 1, 16, 32>}, {transform_indices = @transform_41, window_bounds = array<i64: 1, 8, 32>}, {transform_indices = @transform_42, window_bounds = array<i64: 1, 4, 32>}, {transform_indices = @transform_43, window_bounds = array<i64: 1, 8, 32>}]} {
    %0 = arith.index_cast %arg0 : i32 to index
    %1 = memref.load %arg1[%0] : memref<2xi32, #tpu.memory_space<smem>>
    %c0 = arith.constant 0 : index
    %c0_0 = arith.constant 0 : index
    %c0_1 = arith.constant 0 : index
    %2 = vector.load %arg2[%c0, %c0_0, %c0_1] : memref<1x8x32xf32, #tpu.memory_space<vmem>>, vector<1x8x32xf32>
    %3 = vector.shape_cast %2 : vector<1x8x32xf32> to vector<8x32xf32>
    %c0_2 = arith.constant 0 : index
    %c0_3 = arith.constant 0 : index
    %4 = vector.load %arg4[%c0_2, %c0_3] : memref<32x96xf32, #tpu.memory_space<vmem>>, vector<32x96xf32>
    %cst = arith.constant dense<0.000000e+00> : vector<8x96xf32>
    %5 = tpu.matmul %3, %4, %cst {dimension_numbers = #tpu.dot_dimension_numbers<[1], [0], [0], [1], [0, 0, 1, 1], [], []>} : vector<8x32xf32>, vector<32x96xf32>, vector<8x96xf32> -> vector<8x96xf32>
    %c0_4 = arith.constant 0 : index
    %c0_5 = arith.constant 0 : index
    %6 = vector.load %arg6[%c0_4, %c0_5] : memref<1x96xf32, #tpu.memory_space<vmem>>, vector<1x96xf32>
    %7 = vector.broadcast %6 : vector<1x96xf32> to vector<8x96xf32>
    %8 = arith.addf %5, %7 : vector<8x96xf32>
    %c0_6 = arith.constant 0 : index
    %c0_7 = arith.constant 0 : index
    %9 = vector.load %arg8[%c0_6, %c0_7] : memref<32x96xf32, #tpu.memory_space<vmem>>, vector<32x96xf32>
    %cst_8 = arith.constant dense<0.000000e+00> : vector<8x96xf32>
    %10 = tpu.matmul %3, %9, %cst_8 {dimension_numbers = #tpu.dot_dimension_numbers<[1], [0], [0], [1], [0, 0, 1, 1], [], []>} : vector<8x32xf32>, vector<32x96xf32>, vector<8x96xf32> -> vector<8x96xf32>
    %c0_9 = arith.constant 0 : index
    %c0_10 = arith.constant 0 : index
    %11 = vector.load %arg10[%c0_9, %c0_10] : memref<1x96xf32, #tpu.memory_space<vmem>>, vector<1x96xf32>
    %12 = vector.broadcast %11 : vector<1x96xf32> to vector<8x96xf32>
    %13 = arith.addf %10, %12 : vector<8x96xf32>
    %c0_11 = arith.constant 0 : index
    %c0_12 = arith.constant 0 : index
    %14 = vector.load %arg5[%c0_11, %c0_12] : memref<32x96xf32, #tpu.memory_space<vmem>>, vector<32x96xf32>
    %c0_13 = arith.constant 0 : index
    %c0_14 = arith.constant 0 : index
    %15 = vector.load %arg7[%c0_13, %c0_14] : memref<1x96xf32, #tpu.memory_space<vmem>>, vector<1x96xf32>
    %c0_15 = arith.constant 0 : index
    %c0_16 = arith.constant 0 : index
    %16 = vector.load %arg9[%c0_15, %c0_16] : memref<32x96xf32, #tpu.memory_space<vmem>>, vector<32x96xf32>
    %c0_17 = arith.constant 0 : index
    %c0_18 = arith.constant 0 : index
    %17 = vector.load %arg11[%c0_17, %c0_18] : memref<1x96xf32, #tpu.memory_space<vmem>>, vector<1x96xf32>
    %cst_19 = arith.constant 0.000000e+00 : f32
    %18 = vector.broadcast %cst_19 : f32 to vector<1x32xf32>
    %19 = vector.extract_strided_slice %8 {offsets = [0, 0], sizes = [1, 96], strides = [1, 1]} : vector<8x96xf32> to vector<1x96xf32>
    %cst_20 = arith.constant dense<0.000000e+00> : vector<1x96xf32>
    %20 = tpu.matmul %18, %14, %cst_20 {dimension_numbers = #tpu.dot_dimension_numbers<[1], [0], [0], [1], [0, 0, 1, 1], [], []>} : vector<1x32xf32>, vector<32x96xf32>, vector<1x96xf32> -> vector<1x96xf32>
    %21 = arith.addf %20, %15 : vector<1x96xf32>
    %22 = vector.extract_strided_slice %19 {offsets = [0, 0], sizes = [1, 32], strides = [1, 1]} : vector<1x96xf32> to vector<1x32xf32>
    %23 = vector.extract_strided_slice %21 {offsets = [0, 0], sizes = [1, 32], strides = [1, 1]} : vector<1x96xf32> to vector<1x32xf32>
    %24 = arith.addf %22, %23 : vector<1x32xf32>
    %25 = arith.negf %24 : vector<1x32xf32>
    %26 = math.exp %25 : vector<1x32xf32>
    %cst_21 = arith.constant 1.000000e+00 : f32
    %27 = vector.broadcast %cst_21 : f32 to vector<1x32xf32>
    %28 = arith.addf %27, %26 : vector<1x32xf32>
    %29 = arith.divf %27, %28 : vector<1x32xf32>
    %30 = vector.extract_strided_slice %19 {offsets = [0, 32], sizes = [1, 32], strides = [1, 1]} : vector<1x96xf32> to vector<1x32xf32>
    %31 = vector.extract_strided_slice %21 {offsets = [0, 32], sizes = [1, 32], strides = [1, 1]} : vector<1x96xf32> to vector<1x32xf32>
    %32 = arith.addf %30, %31 : vector<1x32xf32>
    %33 = arith.negf %32 : vector<1x32xf32>
    %34 = math.exp %33 : vector<1x32xf32>
    %cst_22 = arith.constant 1.000000e+00 : f32
    %35 = vector.broadcast %cst_22 : f32 to vector<1x32xf32>
    %36 = arith.addf %35, %34 : vector<1x32xf32>
    %37 = arith.divf %35, %36 : vector<1x32xf32>
    %38 = vector.extract_strided_slice %19 {offsets = [0, 64], sizes = [1, 32], strides = [1, 1]} : vector<1x96xf32> to vector<1x32xf32>
    %39 = vector.extract_strided_slice %21 {offsets = [0, 64], sizes = [1, 32], strides = [1, 1]} : vector<1x96xf32> to vector<1x32xf32>
    %40 = arith.mulf %29, %39 : vector<1x32xf32>
    %41 = arith.addf %38, %40 : vector<1x32xf32>
    %42 = math.tanh %41 : vector<1x32xf32>
    %cst_23 = arith.constant 1.000000e+00 : f32
    %43 = vector.broadcast %cst_23 : f32 to vector<1x32xf32>
    %44 = arith.subf %43, %37 : vector<1x32xf32>
    %45 = arith.mulf %44, %42 : vector<1x32xf32>
    %46 = arith.mulf %37, %18 : vector<1x32xf32>
    %47 = arith.addf %45, %46 : vector<1x32xf32>
    %c0_i32 = arith.constant 0 : i32
    %48 = arith.cmpi sgt, %1, %c0_i32 : i32
    %49 = arith.extui %48 : i1 to i32
    %50 = arith.sitofp %49 : i32 to f32
    %51 = vector.broadcast %50 : f32 to vector<1x32xf32>
    %52 = arith.mulf %47, %51 : vector<1x32xf32>
    %53 = vector.broadcast %50 : f32 to vector<1x32xf32>
    %54 = arith.mulf %47, %53 : vector<1x32xf32>
    %cst_24 = arith.constant 1.000000e+00 : f32
    %55 = arith.subf %cst_24, %50 : f32
    %56 = vector.broadcast %55 : f32 to vector<1x32xf32>
    %57 = arith.mulf %18, %56 : vector<1x32xf32>
    %58 = arith.addf %54, %57 : vector<1x32xf32>
    %59 = vector.extract_strided_slice %8 {offsets = [1, 0], sizes = [1, 96], strides = [1, 1]} : vector<8x96xf32> to vector<1x96xf32>
    %cst_25 = arith.constant dense<0.000000e+00> : vector<1x96xf32>
    %60 = tpu.matmul %58, %14, %cst_25 {dimension_numbers = #tpu.dot_dimension_numbers<[1], [0], [0], [1], [0, 0, 1, 1], [], []>} : vector<1x32xf32>, vector<32x96xf32>, vector<1x96xf32> -> vector<1x96xf32>
    %61 = arith.addf %60, %15 : vector<1x96xf32>
    %62 = vector.extract_strided_slice %59 {offsets = [0, 0], sizes = [1, 32], strides = [1, 1]} : vector<1x96xf32> to vector<1x32xf32>
    %63 = vector.extract_strided_slice %61 {offsets = [0, 0], sizes = [1, 32], strides = [1, 1]} : vector<1x96xf32> to vector<1x32xf32>
    %64 = arith.addf %62, %63 : vector<1x32xf32>
    %65 = arith.negf %64 : vector<1x32xf32>
    %66 = math.exp %65 : vector<1x32xf32>
    %cst_26 = arith.constant 1.000000e+00 : f32
    %67 = vector.broadcast %cst_26 : f32 to vector<1x32xf32>
    %68 = arith.addf %67, %66 : vector<1x32xf32>
    %69 = arith.divf %67, %68 : vector<1x32xf32>
    %70 = vector.extract_strided_slice %59 {offsets = [0, 32], sizes = [1, 32], strides = [1, 1]} : vector<1x96xf32> to vector<1x32xf32>
    %71 = vector.extract_strided_slice %61 {offsets = [0, 32], sizes = [1, 32], strides = [1, 1]} : vector<1x96xf32> to vector<1x32xf32>
    %72 = arith.addf %70, %71 : vector<1x32xf32>
    %73 = arith.negf %72 : vector<1x32xf32>
    %74 = math.exp %73 : vector<1x32xf32>
    %cst_27 = arith.constant 1.000000e+00 : f32
    %75 = vector.broadcast %cst_27 : f32 to vector<1x32xf32>
    %76 = arith.addf %75, %74 : vector<1x32xf32>
    %77 = arith.divf %75, %76 : vector<1x32xf32>
    %78 = vector.extract_strided_slice %59 {offsets = [0, 64], sizes = [1, 32], strides = [1, 1]} : vector<1x96xf32> to vector<1x32xf32>
    %79 = vector.extract_strided_slice %61 {offsets = [0, 64], sizes = [1, 32], strides = [1, 1]} : vector<1x96xf32> to vector<1x32xf32>
    %80 = arith.mulf %69, %79 : vector<1x32xf32>
    %81 = arith.addf %78, %80 : vector<1x32xf32>
    %82 = math.tanh %81 : vector<1x32xf32>
    %cst_28 = arith.constant 1.000000e+00 : f32
    %83 = vector.broadcast %cst_28 : f32 to vector<1x32xf32>
    %84 = arith.subf %83, %77 : vector<1x32xf32>
    %85 = arith.mulf %84, %82 : vector<1x32xf32>
    %86 = arith.mulf %77, %58 : vector<1x32xf32>
    %87 = arith.addf %85, %86 : vector<1x32xf32>
    %c1_i32 = arith.constant 1 : i32
    %88 = arith.cmpi sgt, %1, %c1_i32 : i32
    %89 = arith.extui %88 : i1 to i32
    %90 = arith.sitofp %89 : i32 to f32
    %91 = vector.broadcast %90 : f32 to vector<1x32xf32>
    %92 = arith.mulf %87, %91 : vector<1x32xf32>
    %93 = vector.broadcast %90 : f32 to vector<1x32xf32>
    %94 = arith.mulf %87, %93 : vector<1x32xf32>
    %cst_29 = arith.constant 1.000000e+00 : f32
    %95 = arith.subf %cst_29, %90 : f32
    %96 = vector.broadcast %95 : f32 to vector<1x32xf32>
    %97 = arith.mulf %58, %96 : vector<1x32xf32>
    %98 = arith.addf %94, %97 : vector<1x32xf32>
    %99 = vector.extract_strided_slice %8 {offsets = [2, 0], sizes = [1, 96], strides = [1, 1]} : vector<8x96xf32> to vector<1x96xf32>
    %cst_30 = arith.constant dense<0.000000e+00> : vector<1x96xf32>
    %100 = tpu.matmul %98, %14, %cst_30 {dimension_numbers = #tpu.dot_dimension_numbers<[1], [0], [0], [1], [0, 0, 1, 1], [], []>} : vector<1x32xf32>, vector<32x96xf32>, vector<1x96xf32> -> vector<1x96xf32>
    %101 = arith.addf %100, %15 : vector<1x96xf32>
    %102 = vector.extract_strided_slice %99 {offsets = [0, 0], sizes = [1, 32], strides = [1, 1]} : vector<1x96xf32> to vector<1x32xf32>
    %103 = vector.extract_strided_slice %101 {offsets = [0, 0], sizes = [1, 32], strides = [1, 1]} : vector<1x96xf32> to vector<1x32xf32>
    %104 = arith.addf %102, %103 : vector<1x32xf32>
    %105 = arith.negf %104 : vector<1x32xf32>
    %106 = math.exp %105 : vector<1x32xf32>
    %cst_31 = arith.constant 1.000000e+00 : f32
    %107 = vector.broadcast %cst_31 : f32 to vector<1x32xf32>
    %108 = arith.addf %107, %106 : vector<1x32xf32>
    %109 = arith.divf %107, %108 : vector<1x32xf32>
    %110 = vector.extract_strided_slice %99 {offsets = [0, 32], sizes = [1, 32], strides = [1, 1]} : vector<1x96xf32> to vector<1x32xf32>
    %111 = vector.extract_strided_slice %101 {offsets = [0, 32], sizes = [1, 32], strides = [1, 1]} : vector<1x96xf32> to vector<1x32xf32>
    %112 = arith.addf %110, %111 : vector<1x32xf32>
    %113 = arith.negf %112 : vector<1x32xf32>
    %114 = math.exp %113 : vector<1x32xf32>
    %cst_32 = arith.constant 1.000000e+00 : f32
    %115 = vector.broadcast %cst_32 : f32 to vector<1x32xf32>
    %116 = arith.addf %115, %114 : vector<1x32xf32>
    %117 = arith.divf %115, %116 : vector<1x32xf32>
    %118 = vector.extract_strided_slice %99 {offsets = [0, 64], sizes = [1, 32], strides = [1, 1]} : vector<1x96xf32> to vector<1x32xf32>
    %119 = vector.extract_strided_slice %101 {offsets = [0, 64], sizes = [1, 32], strides = [1, 1]} : vector<1x96xf32> to vector<1x32xf32>
    %120 = arith.mulf %109, %119 : vector<1x32xf32>
    %121 = arith.addf %118, %120 : vector<1x32xf32>
    %122 = math.tanh %121 : vector<1x32xf32>
    %cst_33 = arith.constant 1.000000e+00 : f32
    %123 = vector.broadcast %cst_33 : f32 to vector<1x32xf32>
    %124 = arith.subf %123, %117 : vector<1x32xf32>
    %125 = arith.mulf %124, %122 : vector<1x32xf32>
    %126 = arith.mulf %117, %98 : vector<1x32xf32>
    %127 = arith.addf %125, %126 : vector<1x32xf32>
    %c2_i32 = arith.constant 2 : i32
    %128 = arith.cmpi sgt, %1, %c2_i32 : i32
    %129 = arith.extui %128 : i1 to i32
    %130 = arith.sitofp %129 : i32 to f32
    %131 = vector.broadcast %130 : f32 to vector<1x32xf32>
    %132 = arith.mulf %127, %131 : vector<1x32xf32>
    %133 = vector.broadcast %130 : f32 to vector<1x32xf32>
    %134 = arith.mulf %127, %133 : vector<1x32xf32>
    %cst_34 = arith.constant 1.000000e+00 : f32
    %135 = arith.subf %cst_34, %130 : f32
    %136 = vector.broadcast %135 : f32 to vector<1x32xf32>
    %137 = arith.mulf %98, %136 : vector<1x32xf32>
    %138 = arith.addf %134, %137 : vector<1x32xf32>
    %139 = vector.extract_strided_slice %8 {offsets = [3, 0], sizes = [1, 96], strides = [1, 1]} : vector<8x96xf32> to vector<1x96xf32>
    %cst_35 = arith.constant dense<0.000000e+00> : vector<1x96xf32>
    %140 = tpu.matmul %138, %14, %cst_35 {dimension_numbers = #tpu.dot_dimension_numbers<[1], [0], [0], [1], [0, 0, 1, 1], [], []>} : vector<1x32xf32>, vector<32x96xf32>, vector<1x96xf32> -> vector<1x96xf32>
    %141 = arith.addf %140, %15 : vector<1x96xf32>
    %142 = vector.extract_strided_slice %139 {offsets = [0, 0], sizes = [1, 32], strides = [1, 1]} : vector<1x96xf32> to vector<1x32xf32>
    %143 = vector.extract_strided_slice %141 {offsets = [0, 0], sizes = [1, 32], strides = [1, 1]} : vector<1x96xf32> to vector<1x32xf32>
    %144 = arith.addf %142, %143 : vector<1x32xf32>
    %145 = arith.negf %144 : vector<1x32xf32>
    %146 = math.exp %145 : vector<1x32xf32>
    %cst_36 = arith.constant 1.000000e+00 : f32
    %147 = vector.broadcast %cst_36 : f32 to vector<1x32xf32>
    %148 = arith.addf %147, %146 : vector<1x32xf32>
    %149 = arith.divf %147, %148 : vector<1x32xf32>
    %150 = vector.extract_strided_slice %139 {offsets = [0, 32], sizes = [1, 32], strides = [1, 1]} : vector<1x96xf32> to vector<1x32xf32>
    %151 = vector.extract_strided_slice %141 {offsets = [0, 32], sizes = [1, 32], strides = [1, 1]} : vector<1x96xf32> to vector<1x32xf32>
    %152 = arith.addf %150, %151 : vector<1x32xf32>
    %153 = arith.negf %152 : vector<1x32xf32>
    %154 = math.exp %153 : vector<1x32xf32>
    %cst_37 = arith.constant 1.000000e+00 : f32
    %155 = vector.broadcast %cst_37 : f32 to vector<1x32xf32>
    %156 = arith.addf %155, %154 : vector<1x32xf32>
    %157 = arith.divf %155, %156 : vector<1x32xf32>
    %158 = vector.extract_strided_slice %139 {offsets = [0, 64], sizes = [1, 32], strides = [1, 1]} : vector<1x96xf32> to vector<1x32xf32>
    %159 = vector.extract_strided_slice %141 {offsets = [0, 64], sizes = [1, 32], strides = [1, 1]} : vector<1x96xf32> to vector<1x32xf32>
    %160 = arith.mulf %149, %159 : vector<1x32xf32>
    %161 = arith.addf %158, %160 : vector<1x32xf32>
    %162 = math.tanh %161 : vector<1x32xf32>
    %cst_38 = arith.constant 1.000000e+00 : f32
    %163 = vector.broadcast %cst_38 : f32 to vector<1x32xf32>
    %164 = arith.subf %163, %157 : vector<1x32xf32>
    %165 = arith.mulf %164, %162 : vector<1x32xf32>
    %166 = arith.mulf %157, %138 : vector<1x32xf32>
    %167 = arith.addf %165, %166 : vector<1x32xf32>
    %c3_i32 = arith.constant 3 : i32
    %168 = arith.cmpi sgt, %1, %c3_i32 : i32
    %169 = arith.extui %168 : i1 to i32
    %170 = arith.sitofp %169 : i32 to f32
    %171 = vector.broadcast %170 : f32 to vector<1x32xf32>
    %172 = arith.mulf %167, %171 : vector<1x32xf32>
    %173 = vector.broadcast %170 : f32 to vector<1x32xf32>
    %174 = arith.mulf %167, %173 : vector<1x32xf32>
    %cst_39 = arith.constant 1.000000e+00 : f32
    %175 = arith.subf %cst_39, %170 : f32
    %176 = vector.broadcast %175 : f32 to vector<1x32xf32>
    %177 = arith.mulf %138, %176 : vector<1x32xf32>
    %178 = arith.addf %174, %177 : vector<1x32xf32>
    %179 = vector.extract_strided_slice %8 {offsets = [4, 0], sizes = [1, 96], strides = [1, 1]} : vector<8x96xf32> to vector<1x96xf32>
    %cst_40 = arith.constant dense<0.000000e+00> : vector<1x96xf32>
    %180 = tpu.matmul %178, %14, %cst_40 {dimension_numbers = #tpu.dot_dimension_numbers<[1], [0], [0], [1], [0, 0, 1, 1], [], []>} : vector<1x32xf32>, vector<32x96xf32>, vector<1x96xf32> -> vector<1x96xf32>
    %181 = arith.addf %180, %15 : vector<1x96xf32>
    %182 = vector.extract_strided_slice %179 {offsets = [0, 0], sizes = [1, 32], strides = [1, 1]} : vector<1x96xf32> to vector<1x32xf32>
    %183 = vector.extract_strided_slice %181 {offsets = [0, 0], sizes = [1, 32], strides = [1, 1]} : vector<1x96xf32> to vector<1x32xf32>
    %184 = arith.addf %182, %183 : vector<1x32xf32>
    %185 = arith.negf %184 : vector<1x32xf32>
    %186 = math.exp %185 : vector<1x32xf32>
    %cst_41 = arith.constant 1.000000e+00 : f32
    %187 = vector.broadcast %cst_41 : f32 to vector<1x32xf32>
    %188 = arith.addf %187, %186 : vector<1x32xf32>
    %189 = arith.divf %187, %188 : vector<1x32xf32>
    %190 = vector.extract_strided_slice %179 {offsets = [0, 32], sizes = [1, 32], strides = [1, 1]} : vector<1x96xf32> to vector<1x32xf32>
    %191 = vector.extract_strided_slice %181 {offsets = [0, 32], sizes = [1, 32], strides = [1, 1]} : vector<1x96xf32> to vector<1x32xf32>
    %192 = arith.addf %190, %191 : vector<1x32xf32>
    %193 = arith.negf %192 : vector<1x32xf32>
    %194 = math.exp %193 : vector<1x32xf32>
    %cst_42 = arith.constant 1.000000e+00 : f32
    %195 = vector.broadcast %cst_42 : f32 to vector<1x32xf32>
    %196 = arith.addf %195, %194 : vector<1x32xf32>
    %197 = arith.divf %195, %196 : vector<1x32xf32>
    %198 = vector.extract_strided_slice %179 {offsets = [0, 64], sizes = [1, 32], strides = [1, 1]} : vector<1x96xf32> to vector<1x32xf32>
    %199 = vector.extract_strided_slice %181 {offsets = [0, 64], sizes = [1, 32], strides = [1, 1]} : vector<1x96xf32> to vector<1x32xf32>
    %200 = arith.mulf %189, %199 : vector<1x32xf32>
    %201 = arith.addf %198, %200 : vector<1x32xf32>
    %202 = math.tanh %201 : vector<1x32xf32>
    %cst_43 = arith.constant 1.000000e+00 : f32
    %203 = vector.broadcast %cst_43 : f32 to vector<1x32xf32>
    %204 = arith.subf %203, %197 : vector<1x32xf32>
    %205 = arith.mulf %204, %202 : vector<1x32xf32>
    %206 = arith.mulf %197, %178 : vector<1x32xf32>
    %207 = arith.addf %205, %206 : vector<1x32xf32>
    %c4_i32 = arith.constant 4 : i32
    %208 = arith.cmpi sgt, %1, %c4_i32 : i32
    %209 = arith.extui %208 : i1 to i32
    %210 = arith.sitofp %209 : i32 to f32
    %211 = vector.broadcast %210 : f32 to vector<1x32xf32>
    %212 = arith.mulf %207, %211 : vector<1x32xf32>
    %213 = vector.broadcast %210 : f32 to vector<1x32xf32>
    %214 = arith.mulf %207, %213 : vector<1x32xf32>
    %cst_44 = arith.constant 1.000000e+00 : f32
    %215 = arith.subf %cst_44, %210 : f32
    %216 = vector.broadcast %215 : f32 to vector<1x32xf32>
    %217 = arith.mulf %178, %216 : vector<1x32xf32>
    %218 = arith.addf %214, %217 : vector<1x32xf32>
    %219 = vector.extract_strided_slice %8 {offsets = [5, 0], sizes = [1, 96], strides = [1, 1]} : vector<8x96xf32> to vector<1x96xf32>
    %cst_45 = arith.constant dense<0.000000e+00> : vector<1x96xf32>
    %220 = tpu.matmul %218, %14, %cst_45 {dimension_numbers = #tpu.dot_dimension_numbers<[1], [0], [0], [1], [0, 0, 1, 1], [], []>} : vector<1x32xf32>, vector<32x96xf32>, vector<1x96xf32> -> vector<1x96xf32>
    %221 = arith.addf %220, %15 : vector<1x96xf32>
    %222 = vector.extract_strided_slice %219 {offsets = [0, 0], sizes = [1, 32], strides = [1, 1]} : vector<1x96xf32> to vector<1x32xf32>
    %223 = vector.extract_strided_slice %221 {offsets = [0, 0], sizes = [1, 32], strides = [1, 1]} : vector<1x96xf32> to vector<1x32xf32>
    %224 = arith.addf %222, %223 : vector<1x32xf32>
    %225 = arith.negf %224 : vector<1x32xf32>
    %226 = math.exp %225 : vector<1x32xf32>
    %cst_46 = arith.constant 1.000000e+00 : f32
    %227 = vector.broadcast %cst_46 : f32 to vector<1x32xf32>
    %228 = arith.addf %227, %226 : vector<1x32xf32>
    %229 = arith.divf %227, %228 : vector<1x32xf32>
    %230 = vector.extract_strided_slice %219 {offsets = [0, 32], sizes = [1, 32], strides = [1, 1]} : vector<1x96xf32> to vector<1x32xf32>
    %231 = vector.extract_strided_slice %221 {offsets = [0, 32], sizes = [1, 32], strides = [1, 1]} : vector<1x96xf32> to vector<1x32xf32>
    %232 = arith.addf %230, %231 : vector<1x32xf32>
    %233 = arith.negf %232 : vector<1x32xf32>
    %234 = math.exp %233 : vector<1x32xf32>
    %cst_47 = arith.constant 1.000000e+00 : f32
    %235 = vector.broadcast %cst_47 : f32 to vector<1x32xf32>
    %236 = arith.addf %235, %234 : vector<1x32xf32>
    %237 = arith.divf %235, %236 : vector<1x32xf32>
    %238 = vector.extract_strided_slice %219 {offsets = [0, 64], sizes = [1, 32], strides = [1, 1]} : vector<1x96xf32> to vector<1x32xf32>
    %239 = vector.extract_strided_slice %221 {offsets = [0, 64], sizes = [1, 32], strides = [1, 1]} : vector<1x96xf32> to vector<1x32xf32>
    %240 = arith.mulf %229, %239 : vector<1x32xf32>
    %241 = arith.addf %238, %240 : vector<1x32xf32>
    %242 = math.tanh %241 : vector<1x32xf32>
    %cst_48 = arith.constant 1.000000e+00 : f32
    %243 = vector.broadcast %cst_48 : f32 to vector<1x32xf32>
    %244 = arith.subf %243, %237 : vector<1x32xf32>
    %245 = arith.mulf %244, %242 : vector<1x32xf32>
    %246 = arith.mulf %237, %218 : vector<1x32xf32>
    %247 = arith.addf %245, %246 : vector<1x32xf32>
    %c5_i32 = arith.constant 5 : i32
    %248 = arith.cmpi sgt, %1, %c5_i32 : i32
    %249 = arith.extui %248 : i1 to i32
    %250 = arith.sitofp %249 : i32 to f32
    %251 = vector.broadcast %250 : f32 to vector<1x32xf32>
    %252 = arith.mulf %247, %251 : vector<1x32xf32>
    %253 = vector.broadcast %250 : f32 to vector<1x32xf32>
    %254 = arith.mulf %247, %253 : vector<1x32xf32>
    %cst_49 = arith.constant 1.000000e+00 : f32
    %255 = arith.subf %cst_49, %250 : f32
    %256 = vector.broadcast %255 : f32 to vector<1x32xf32>
    %257 = arith.mulf %218, %256 : vector<1x32xf32>
    %258 = arith.addf %254, %257 : vector<1x32xf32>
    %259 = vector.extract_strided_slice %8 {offsets = [6, 0], sizes = [1, 96], strides = [1, 1]} : vector<8x96xf32> to vector<1x96xf32>
    %cst_50 = arith.constant dense<0.000000e+00> : vector<1x96xf32>
    %260 = tpu.matmul %258, %14, %cst_50 {dimension_numbers = #tpu.dot_dimension_numbers<[1], [0], [0], [1], [0, 0, 1, 1], [], []>} : vector<1x32xf32>, vector<32x96xf32>, vector<1x96xf32> -> vector<1x96xf32>
    %261 = arith.addf %260, %15 : vector<1x96xf32>
    %262 = vector.extract_strided_slice %259 {offsets = [0, 0], sizes = [1, 32], strides = [1, 1]} : vector<1x96xf32> to vector<1x32xf32>
    %263 = vector.extract_strided_slice %261 {offsets = [0, 0], sizes = [1, 32], strides = [1, 1]} : vector<1x96xf32> to vector<1x32xf32>
    %264 = arith.addf %262, %263 : vector<1x32xf32>
    %265 = arith.negf %264 : vector<1x32xf32>
    %266 = math.exp %265 : vector<1x32xf32>
    %cst_51 = arith.constant 1.000000e+00 : f32
    %267 = vector.broadcast %cst_51 : f32 to vector<1x32xf32>
    %268 = arith.addf %267, %266 : vector<1x32xf32>
    %269 = arith.divf %267, %268 : vector<1x32xf32>
    %270 = vector.extract_strided_slice %259 {offsets = [0, 32], sizes = [1, 32], strides = [1, 1]} : vector<1x96xf32> to vector<1x32xf32>
    %271 = vector.extract_strided_slice %261 {offsets = [0, 32], sizes = [1, 32], strides = [1, 1]} : vector<1x96xf32> to vector<1x32xf32>
    %272 = arith.addf %270, %271 : vector<1x32xf32>
    %273 = arith.negf %272 : vector<1x32xf32>
    %274 = math.exp %273 : vector<1x32xf32>
    %cst_52 = arith.constant 1.000000e+00 : f32
    %275 = vector.broadcast %cst_52 : f32 to vector<1x32xf32>
    %276 = arith.addf %275, %274 : vector<1x32xf32>
    %277 = arith.divf %275, %276 : vector<1x32xf32>
    %278 = vector.extract_strided_slice %259 {offsets = [0, 64], sizes = [1, 32], strides = [1, 1]} : vector<1x96xf32> to vector<1x32xf32>
    %279 = vector.extract_strided_slice %261 {offsets = [0, 64], sizes = [1, 32], strides = [1, 1]} : vector<1x96xf32> to vector<1x32xf32>
    %280 = arith.mulf %269, %279 : vector<1x32xf32>
    %281 = arith.addf %278, %280 : vector<1x32xf32>
    %282 = math.tanh %281 : vector<1x32xf32>
    %cst_53 = arith.constant 1.000000e+00 : f32
    %283 = vector.broadcast %cst_53 : f32 to vector<1x32xf32>
    %284 = arith.subf %283, %277 : vector<1x32xf32>
    %285 = arith.mulf %284, %282 : vector<1x32xf32>
    %286 = arith.mulf %277, %258 : vector<1x32xf32>
    %287 = arith.addf %285, %286 : vector<1x32xf32>
    %c6_i32 = arith.constant 6 : i32
    %288 = arith.cmpi sgt, %1, %c6_i32 : i32
    %289 = arith.extui %288 : i1 to i32
    %290 = arith.sitofp %289 : i32 to f32
    %291 = vector.broadcast %290 : f32 to vector<1x32xf32>
    %292 = arith.mulf %287, %291 : vector<1x32xf32>
    %293 = vector.broadcast %290 : f32 to vector<1x32xf32>
    %294 = arith.mulf %287, %293 : vector<1x32xf32>
    %cst_54 = arith.constant 1.000000e+00 : f32
    %295 = arith.subf %cst_54, %290 : f32
    %296 = vector.broadcast %295 : f32 to vector<1x32xf32>
    %297 = arith.mulf %258, %296 : vector<1x32xf32>
    %298 = arith.addf %294, %297 : vector<1x32xf32>
    %299 = vector.extract_strided_slice %8 {offsets = [7, 0], sizes = [1, 96], strides = [1, 1]} : vector<8x96xf32> to vector<1x96xf32>
    %cst_55 = arith.constant dense<0.000000e+00> : vector<1x96xf32>
    %300 = tpu.matmul %298, %14, %cst_55 {dimension_numbers = #tpu.dot_dimension_numbers<[1], [0], [0], [1], [0, 0, 1, 1], [], []>} : vector<1x32xf32>, vector<32x96xf32>, vector<1x96xf32> -> vector<1x96xf32>
    %301 = arith.addf %300, %15 : vector<1x96xf32>
    %302 = vector.extract_strided_slice %299 {offsets = [0, 0], sizes = [1, 32], strides = [1, 1]} : vector<1x96xf32> to vector<1x32xf32>
    %303 = vector.extract_strided_slice %301 {offsets = [0, 0], sizes = [1, 32], strides = [1, 1]} : vector<1x96xf32> to vector<1x32xf32>
    %304 = arith.addf %302, %303 : vector<1x32xf32>
    %305 = arith.negf %304 : vector<1x32xf32>
    %306 = math.exp %305 : vector<1x32xf32>
    %cst_56 = arith.constant 1.000000e+00 : f32
    %307 = vector.broadcast %cst_56 : f32 to vector<1x32xf32>
    %308 = arith.addf %307, %306 : vector<1x32xf32>
    %309 = arith.divf %307, %308 : vector<1x32xf32>
    %310 = vector.extract_strided_slice %299 {offsets = [0, 32], sizes = [1, 32], strides = [1, 1]} : vector<1x96xf32> to vector<1x32xf32>
    %311 = vector.extract_strided_slice %301 {offsets = [0, 32], sizes = [1, 32], strides = [1, 1]} : vector<1x96xf32> to vector<1x32xf32>
    %312 = arith.addf %310, %311 : vector<1x32xf32>
    %313 = arith.negf %312 : vector<1x32xf32>
    %314 = math.exp %313 : vector<1x32xf32>
    %cst_57 = arith.constant 1.000000e+00 : f32
    %315 = vector.broadcast %cst_57 : f32 to vector<1x32xf32>
    %316 = arith.addf %315, %314 : vector<1x32xf32>
    %317 = arith.divf %315, %316 : vector<1x32xf32>
    %318 = vector.extract_strided_slice %299 {offsets = [0, 64], sizes = [1, 32], strides = [1, 1]} : vector<1x96xf32> to vector<1x32xf32>
    %319 = vector.extract_strided_slice %301 {offsets = [0, 64], sizes = [1, 32], strides = [1, 1]} : vector<1x96xf32> to vector<1x32xf32>
    %320 = arith.mulf %309, %319 : vector<1x32xf32>
    %321 = arith.addf %318, %320 : vector<1x32xf32>
    %322 = math.tanh %321 : vector<1x32xf32>
    %cst_58 = arith.constant 1.000000e+00 : f32
    %323 = vector.broadcast %cst_58 : f32 to vector<1x32xf32>
    %324 = arith.subf %323, %317 : vector<1x32xf32>
    %325 = arith.mulf %324, %322 : vector<1x32xf32>
    %326 = arith.mulf %317, %298 : vector<1x32xf32>
    %327 = arith.addf %325, %326 : vector<1x32xf32>
    %c7_i32 = arith.constant 7 : i32
    %328 = arith.cmpi sgt, %1, %c7_i32 : i32
    %329 = arith.extui %328 : i1 to i32
    %330 = arith.sitofp %329 : i32 to f32
    %331 = vector.broadcast %330 : f32 to vector<1x32xf32>
    %332 = arith.mulf %327, %331 : vector<1x32xf32>
    %cst_59 = arith.constant 0.000000e+00 : f32
    %333 = vector.broadcast %cst_59 : f32 to vector<1x32xf32>
    %334 = vector.extract_strided_slice %13 {offsets = [7, 0], sizes = [1, 96], strides = [1, 1]} : vector<8x96xf32> to vector<1x96xf32>
    %cst_60 = arith.constant dense<0.000000e+00> : vector<1x96xf32>
    %335 = tpu.matmul %333, %16, %cst_60 {dimension_numbers = #tpu.dot_dimension_numbers<[1], [0], [0], [1], [0, 0, 1, 1], [], []>} : vector<1x32xf32>, vector<32x96xf32>, vector<1x96xf32> -> vector<1x96xf32>
    %336 = arith.addf %335, %17 : vector<1x96xf32>
    %337 = vector.extract_strided_slice %334 {offsets = [0, 0], sizes = [1, 32], strides = [1, 1]} : vector<1x96xf32> to vector<1x32xf32>
    %338 = vector.extract_strided_slice %336 {offsets = [0, 0], sizes = [1, 32], strides = [1, 1]} : vector<1x96xf32> to vector<1x32xf32>
    %339 = arith.addf %337, %338 : vector<1x32xf32>
    %340 = arith.negf %339 : vector<1x32xf32>
    %341 = math.exp %340 : vector<1x32xf32>
    %cst_61 = arith.constant 1.000000e+00 : f32
    %342 = vector.broadcast %cst_61 : f32 to vector<1x32xf32>
    %343 = arith.addf %342, %341 : vector<1x32xf32>
    %344 = arith.divf %342, %343 : vector<1x32xf32>
    %345 = vector.extract_strided_slice %334 {offsets = [0, 32], sizes = [1, 32], strides = [1, 1]} : vector<1x96xf32> to vector<1x32xf32>
    %346 = vector.extract_strided_slice %336 {offsets = [0, 32], sizes = [1, 32], strides = [1, 1]} : vector<1x96xf32> to vector<1x32xf32>
    %347 = arith.addf %345, %346 : vector<1x32xf32>
    %348 = arith.negf %347 : vector<1x32xf32>
    %349 = math.exp %348 : vector<1x32xf32>
    %cst_62 = arith.constant 1.000000e+00 : f32
    %350 = vector.broadcast %cst_62 : f32 to vector<1x32xf32>
    %351 = arith.addf %350, %349 : vector<1x32xf32>
    %352 = arith.divf %350, %351 : vector<1x32xf32>
    %353 = vector.extract_strided_slice %334 {offsets = [0, 64], sizes = [1, 32], strides = [1, 1]} : vector<1x96xf32> to vector<1x32xf32>
    %354 = vector.extract_strided_slice %336 {offsets = [0, 64], sizes = [1, 32], strides = [1, 1]} : vector<1x96xf32> to vector<1x32xf32>
    %355 = arith.mulf %344, %354 : vector<1x32xf32>
    %356 = arith.addf %353, %355 : vector<1x32xf32>
    %357 = math.tanh %356 : vector<1x32xf32>
    %cst_63 = arith.constant 1.000000e+00 : f32
    %358 = vector.broadcast %cst_63 : f32 to vector<1x32xf32>
    %359 = arith.subf %358, %352 : vector<1x32xf32>
    %360 = arith.mulf %359, %357 : vector<1x32xf32>
    %361 = arith.mulf %352, %333 : vector<1x32xf32>
    %362 = arith.addf %360, %361 : vector<1x32xf32>
    %c7_i32_64 = arith.constant 7 : i32
    %363 = arith.cmpi sgt, %1, %c7_i32_64 : i32
    %364 = arith.extui %363 : i1 to i32
    %365 = arith.sitofp %364 : i32 to f32
    %366 = vector.broadcast %365 : f32 to vector<1x32xf32>
    %367 = arith.mulf %362, %366 : vector<1x32xf32>
    %368 = vector.broadcast %365 : f32 to vector<1x32xf32>
    %369 = arith.mulf %362, %368 : vector<1x32xf32>
    %cst_65 = arith.constant 1.000000e+00 : f32
    %370 = arith.subf %cst_65, %365 : f32
    %371 = vector.broadcast %370 : f32 to vector<1x32xf32>
    %372 = arith.mulf %333, %371 : vector<1x32xf32>
    %373 = arith.addf %369, %372 : vector<1x32xf32>
    %374 = vector.extract_strided_slice %13 {offsets = [6, 0], sizes = [1, 96], strides = [1, 1]} : vector<8x96xf32> to vector<1x96xf32>
    %cst_66 = arith.constant dense<0.000000e+00> : vector<1x96xf32>
    %375 = tpu.matmul %373, %16, %cst_66 {dimension_numbers = #tpu.dot_dimension_numbers<[1], [0], [0], [1], [0, 0, 1, 1], [], []>} : vector<1x32xf32>, vector<32x96xf32>, vector<1x96xf32> -> vector<1x96xf32>
    %376 = arith.addf %375, %17 : vector<1x96xf32>
    %377 = vector.extract_strided_slice %374 {offsets = [0, 0], sizes = [1, 32], strides = [1, 1]} : vector<1x96xf32> to vector<1x32xf32>
    %378 = vector.extract_strided_slice %376 {offsets = [0, 0], sizes = [1, 32], strides = [1, 1]} : vector<1x96xf32> to vector<1x32xf32>
    %379 = arith.addf %377, %378 : vector<1x32xf32>
    %380 = arith.negf %379 : vector<1x32xf32>
    %381 = math.exp %380 : vector<1x32xf32>
    %cst_67 = arith.constant 1.000000e+00 : f32
    %382 = vector.broadcast %cst_67 : f32 to vector<1x32xf32>
    %383 = arith.addf %382, %381 : vector<1x32xf32>
    %384 = arith.divf %382, %383 : vector<1x32xf32>
    %385 = vector.extract_strided_slice %374 {offsets = [0, 32], sizes = [1, 32], strides = [1, 1]} : vector<1x96xf32> to vector<1x32xf32>
    %386 = vector.extract_strided_slice %376 {offsets = [0, 32], sizes = [1, 32], strides = [1, 1]} : vector<1x96xf32> to vector<1x32xf32>
    %387 = arith.addf %385, %386 : vector<1x32xf32>
    %388 = arith.negf %387 : vector<1x32xf32>
    %389 = math.exp %388 : vector<1x32xf32>
    %cst_68 = arith.constant 1.000000e+00 : f32
    %390 = vector.broadcast %cst_68 : f32 to vector<1x32xf32>
    %391 = arith.addf %390, %389 : vector<1x32xf32>
    %392 = arith.divf %390, %391 : vector<1x32xf32>
    %393 = vector.extract_strided_slice %374 {offsets = [0, 64], sizes = [1, 32], strides = [1, 1]} : vector<1x96xf32> to vector<1x32xf32>
    %394 = vector.extract_strided_slice %376 {offsets = [0, 64], sizes = [1, 32], strides = [1, 1]} : vector<1x96xf32> to vector<1x32xf32>
    %395 = arith.mulf %384, %394 : vector<1x32xf32>
    %396 = arith.addf %393, %395 : vector<1x32xf32>
    %397 = math.tanh %396 : vector<1x32xf32>
    %cst_69 = arith.constant 1.000000e+00 : f32
    %398 = vector.broadcast %cst_69 : f32 to vector<1x32xf32>
    %399 = arith.subf %398, %392 : vector<1x32xf32>
    %400 = arith.mulf %399, %397 : vector<1x32xf32>
    %401 = arith.mulf %392, %373 : vector<1x32xf32>
    %402 = arith.addf %400, %401 : vector<1x32xf32>
    %c6_i32_70 = arith.constant 6 : i32
    %403 = arith.cmpi sgt, %1, %c6_i32_70 : i32
    %404 = arith.extui %403 : i1 to i32
    %405 = arith.sitofp %404 : i32 to f32
    %406 = vector.broadcast %405 : f32 to vector<1x32xf32>
    %407 = arith.mulf %402, %406 : vector<1x32xf32>
    %408 = vector.broadcast %405 : f32 to vector<1x32xf32>
    %409 = arith.mulf %402, %408 : vector<1x32xf32>
    %cst_71 = arith.constant 1.000000e+00 : f32
    %410 = arith.subf %cst_71, %405 : f32
    %411 = vector.broadcast %410 : f32 to vector<1x32xf32>
    %412 = arith.mulf %373, %411 : vector<1x32xf32>
    %413 = arith.addf %409, %412 : vector<1x32xf32>
    %414 = vector.extract_strided_slice %13 {offsets = [5, 0], sizes = [1, 96], strides = [1, 1]} : vector<8x96xf32> to vector<1x96xf32>
    %cst_72 = arith.constant dense<0.000000e+00> : vector<1x96xf32>
    %415 = tpu.matmul %413, %16, %cst_72 {dimension_numbers = #tpu.dot_dimension_numbers<[1], [0], [0], [1], [0, 0, 1, 1], [], []>} : vector<1x32xf32>, vector<32x96xf32>, vector<1x96xf32> -> vector<1x96xf32>
    %416 = arith.addf %415, %17 : vector<1x96xf32>
    %417 = vector.extract_strided_slice %414 {offsets = [0, 0], sizes = [1, 32], strides = [1, 1]} : vector<1x96xf32> to vector<1x32xf32>
    %418 = vector.extract_strided_slice %416 {offsets = [0, 0], sizes = [1, 32], strides = [1, 1]} : vector<1x96xf32> to vector<1x32xf32>
    %419 = arith.addf %417, %418 : vector<1x32xf32>
    %420 = arith.negf %419 : vector<1x32xf32>
    %421 = math.exp %420 : vector<1x32xf32>
    %cst_73 = arith.constant 1.000000e+00 : f32
    %422 = vector.broadcast %cst_73 : f32 to vector<1x32xf32>
    %423 = arith.addf %422, %421 : vector<1x32xf32>
    %424 = arith.divf %422, %423 : vector<1x32xf32>
    %425 = vector.extract_strided_slice %414 {offsets = [0, 32], sizes = [1, 32], strides = [1, 1]} : vector<1x96xf32> to vector<1x32xf32>
    %426 = vector.extract_strided_slice %416 {offsets = [0, 32], sizes = [1, 32], strides = [1, 1]} : vector<1x96xf32> to vector<1x32xf32>
    %427 = arith.addf %425, %426 : vector<1x32xf32>
    %428 = arith.negf %427 : vector<1x32xf32>
    %429 = math.exp %428 : vector<1x32xf32>
    %cst_74 = arith.constant 1.000000e+00 : f32
    %430 = vector.broadcast %cst_74 : f32 to vector<1x32xf32>
    %431 = arith.addf %430, %429 : vector<1x32xf32>
    %432 = arith.divf %430, %431 : vector<1x32xf32>
    %433 = vector.extract_strided_slice %414 {offsets = [0, 64], sizes = [1, 32], strides = [1, 1]} : vector<1x96xf32> to vector<1x32xf32>
    %434 = vector.extract_strided_slice %416 {offsets = [0, 64], sizes = [1, 32], strides = [1, 1]} : vector<1x96xf32> to vector<1x32xf32>
    %435 = arith.mulf %424, %434 : vector<1x32xf32>
    %436 = arith.addf %433, %435 : vector<1x32xf32>
    %437 = math.tanh %436 : vector<1x32xf32>
    %cst_75 = arith.constant 1.000000e+00 : f32
    %438 = vector.broadcast %cst_75 : f32 to vector<1x32xf32>
    %439 = arith.subf %438, %432 : vector<1x32xf32>
    %440 = arith.mulf %439, %437 : vector<1x32xf32>
    %441 = arith.mulf %432, %413 : vector<1x32xf32>
    %442 = arith.addf %440, %441 : vector<1x32xf32>
    %c5_i32_76 = arith.constant 5 : i32
    %443 = arith.cmpi sgt, %1, %c5_i32_76 : i32
    %444 = arith.extui %443 : i1 to i32
    %445 = arith.sitofp %444 : i32 to f32
    %446 = vector.broadcast %445 : f32 to vector<1x32xf32>
    %447 = arith.mulf %442, %446 : vector<1x32xf32>
    %448 = vector.broadcast %445 : f32 to vector<1x32xf32>
    %449 = arith.mulf %442, %448 : vector<1x32xf32>
    %cst_77 = arith.constant 1.000000e+00 : f32
    %450 = arith.subf %cst_77, %445 : f32
    %451 = vector.broadcast %450 : f32 to vector<1x32xf32>
    %452 = arith.mulf %413, %451 : vector<1x32xf32>
    %453 = arith.addf %449, %452 : vector<1x32xf32>
    %454 = vector.extract_strided_slice %13 {offsets = [4, 0], sizes = [1, 96], strides = [1, 1]} : vector<8x96xf32> to vector<1x96xf32>
    %cst_78 = arith.constant dense<0.000000e+00> : vector<1x96xf32>
    %455 = tpu.matmul %453, %16, %cst_78 {dimension_numbers = #tpu.dot_dimension_numbers<[1], [0], [0], [1], [0, 0, 1, 1], [], []>} : vector<1x32xf32>, vector<32x96xf32>, vector<1x96xf32> -> vector<1x96xf32>
    %456 = arith.addf %455, %17 : vector<1x96xf32>
    %457 = vector.extract_strided_slice %454 {offsets = [0, 0], sizes = [1, 32], strides = [1, 1]} : vector<1x96xf32> to vector<1x32xf32>
    %458 = vector.extract_strided_slice %456 {offsets = [0, 0], sizes = [1, 32], strides = [1, 1]} : vector<1x96xf32> to vector<1x32xf32>
    %459 = arith.addf %457, %458 : vector<1x32xf32>
    %460 = arith.negf %459 : vector<1x32xf32>
    %461 = math.exp %460 : vector<1x32xf32>
    %cst_79 = arith.constant 1.000000e+00 : f32
    %462 = vector.broadcast %cst_79 : f32 to vector<1x32xf32>
    %463 = arith.addf %462, %461 : vector<1x32xf32>
    %464 = arith.divf %462, %463 : vector<1x32xf32>
    %465 = vector.extract_strided_slice %454 {offsets = [0, 32], sizes = [1, 32], strides = [1, 1]} : vector<1x96xf32> to vector<1x32xf32>
    %466 = vector.extract_strided_slice %456 {offsets = [0, 32], sizes = [1, 32], strides = [1, 1]} : vector<1x96xf32> to vector<1x32xf32>
    %467 = arith.addf %465, %466 : vector<1x32xf32>
    %468 = arith.negf %467 : vector<1x32xf32>
    %469 = math.exp %468 : vector<1x32xf32>
    %cst_80 = arith.constant 1.000000e+00 : f32
    %470 = vector.broadcast %cst_80 : f32 to vector<1x32xf32>
    %471 = arith.addf %470, %469 : vector<1x32xf32>
    %472 = arith.divf %470, %471 : vector<1x32xf32>
    %473 = vector.extract_strided_slice %454 {offsets = [0, 64], sizes = [1, 32], strides = [1, 1]} : vector<1x96xf32> to vector<1x32xf32>
    %474 = vector.extract_strided_slice %456 {offsets = [0, 64], sizes = [1, 32], strides = [1, 1]} : vector<1x96xf32> to vector<1x32xf32>
    %475 = arith.mulf %464, %474 : vector<1x32xf32>
    %476 = arith.addf %473, %475 : vector<1x32xf32>
    %477 = math.tanh %476 : vector<1x32xf32>
    %cst_81 = arith.constant 1.000000e+00 : f32
    %478 = vector.broadcast %cst_81 : f32 to vector<1x32xf32>
    %479 = arith.subf %478, %472 : vector<1x32xf32>
    %480 = arith.mulf %479, %477 : vector<1x32xf32>
    %481 = arith.mulf %472, %453 : vector<1x32xf32>
    %482 = arith.addf %480, %481 : vector<1x32xf32>
    %c4_i32_82 = arith.constant 4 : i32
    %483 = arith.cmpi sgt, %1, %c4_i32_82 : i32
    %484 = arith.extui %483 : i1 to i32
    %485 = arith.sitofp %484 : i32 to f32
    %486 = vector.broadcast %485 : f32 to vector<1x32xf32>
    %487 = arith.mulf %482, %486 : vector<1x32xf32>
    %488 = vector.broadcast %485 : f32 to vector<1x32xf32>
    %489 = arith.mulf %482, %488 : vector<1x32xf32>
    %cst_83 = arith.constant 1.000000e+00 : f32
    %490 = arith.subf %cst_83, %485 : f32
    %491 = vector.broadcast %490 : f32 to vector<1x32xf32>
    %492 = arith.mulf %453, %491 : vector<1x32xf32>
    %493 = arith.addf %489, %492 : vector<1x32xf32>
    %494 = vector.extract_strided_slice %13 {offsets = [3, 0], sizes = [1, 96], strides = [1, 1]} : vector<8x96xf32> to vector<1x96xf32>
    %cst_84 = arith.constant dense<0.000000e+00> : vector<1x96xf32>
    %495 = tpu.matmul %493, %16, %cst_84 {dimension_numbers = #tpu.dot_dimension_numbers<[1], [0], [0], [1], [0, 0, 1, 1], [], []>} : vector<1x32xf32>, vector<32x96xf32>, vector<1x96xf32> -> vector<1x96xf32>
    %496 = arith.addf %495, %17 : vector<1x96xf32>
    %497 = vector.extract_strided_slice %494 {offsets = [0, 0], sizes = [1, 32], strides = [1, 1]} : vector<1x96xf32> to vector<1x32xf32>
    %498 = vector.extract_strided_slice %496 {offsets = [0, 0], sizes = [1, 32], strides = [1, 1]} : vector<1x96xf32> to vector<1x32xf32>
    %499 = arith.addf %497, %498 : vector<1x32xf32>
    %500 = arith.negf %499 : vector<1x32xf32>
    %501 = math.exp %500 : vector<1x32xf32>
    %cst_85 = arith.constant 1.000000e+00 : f32
    %502 = vector.broadcast %cst_85 : f32 to vector<1x32xf32>
    %503 = arith.addf %502, %501 : vector<1x32xf32>
    %504 = arith.divf %502, %503 : vector<1x32xf32>
    %505 = vector.extract_strided_slice %494 {offsets = [0, 32], sizes = [1, 32], strides = [1, 1]} : vector<1x96xf32> to vector<1x32xf32>
    %506 = vector.extract_strided_slice %496 {offsets = [0, 32], sizes = [1, 32], strides = [1, 1]} : vector<1x96xf32> to vector<1x32xf32>
    %507 = arith.addf %505, %506 : vector<1x32xf32>
    %508 = arith.negf %507 : vector<1x32xf32>
    %509 = math.exp %508 : vector<1x32xf32>
    %cst_86 = arith.constant 1.000000e+00 : f32
    %510 = vector.broadcast %cst_86 : f32 to vector<1x32xf32>
    %511 = arith.addf %510, %509 : vector<1x32xf32>
    %512 = arith.divf %510, %511 : vector<1x32xf32>
    %513 = vector.extract_strided_slice %494 {offsets = [0, 64], sizes = [1, 32], strides = [1, 1]} : vector<1x96xf32> to vector<1x32xf32>
    %514 = vector.extract_strided_slice %496 {offsets = [0, 64], sizes = [1, 32], strides = [1, 1]} : vector<1x96xf32> to vector<1x32xf32>
    %515 = arith.mulf %504, %514 : vector<1x32xf32>
    %516 = arith.addf %513, %515 : vector<1x32xf32>
    %517 = math.tanh %516 : vector<1x32xf32>
    %cst_87 = arith.constant 1.000000e+00 : f32
    %518 = vector.broadcast %cst_87 : f32 to vector<1x32xf32>
    %519 = arith.subf %518, %512 : vector<1x32xf32>
    %520 = arith.mulf %519, %517 : vector<1x32xf32>
    %521 = arith.mulf %512, %493 : vector<1x32xf32>
    %522 = arith.addf %520, %521 : vector<1x32xf32>
    %c3_i32_88 = arith.constant 3 : i32
    %523 = arith.cmpi sgt, %1, %c3_i32_88 : i32
    %524 = arith.extui %523 : i1 to i32
    %525 = arith.sitofp %524 : i32 to f32
    %526 = vector.broadcast %525 : f32 to vector<1x32xf32>
    %527 = arith.mulf %522, %526 : vector<1x32xf32>
    %528 = vector.broadcast %525 : f32 to vector<1x32xf32>
    %529 = arith.mulf %522, %528 : vector<1x32xf32>
    %cst_89 = arith.constant 1.000000e+00 : f32
    %530 = arith.subf %cst_89, %525 : f32
    %531 = vector.broadcast %530 : f32 to vector<1x32xf32>
    %532 = arith.mulf %493, %531 : vector<1x32xf32>
    %533 = arith.addf %529, %532 : vector<1x32xf32>
    %534 = vector.extract_strided_slice %13 {offsets = [2, 0], sizes = [1, 96], strides = [1, 1]} : vector<8x96xf32> to vector<1x96xf32>
    %cst_90 = arith.constant dense<0.000000e+00> : vector<1x96xf32>
    %535 = tpu.matmul %533, %16, %cst_90 {dimension_numbers = #tpu.dot_dimension_numbers<[1], [0], [0], [1], [0, 0, 1, 1], [], []>} : vector<1x32xf32>, vector<32x96xf32>, vector<1x96xf32> -> vector<1x96xf32>
    %536 = arith.addf %535, %17 : vector<1x96xf32>
    %537 = vector.extract_strided_slice %534 {offsets = [0, 0], sizes = [1, 32], strides = [1, 1]} : vector<1x96xf32> to vector<1x32xf32>
    %538 = vector.extract_strided_slice %536 {offsets = [0, 0], sizes = [1, 32], strides = [1, 1]} : vector<1x96xf32> to vector<1x32xf32>
    %539 = arith.addf %537, %538 : vector<1x32xf32>
    %540 = arith.negf %539 : vector<1x32xf32>
    %541 = math.exp %540 : vector<1x32xf32>
    %cst_91 = arith.constant 1.000000e+00 : f32
    %542 = vector.broadcast %cst_91 : f32 to vector<1x32xf32>
    %543 = arith.addf %542, %541 : vector<1x32xf32>
    %544 = arith.divf %542, %543 : vector<1x32xf32>
    %545 = vector.extract_strided_slice %534 {offsets = [0, 32], sizes = [1, 32], strides = [1, 1]} : vector<1x96xf32> to vector<1x32xf32>
    %546 = vector.extract_strided_slice %536 {offsets = [0, 32], sizes = [1, 32], strides = [1, 1]} : vector<1x96xf32> to vector<1x32xf32>
    %547 = arith.addf %545, %546 : vector<1x32xf32>
    %548 = arith.negf %547 : vector<1x32xf32>
    %549 = math.exp %548 : vector<1x32xf32>
    %cst_92 = arith.constant 1.000000e+00 : f32
    %550 = vector.broadcast %cst_92 : f32 to vector<1x32xf32>
    %551 = arith.addf %550, %549 : vector<1x32xf32>
    %552 = arith.divf %550, %551 : vector<1x32xf32>
    %553 = vector.extract_strided_slice %534 {offsets = [0, 64], sizes = [1, 32], strides = [1, 1]} : vector<1x96xf32> to vector<1x32xf32>
    %554 = vector.extract_strided_slice %536 {offsets = [0, 64], sizes = [1, 32], strides = [1, 1]} : vector<1x96xf32> to vector<1x32xf32>
    %555 = arith.mulf %544, %554 : vector<1x32xf32>
    %556 = arith.addf %553, %555 : vector<1x32xf32>
    %557 = math.tanh %556 : vector<1x32xf32>
    %cst_93 = arith.constant 1.000000e+00 : f32
    %558 = vector.broadcast %cst_93 : f32 to vector<1x32xf32>
    %559 = arith.subf %558, %552 : vector<1x32xf32>
    %560 = arith.mulf %559, %557 : vector<1x32xf32>
    %561 = arith.mulf %552, %533 : vector<1x32xf32>
    %562 = arith.addf %560, %561 : vector<1x32xf32>
    %c2_i32_94 = arith.constant 2 : i32
    %563 = arith.cmpi sgt, %1, %c2_i32_94 : i32
    %564 = arith.extui %563 : i1 to i32
    %565 = arith.sitofp %564 : i32 to f32
    %566 = vector.broadcast %565 : f32 to vector<1x32xf32>
    %567 = arith.mulf %562, %566 : vector<1x32xf32>
    %568 = vector.broadcast %565 : f32 to vector<1x32xf32>
    %569 = arith.mulf %562, %568 : vector<1x32xf32>
    %cst_95 = arith.constant 1.000000e+00 : f32
    %570 = arith.subf %cst_95, %565 : f32
    %571 = vector.broadcast %570 : f32 to vector<1x32xf32>
    %572 = arith.mulf %533, %571 : vector<1x32xf32>
    %573 = arith.addf %569, %572 : vector<1x32xf32>
    %574 = vector.extract_strided_slice %13 {offsets = [1, 0], sizes = [1, 96], strides = [1, 1]} : vector<8x96xf32> to vector<1x96xf32>
    %cst_96 = arith.constant dense<0.000000e+00> : vector<1x96xf32>
    %575 = tpu.matmul %573, %16, %cst_96 {dimension_numbers = #tpu.dot_dimension_numbers<[1], [0], [0], [1], [0, 0, 1, 1], [], []>} : vector<1x32xf32>, vector<32x96xf32>, vector<1x96xf32> -> vector<1x96xf32>
    %576 = arith.addf %575, %17 : vector<1x96xf32>
    %577 = vector.extract_strided_slice %574 {offsets = [0, 0], sizes = [1, 32], strides = [1, 1]} : vector<1x96xf32> to vector<1x32xf32>
    %578 = vector.extract_strided_slice %576 {offsets = [0, 0], sizes = [1, 32], strides = [1, 1]} : vector<1x96xf32> to vector<1x32xf32>
    %579 = arith.addf %577, %578 : vector<1x32xf32>
    %580 = arith.negf %579 : vector<1x32xf32>
    %581 = math.exp %580 : vector<1x32xf32>
    %cst_97 = arith.constant 1.000000e+00 : f32
    %582 = vector.broadcast %cst_97 : f32 to vector<1x32xf32>
    %583 = arith.addf %582, %581 : vector<1x32xf32>
    %584 = arith.divf %582, %583 : vector<1x32xf32>
    %585 = vector.extract_strided_slice %574 {offsets = [0, 32], sizes = [1, 32], strides = [1, 1]} : vector<1x96xf32> to vector<1x32xf32>
    %586 = vector.extract_strided_slice %576 {offsets = [0, 32], sizes = [1, 32], strides = [1, 1]} : vector<1x96xf32> to vector<1x32xf32>
    %587 = arith.addf %585, %586 : vector<1x32xf32>
    %588 = arith.negf %587 : vector<1x32xf32>
    %589 = math.exp %588 : vector<1x32xf32>
    %cst_98 = arith.constant 1.000000e+00 : f32
    %590 = vector.broadcast %cst_98 : f32 to vector<1x32xf32>
    %591 = arith.addf %590, %589 : vector<1x32xf32>
    %592 = arith.divf %590, %591 : vector<1x32xf32>
    %593 = vector.extract_strided_slice %574 {offsets = [0, 64], sizes = [1, 32], strides = [1, 1]} : vector<1x96xf32> to vector<1x32xf32>
    %594 = vector.extract_strided_slice %576 {offsets = [0, 64], sizes = [1, 32], strides = [1, 1]} : vector<1x96xf32> to vector<1x32xf32>
    %595 = arith.mulf %584, %594 : vector<1x32xf32>
    %596 = arith.addf %593, %595 : vector<1x32xf32>
    %597 = math.tanh %596 : vector<1x32xf32>
    %cst_99 = arith.constant 1.000000e+00 : f32
    %598 = vector.broadcast %cst_99 : f32 to vector<1x32xf32>
    %599 = arith.subf %598, %592 : vector<1x32xf32>
    %600 = arith.mulf %599, %597 : vector<1x32xf32>
    %601 = arith.mulf %592, %573 : vector<1x32xf32>
    %602 = arith.addf %600, %601 : vector<1x32xf32>
    %c1_i32_100 = arith.constant 1 : i32
    %603 = arith.cmpi sgt, %1, %c1_i32_100 : i32
    %604 = arith.extui %603 : i1 to i32
    %605 = arith.sitofp %604 : i32 to f32
    %606 = vector.broadcast %605 : f32 to vector<1x32xf32>
    %607 = arith.mulf %602, %606 : vector<1x32xf32>
    %608 = vector.broadcast %605 : f32 to vector<1x32xf32>
    %609 = arith.mulf %602, %608 : vector<1x32xf32>
    %cst_101 = arith.constant 1.000000e+00 : f32
    %610 = arith.subf %cst_101, %605 : f32
    %611 = vector.broadcast %610 : f32 to vector<1x32xf32>
    %612 = arith.mulf %573, %611 : vector<1x32xf32>
    %613 = arith.addf %609, %612 : vector<1x32xf32>
    %614 = vector.extract_strided_slice %13 {offsets = [0, 0], sizes = [1, 96], strides = [1, 1]} : vector<8x96xf32> to vector<1x96xf32>
    %cst_102 = arith.constant dense<0.000000e+00> : vector<1x96xf32>
    %615 = tpu.matmul %613, %16, %cst_102 {dimension_numbers = #tpu.dot_dimension_numbers<[1], [0], [0], [1], [0, 0, 1, 1], [], []>} : vector<1x32xf32>, vector<32x96xf32>, vector<1x96xf32> -> vector<1x96xf32>
    %616 = arith.addf %615, %17 : vector<1x96xf32>
    %617 = vector.extract_strided_slice %614 {offsets = [0, 0], sizes = [1, 32], strides = [1, 1]} : vector<1x96xf32> to vector<1x32xf32>
    %618 = vector.extract_strided_slice %616 {offsets = [0, 0], sizes = [1, 32], strides = [1, 1]} : vector<1x96xf32> to vector<1x32xf32>
    %619 = arith.addf %617, %618 : vector<1x32xf32>
    %620 = arith.negf %619 : vector<1x32xf32>
    %621 = math.exp %620 : vector<1x32xf32>
    %cst_103 = arith.constant 1.000000e+00 : f32
    %622 = vector.broadcast %cst_103 : f32 to vector<1x32xf32>
    %623 = arith.addf %622, %621 : vector<1x32xf32>
    %624 = arith.divf %622, %623 : vector<1x32xf32>
    %625 = vector.extract_strided_slice %614 {offsets = [0, 32], sizes = [1, 32], strides = [1, 1]} : vector<1x96xf32> to vector<1x32xf32>
    %626 = vector.extract_strided_slice %616 {offsets = [0, 32], sizes = [1, 32], strides = [1, 1]} : vector<1x96xf32> to vector<1x32xf32>
    %627 = arith.addf %625, %626 : vector<1x32xf32>
    %628 = arith.negf %627 : vector<1x32xf32>
    %629 = math.exp %628 : vector<1x32xf32>
    %cst_104 = arith.constant 1.000000e+00 : f32
    %630 = vector.broadcast %cst_104 : f32 to vector<1x32xf32>
    %631 = arith.addf %630, %629 : vector<1x32xf32>
    %632 = arith.divf %630, %631 : vector<1x32xf32>
    %633 = vector.extract_strided_slice %614 {offsets = [0, 64], sizes = [1, 32], strides = [1, 1]} : vector<1x96xf32> to vector<1x32xf32>
    %634 = vector.extract_strided_slice %616 {offsets = [0, 64], sizes = [1, 32], strides = [1, 1]} : vector<1x96xf32> to vector<1x32xf32>
    %635 = arith.mulf %624, %634 : vector<1x32xf32>
    %636 = arith.addf %633, %635 : vector<1x32xf32>
    %637 = math.tanh %636 : vector<1x32xf32>
    %cst_105 = arith.constant 1.000000e+00 : f32
    %638 = vector.broadcast %cst_105 : f32 to vector<1x32xf32>
    %639 = arith.subf %638, %632 : vector<1x32xf32>
    %640 = arith.mulf %639, %637 : vector<1x32xf32>
    %641 = arith.mulf %632, %613 : vector<1x32xf32>
    %642 = arith.addf %640, %641 : vector<1x32xf32>
    %c0_i32_106 = arith.constant 0 : i32
    %643 = arith.cmpi sgt, %1, %c0_i32_106 : i32
    %644 = arith.extui %643 : i1 to i32
    %645 = arith.sitofp %644 : i32 to f32
    %646 = vector.broadcast %645 : f32 to vector<1x32xf32>
    %647 = arith.mulf %642, %646 : vector<1x32xf32>
    %648 = tpu.concatenate %52, %92, %132, %172, %212, %252, %292, %332 in 0 : vector<1x32xf32>, vector<1x32xf32>, vector<1x32xf32>, vector<1x32xf32>, vector<1x32xf32>, vector<1x32xf32>, vector<1x32xf32>, vector<1x32xf32> -> vector<8x32xf32>
    %649 = tpu.concatenate %647, %607, %567, %527, %487, %447, %407, %367 in 0 : vector<1x32xf32>, vector<1x32xf32>, vector<1x32xf32>, vector<1x32xf32>, vector<1x32xf32>, vector<1x32xf32>, vector<1x32xf32>, vector<1x32xf32> -> vector<8x32xf32>
    %650 = arith.addf %648, %649 : vector<8x32xf32>
    %cst_107 = arith.constant 5.000000e-01 : f32
    %651 = vector.broadcast %cst_107 : f32 to vector<8x32xf32>
    %652 = arith.mulf %651, %650 : vector<8x32xf32>
    %653 = tpu.iota {dimensions = array<i32: 0>} : vector<8x1xi32>
    %c0_108 = arith.constant 0 : index
    %c0_109 = arith.constant 0 : index
    %654 = vector.load %arg12[%c0_108, %c0_109] : memref<32x32xf32, #tpu.memory_space<vmem>>, vector<32x32xf32>
    %cst_110 = arith.constant dense<0.000000e+00> : vector<8x32xf32>
    %655 = tpu.matmul %652, %654, %cst_110 {dimension_numbers = #tpu.dot_dimension_numbers<[1], [0], [0], [1], [0, 0, 1, 1], [], []>} : vector<8x32xf32>, vector<32x32xf32>, vector<8x32xf32> -> vector<8x32xf32>
    %c0_111 = arith.constant 0 : index
    %c0_112 = arith.constant 0 : index
    %656 = vector.load %arg13[%c0_111, %c0_112] : memref<1x32xf32, #tpu.memory_space<vmem>>, vector<1x32xf32>
    %657 = vector.broadcast %656 : vector<1x32xf32> to vector<8x32xf32>
    %658 = arith.addf %655, %657 : vector<8x32xf32>
    %659 = vector.broadcast %1 : i32 to vector<8x1xi32>
    %660 = arith.cmpi slt, %653, %659 : vector<8x1xi32>
    %cst_113 = arith.constant -1.000000e+30 : f32
    %661 = vector.shape_cast %660 : vector<8x1xi1> to vector<8x1xi1>
    %662 = vector.broadcast %661 : vector<8x1xi1> to vector<8x32xi1>
    %663 = vector.broadcast %cst_113 : f32 to vector<8x32xf32>
    %664 = arith.select %662, %658, %663 : vector<8x32xi1>, vector<8x32xf32>
    %cst_114 = arith.constant dense<0xFF800000> : vector<32xf32>
    %665 = vector.multi_reduction <maximumf>, %664, %cst_114 [0] : vector<8x32xf32> to vector<32xf32>
    %666 = vector.shape_cast %665 : vector<32xf32> to vector<1x32xf32>
    %667 = vector.broadcast %666 : vector<1x32xf32> to vector<8x32xf32>
    %668 = arith.subf %664, %667 : vector<8x32xf32>
    %669 = math.exp %668 : vector<8x32xf32>
    %cst_115 = arith.constant dense<0.000000e+00> : vector<32xf32>
    %670 = vector.multi_reduction <add>, %669, %cst_115 [0] : vector<8x32xf32> to vector<32xf32>
    %671 = vector.shape_cast %670 : vector<32xf32> to vector<1x32xf32>
    %672 = vector.broadcast %671 : vector<1x32xf32> to vector<8x32xf32>
    %673 = arith.divf %669, %672 : vector<8x32xf32>
    %c0_116 = arith.constant 0 : index
    %c0_117 = arith.constant 0 : index
    %c0_118 = arith.constant 0 : index
    %674 = vector.load %arg44[%c0_116, %c0_117, %c0_118] : memref<1x8x32xf32, #tpu.memory_space<vmem>>, vector<1x8x32xf32>
    %675 = vector.shape_cast %674 : vector<1x8x32xf32> to vector<8x32xf32>
    %676 = vector.shape_cast %673 : vector<8x32xf32> to vector<1x8x32xf32>
    tpu.vector_store %arg44[%c0_116, %c0_117, %c0_118], %676 {strides = array<i32>} : memref<1x8x32xf32, #tpu.memory_space<vmem>>, vector<1x8x32xf32>,
    %677 = arith.mulf %652, %673 : vector<8x32xf32>
    %cst_119 = arith.constant dense<0.000000e+00> : vector<32xf32>
    %678 = vector.multi_reduction <add>, %677, %cst_119 [0] : vector<8x32xf32> to vector<32xf32>
    %679 = vector.shape_cast %678 : vector<32xf32> to vector<1x32xf32>
    %c0_120 = arith.constant 0 : index
    %c0_121 = arith.constant 0 : index
    %680 = vector.load %arg17[%c0_120, %c0_121] : memref<32x32xf32, #tpu.memory_space<vmem>>, vector<32x32xf32>
    %c0_122 = arith.constant 0 : index
    %c0_123 = arith.constant 0 : index
    %c0_124 = arith.constant 0 : index
    %681 = vector.load %arg3[%c0_122, %c0_123, %c0_124] : memref<1x16x64xf32, #tpu.memory_space<vmem>>, vector<1x16x64xf32>
    %682 = vector.shape_cast %681 : vector<1x16x64xf32> to vector<16x64xf32>
    %c0_125 = arith.constant 0 : index
    %c0_126 = arith.constant 0 : index
    %683 = vector.load %arg14[%c0_125, %c0_126] : memref<64x32xf32, #tpu.memory_space<vmem>>, vector<64x32xf32>
    %cst_127 = arith.constant dense<0.000000e+00> : vector<16x32xf32>
    %684 = tpu.matmul %682, %683, %cst_127 {dimension_numbers = #tpu.dot_dimension_numbers<[1], [0], [0], [1], [0, 0, 1, 1], [], []>} : vector<16x64xf32>, vector<64x32xf32>, vector<16x32xf32> -> vector<16x32xf32>
    %c0_128 = arith.constant 0 : index
    %c0_129 = arith.constant 0 : index
    %685 = vector.load %arg15[%c0_128, %c0_129] : memref<1x32xf32, #tpu.memory_space<vmem>>, vector<1x32xf32>
    %686 = vector.broadcast %685 : vector<1x32xf32> to vector<16x32xf32>
    %687 = arith.addf %684, %686 : vector<16x32xf32>
    %688 = vector.broadcast %679 : vector<1x32xf32> to vector<16x32xf32>
    %689 = arith.addf %687, %688 : vector<16x32xf32>
    %c0_130 = arith.constant 0 : index
    %c0_131 = arith.constant 0 : index
    %c0_132 = arith.constant 0 : index
    %690 = vector.load %arg16[%c0_130, %c0_131, %c0_132] : memref<1x16x32xf32, #tpu.memory_space<vmem>>, vector<1x16x32xf32>
    %691 = vector.shape_cast %690 : vector<1x16x32xf32> to vector<16x32xf32>
    %692 = arith.addf %689, %691 : vector<16x32xf32>
    %c0_133 = arith.constant 0 : index
    %c0_134 = arith.constant 0 : index
    %693 = vector.load %arg18[%c0_133, %c0_134] : memref<32x32xf32, #tpu.memory_space<vmem>>, vector<32x32xf32>
    %cst_135 = arith.constant dense<0.000000e+00> : vector<16x32xf32>
    %694 = tpu.matmul %692, %693, %cst_135 {dimension_numbers = #tpu.dot_dimension_numbers<[1], [0], [0], [1], [0, 0, 1, 1], [], []>} : vector<16x32xf32>, vector<32x32xf32>, vector<16x32xf32> -> vector<16x32xf32>
    %c0_136 = arith.constant 0 : index
    %c0_137 = arith.constant 0 : index
    %695 = vector.load %arg19[%c0_136, %c0_137] : memref<1x32xf32, #tpu.memory_space<vmem>>, vector<1x32xf32>
    %c0_138 = arith.constant 0 : index
    %c0_139 = arith.constant 0 : index
    %696 = vector.load %arg20[%c0_138, %c0_139] : memref<1x32xf32, #tpu.memory_space<vmem>>, vector<1x32xf32>
    %cst_140 = arith.constant dense<0.000000e+00> : vector<32xf32>
    %697 = vector.multi_reduction <add>, %694, %cst_140 [0] : vector<16x32xf32> to vector<32xf32>
    %698 = vector.shape_cast %697 : vector<32xf32> to vector<1x32xf32>
    %699 = arith.mulf %694, %694 : vector<16x32xf32>
    %cst_141 = arith.constant dense<0.000000e+00> : vector<32xf32>
    %700 = vector.multi_reduction <add>, %699, %cst_141 [0] : vector<16x32xf32> to vector<32xf32>
    %701 = vector.shape_cast %700 : vector<32xf32> to vector<1x32xf32>
    %cst_142 = arith.constant dense<0.000000e+00> : vector<1x32xf32>
    %702 = tpu.matmul %698, %680, %cst_142 {dimension_numbers = #tpu.dot_dimension_numbers<[1], [0], [0], [1], [0, 0, 1, 1], [], []>} : vector<1x32xf32>, vector<32x32xf32>, vector<1x32xf32> -> vector<1x32xf32>
    %cst_143 = arith.constant 7.812500e-03 : f32
    %703 = vector.broadcast %cst_143 : f32 to vector<1x32xf32>
    %704 = arith.mulf %702, %703 : vector<1x32xf32>
    %cst_144 = arith.constant dense<0.000000e+00> : vector<1x32xf32>
    %705 = tpu.matmul %701, %680, %cst_144 {dimension_numbers = #tpu.dot_dimension_numbers<[1], [0], [0], [1], [0, 0, 1, 1], [], []>} : vector<1x32xf32>, vector<32x32xf32>, vector<1x32xf32> -> vector<1x32xf32>
    %cst_145 = arith.constant 7.812500e-03 : f32
    %706 = vector.broadcast %cst_145 : f32 to vector<1x32xf32>
    %707 = arith.mulf %705, %706 : vector<1x32xf32>
    %708 = arith.mulf %704, %704 : vector<1x32xf32>
    %709 = arith.subf %707, %708 : vector<1x32xf32>
    %cst_146 = arith.constant 9.99999974E-6 : f32
    %710 = vector.broadcast %cst_146 : f32 to vector<1x32xf32>
    %711 = arith.addf %709, %710 : vector<1x32xf32>
    %712 = math.rsqrt %711 : vector<1x32xf32>
    %713 = vector.broadcast %704 : vector<1x32xf32> to vector<16x32xf32>
    %714 = arith.subf %694, %713 : vector<16x32xf32>
    %715 = vector.broadcast %712 : vector<1x32xf32> to vector<16x32xf32>
    %716 = arith.mulf %714, %715 : vector<16x32xf32>
    %717 = vector.broadcast %695 : vector<1x32xf32> to vector<16x32xf32>
    %718 = arith.mulf %716, %717 : vector<16x32xf32>
    %719 = vector.broadcast %696 : vector<1x32xf32> to vector<16x32xf32>
    %720 = arith.addf %718, %719 : vector<16x32xf32>
    %cst_147 = arith.constant 0.000000e+00 : f32
    %721 = vector.broadcast %cst_147 : f32 to vector<16x32xf32>
    %722 = arith.maximumf %720, %721 : vector<16x32xf32>
    %c0_148 = arith.constant 0 : index
    %c0_149 = arith.constant 0 : index
    %c0_150 = arith.constant 0 : index
    %723 = vector.load %arg41[%c0_148, %c0_149, %c0_150] : memref<1x16x32xf32, #tpu.memory_space<vmem>>, vector<1x16x32xf32>
    %724 = vector.shape_cast %723 : vector<1x16x32xf32> to vector<16x32xf32>
    %725 = vector.shape_cast %722 : vector<16x32xf32> to vector<1x16x32xf32>
    tpu.vector_store %arg41[%c0_148, %c0_149, %c0_150], %725 {strides = array<i32>} : memref<1x16x32xf32, #tpu.memory_space<vmem>>, vector<1x16x32xf32>,
    %c0_151 = arith.constant 0 : index
    %c0_152 = arith.constant 0 : index
    %726 = vector.load %arg21[%c0_151, %c0_152] : memref<8x16xf32, #tpu.memory_space<vmem>>, vector<8x16xf32>
    %c0_153 = arith.constant 0 : index
    %c0_154 = arith.constant 0 : index
    %727 = vector.load %arg22[%c0_153, %c0_154] : memref<8x16xf32, #tpu.memory_space<vmem>>, vector<8x16xf32>
    %c0_155 = arith.constant 0 : index
    %c0_156 = arith.constant 0 : index
    %728 = vector.load %arg23[%c0_155, %c0_156] : memref<8x16xf32, #tpu.memory_space<vmem>>, vector<8x16xf32>
    %c0_157 = arith.constant 0 : index
    %c0_158 = arith.constant 0 : index
    %729 = vector.load %arg24[%c0_157, %c0_158] : memref<96x32xf32, #tpu.memory_space<vmem>>, vector<96x32xf32>
    %c0_159 = arith.constant 0 : index
    %c0_160 = arith.constant 0 : index
    %730 = vector.load %arg25[%c0_159, %c0_160] : memref<1x32xf32, #tpu.memory_space<vmem>>, vector<1x32xf32>
    %c0_161 = arith.constant 0 : index
    %c0_162 = arith.constant 0 : index
    %731 = vector.load %arg26[%c0_161, %c0_162] : memref<1x32xf32, #tpu.memory_space<vmem>>, vector<1x32xf32>
    %c0_163 = arith.constant 0 : index
    %c0_164 = arith.constant 0 : index
    %732 = vector.load %arg27[%c0_163, %c0_164] : memref<32x32xf32, #tpu.memory_space<vmem>>, vector<32x32xf32>
    %c0_165 = arith.constant 0 : index
    %c0_166 = arith.constant 0 : index
    %733 = vector.load %arg28[%c0_165, %c0_166] : memref<1x32xf32, #tpu.memory_space<vmem>>, vector<1x32xf32>
    %c0_167 = arith.constant 0 : index
    %c0_168 = arith.constant 0 : index
    %734 = vector.load %arg29[%c0_167, %c0_168] : memref<1x32xf32, #tpu.memory_space<vmem>>, vector<1x32xf32>
    %c0_169 = arith.constant 0 : index
    %c0_170 = arith.constant 0 : index
    %735 = vector.load %arg30[%c0_169, %c0_170] : memref<1x32xf32, #tpu.memory_space<vmem>>, vector<1x32xf32>
    %cst_171 = arith.constant dense<0.000000e+00> : vector<8x32xf32>
    %736 = tpu.matmul %726, %722, %cst_171 {dimension_numbers = #tpu.dot_dimension_numbers<[1], [0], [0], [1], [0, 0, 1, 1], [], []>} : vector<8x16xf32>, vector<16x32xf32>, vector<8x32xf32> -> vector<8x32xf32>
    %cst_172 = arith.constant dense<0.000000e+00> : vector<8x32xf32>
    %737 = tpu.matmul %727, %722, %cst_172 {dimension_numbers = #tpu.dot_dimension_numbers<[1], [0], [0], [1], [0, 0, 1, 1], [], []>} : vector<8x16xf32>, vector<16x32xf32>, vector<8x32xf32> -> vector<8x32xf32>
    %cst_173 = arith.constant dense<0.000000e+00> : vector<8x32xf32>
    %738 = tpu.matmul %728, %722, %cst_173 {dimension_numbers = #tpu.dot_dimension_numbers<[1], [0], [0], [1], [0, 0, 1, 1], [], []>} : vector<8x16xf32>, vector<16x32xf32>, vector<8x32xf32> -> vector<8x32xf32>
    %739 = tpu.concatenate %736, %737, %738 in 1 : vector<8x32xf32>, vector<8x32xf32>, vector<8x32xf32> -> vector<8x96xf32>
    %cst_174 = arith.constant dense<0.000000e+00> : vector<8x32xf32>
    %740 = tpu.matmul %739, %729, %cst_174 {dimension_numbers = #tpu.dot_dimension_numbers<[1], [0], [0], [1], [0, 0, 1, 1], [], []>} : vector<8x96xf32>, vector<96x32xf32>, vector<8x32xf32> -> vector<8x32xf32>
    %cst_175 = arith.constant dense<0.000000e+00> : vector<32xf32>
    %741 = vector.multi_reduction <add>, %740, %cst_175 [0] : vector<8x32xf32> to vector<32xf32>
    %742 = vector.shape_cast %741 : vector<32xf32> to vector<1x32xf32>
    %743 = arith.mulf %740, %740 : vector<8x32xf32>
    %cst_176 = arith.constant dense<0.000000e+00> : vector<32xf32>
    %744 = vector.multi_reduction <add>, %743, %cst_176 [0] : vector<8x32xf32> to vector<32xf32>
    %745 = vector.shape_cast %744 : vector<32xf32> to vector<1x32xf32>
    %cst_177 = arith.constant dense<0.000000e+00> : vector<1x32xf32>
    %746 = tpu.matmul %742, %680, %cst_177 {dimension_numbers = #tpu.dot_dimension_numbers<[1], [0], [0], [1], [0, 0, 1, 1], [], []>} : vector<1x32xf32>, vector<32x32xf32>, vector<1x32xf32> -> vector<1x32xf32>
    %cst_178 = arith.constant 1.562500e-02 : f32
    %747 = vector.broadcast %cst_178 : f32 to vector<1x32xf32>
    %748 = arith.mulf %746, %747 : vector<1x32xf32>
    %cst_179 = arith.constant dense<0.000000e+00> : vector<1x32xf32>
    %749 = tpu.matmul %745, %680, %cst_179 {dimension_numbers = #tpu.dot_dimension_numbers<[1], [0], [0], [1], [0, 0, 1, 1], [], []>} : vector<1x32xf32>, vector<32x32xf32>, vector<1x32xf32> -> vector<1x32xf32>
    %cst_180 = arith.constant 1.562500e-02 : f32
    %750 = vector.broadcast %cst_180 : f32 to vector<1x32xf32>
    %751 = arith.mulf %749, %750 : vector<1x32xf32>
    %752 = arith.mulf %748, %748 : vector<1x32xf32>
    %753 = arith.subf %751, %752 : vector<1x32xf32>
    %cst_181 = arith.constant 9.99999974E-6 : f32
    %754 = vector.broadcast %cst_181 : f32 to vector<1x32xf32>
    %755 = arith.addf %753, %754 : vector<1x32xf32>
    %756 = math.rsqrt %755 : vector<1x32xf32>
    %757 = vector.broadcast %748 : vector<1x32xf32> to vector<8x32xf32>
    %758 = arith.subf %740, %757 : vector<8x32xf32>
    %759 = vector.broadcast %756 : vector<1x32xf32> to vector<8x32xf32>
    %760 = arith.mulf %758, %759 : vector<8x32xf32>
    %761 = vector.broadcast %730 : vector<1x32xf32> to vector<8x32xf32>
    %762 = arith.mulf %760, %761 : vector<8x32xf32>
    %763 = vector.broadcast %731 : vector<1x32xf32> to vector<8x32xf32>
    %764 = arith.addf %762, %763 : vector<8x32xf32>
    %cst_182 = arith.constant 0.000000e+00 : f32
    %765 = vector.broadcast %cst_182 : f32 to vector<8x32xf32>
    %766 = arith.maximumf %764, %765 : vector<8x32xf32>
    %cst_183 = arith.constant dense<0.000000e+00> : vector<8x32xf32>
    %767 = tpu.matmul %766, %732, %cst_183 {dimension_numbers = #tpu.dot_dimension_numbers<[1], [0], [0], [1], [0, 0, 1, 1], [], []>} : vector<8x32xf32>, vector<32x32xf32>, vector<8x32xf32> -> vector<8x32xf32>
    %768 = vector.broadcast %733 : vector<1x32xf32> to vector<8x32xf32>
    %769 = arith.addf %767, %768 : vector<8x32xf32>
    %cst_184 = arith.constant dense<0.000000e+00> : vector<32xf32>
    %770 = vector.multi_reduction <add>, %769, %cst_184 [0] : vector<8x32xf32> to vector<32xf32>
    %771 = vector.shape_cast %770 : vector<32xf32> to vector<1x32xf32>
    %772 = arith.mulf %769, %769 : vector<8x32xf32>
    %cst_185 = arith.constant dense<0.000000e+00> : vector<32xf32>
    %773 = vector.multi_reduction <add>, %772, %cst_185 [0] : vector<8x32xf32> to vector<32xf32>
    %774 = vector.shape_cast %773 : vector<32xf32> to vector<1x32xf32>
    %cst_186 = arith.constant dense<0.000000e+00> : vector<1x32xf32>
    %775 = tpu.matmul %771, %680, %cst_186 {dimension_numbers = #tpu.dot_dimension_numbers<[1], [0], [0], [1], [0, 0, 1, 1], [], []>} : vector<1x32xf32>, vector<32x32xf32>, vector<1x32xf32> -> vector<1x32xf32>
    %cst_187 = arith.constant 1.562500e-02 : f32
    %776 = vector.broadcast %cst_187 : f32 to vector<1x32xf32>
    %777 = arith.mulf %775, %776 : vector<1x32xf32>
    %cst_188 = arith.constant dense<0.000000e+00> : vector<1x32xf32>
    %778 = tpu.matmul %774, %680, %cst_188 {dimension_numbers = #tpu.dot_dimension_numbers<[1], [0], [0], [1], [0, 0, 1, 1], [], []>} : vector<1x32xf32>, vector<32x32xf32>, vector<1x32xf32> -> vector<1x32xf32>
    %cst_189 = arith.constant 1.562500e-02 : f32
    %779 = vector.broadcast %cst_189 : f32 to vector<1x32xf32>
    %780 = arith.mulf %778, %779 : vector<1x32xf32>
    %781 = arith.mulf %777, %777 : vector<1x32xf32>
    %782 = arith.subf %780, %781 : vector<1x32xf32>
    %cst_190 = arith.constant 9.99999974E-6 : f32
    %783 = vector.broadcast %cst_190 : f32 to vector<1x32xf32>
    %784 = arith.addf %782, %783 : vector<1x32xf32>
    %785 = math.rsqrt %784 : vector<1x32xf32>
    %786 = vector.broadcast %777 : vector<1x32xf32> to vector<8x32xf32>
    %787 = arith.subf %769, %786 : vector<8x32xf32>
    %788 = vector.broadcast %785 : vector<1x32xf32> to vector<8x32xf32>
    %789 = arith.mulf %787, %788 : vector<8x32xf32>
    %790 = vector.broadcast %734 : vector<1x32xf32> to vector<8x32xf32>
    %791 = arith.mulf %789, %790 : vector<8x32xf32>
    %792 = vector.broadcast %735 : vector<1x32xf32> to vector<8x32xf32>
    %793 = arith.addf %791, %792 : vector<8x32xf32>
    %cst_191 = arith.constant 0.000000e+00 : f32
    %794 = vector.broadcast %cst_191 : f32 to vector<8x32xf32>
    %795 = arith.maximumf %793, %794 : vector<8x32xf32>
    %c0_192 = arith.constant 0 : index
    %c0_193 = arith.constant 0 : index
    %c0_194 = arith.constant 0 : index
    %796 = vector.load %arg42[%c0_192, %c0_193, %c0_194] : memref<1x8x32xf32, #tpu.memory_space<vmem>>, vector<1x8x32xf32>
    %797 = vector.shape_cast %796 : vector<1x8x32xf32> to vector<8x32xf32>
    %798 = vector.shape_cast %795 : vector<8x32xf32> to vector<1x8x32xf32>
    tpu.vector_store %arg42[%c0_192, %c0_193, %c0_194], %798 {strides = array<i32>} : memref<1x8x32xf32, #tpu.memory_space<vmem>>, vector<1x8x32xf32>,
    %c0_195 = arith.constant 0 : index
    %c0_196 = arith.constant 0 : index
    %799 = vector.load %arg31[%c0_195, %c0_196] : memref<4x8xf32, #tpu.memory_space<vmem>>, vector<4x8xf32>
    %c0_197 = arith.constant 0 : index
    %c0_198 = arith.constant 0 : index
    %800 = vector.load %arg32[%c0_197, %c0_198] : memref<4x8xf32, #tpu.memory_space<vmem>>, vector<4x8xf32>
    %c0_199 = arith.constant 0 : index
    %c0_200 = arith.constant 0 : index
    %801 = vector.load %arg33[%c0_199, %c0_200] : memref<4x8xf32, #tpu.memory_space<vmem>>, vector<4x8xf32>
    %c0_201 = arith.constant 0 : index
    %c0_202 = arith.constant 0 : index
    %802 = vector.load %arg34[%c0_201, %c0_202] : memref<96x32xf32, #tpu.memory_space<vmem>>, vector<96x32xf32>
    %c0_203 = arith.constant 0 : index
    %c0_204 = arith.constant 0 : index
    %803 = vector.load %arg35[%c0_203, %c0_204] : memref<1x32xf32, #tpu.memory_space<vmem>>, vector<1x32xf32>
    %c0_205 = arith.constant 0 : index
    %c0_206 = arith.constant 0 : index
    %804 = vector.load %arg36[%c0_205, %c0_206] : memref<1x32xf32, #tpu.memory_space<vmem>>, vector<1x32xf32>
    %c0_207 = arith.constant 0 : index
    %c0_208 = arith.constant 0 : index
    %805 = vector.load %arg37[%c0_207, %c0_208] : memref<32x32xf32, #tpu.memory_space<vmem>>, vector<32x32xf32>
    %c0_209 = arith.constant 0 : index
    %c0_210 = arith.constant 0 : index
    %806 = vector.load %arg38[%c0_209, %c0_210] : memref<1x32xf32, #tpu.memory_space<vmem>>, vector<1x32xf32>
    %c0_211 = arith.constant 0 : index
    %c0_212 = arith.constant 0 : index
    %807 = vector.load %arg39[%c0_211, %c0_212] : memref<1x32xf32, #tpu.memory_space<vmem>>, vector<1x32xf32>
    %c0_213 = arith.constant 0 : index
    %c0_214 = arith.constant 0 : index
    %808 = vector.load %arg40[%c0_213, %c0_214] : memref<1x32xf32, #tpu.memory_space<vmem>>, vector<1x32xf32>
    %cst_215 = arith.constant dense<0.000000e+00> : vector<4x32xf32>
    %809 = tpu.matmul %799, %795, %cst_215 {dimension_numbers = #tpu.dot_dimension_numbers<[1], [0], [0], [1], [0, 0, 1, 1], [], []>} : vector<4x8xf32>, vector<8x32xf32>, vector<4x32xf32> -> vector<4x32xf32>
    %cst_216 = arith.constant dense<0.000000e+00> : vector<4x32xf32>
    %810 = tpu.matmul %800, %795, %cst_216 {dimension_numbers = #tpu.dot_dimension_numbers<[1], [0], [0], [1], [0, 0, 1, 1], [], []>} : vector<4x8xf32>, vector<8x32xf32>, vector<4x32xf32> -> vector<4x32xf32>
    %cst_217 = arith.constant dense<0.000000e+00> : vector<4x32xf32>
    %811 = tpu.matmul %801, %795, %cst_217 {dimension_numbers = #tpu.dot_dimension_numbers<[1], [0], [0], [1], [0, 0, 1, 1], [], []>} : vector<4x8xf32>, vector<8x32xf32>, vector<4x32xf32> -> vector<4x32xf32>
    %812 = tpu.concatenate %809, %810, %811 in 1 : vector<4x32xf32>, vector<4x32xf32>, vector<4x32xf32> -> vector<4x96xf32>
    %cst_218 = arith.constant dense<0.000000e+00> : vector<4x32xf32>
    %813 = tpu.matmul %812, %802, %cst_218 {dimension_numbers = #tpu.dot_dimension_numbers<[1], [0], [0], [1], [0, 0, 1, 1], [], []>} : vector<4x96xf32>, vector<96x32xf32>, vector<4x32xf32> -> vector<4x32xf32>
    %cst_219 = arith.constant dense<0.000000e+00> : vector<32xf32>
    %814 = vector.multi_reduction <add>, %813, %cst_219 [0] : vector<4x32xf32> to vector<32xf32>
    %815 = vector.shape_cast %814 : vector<32xf32> to vector<1x32xf32>
    %816 = arith.mulf %813, %813 : vector<4x32xf32>
    %cst_220 = arith.constant dense<0.000000e+00> : vector<32xf32>
    %817 = vector.multi_reduction <add>, %816, %cst_220 [0] : vector<4x32xf32> to vector<32xf32>
    %818 = vector.shape_cast %817 : vector<32xf32> to vector<1x32xf32>
    %cst_221 = arith.constant dense<0.000000e+00> : vector<1x32xf32>
    %819 = tpu.matmul %815, %680, %cst_221 {dimension_numbers = #tpu.dot_dimension_numbers<[1], [0], [0], [1], [0, 0, 1, 1], [], []>} : vector<1x32xf32>, vector<32x32xf32>, vector<1x32xf32> -> vector<1x32xf32>
    %cst_222 = arith.constant 3.125000e-02 : f32
    %820 = vector.broadcast %cst_222 : f32 to vector<1x32xf32>
    %821 = arith.mulf %819, %820 : vector<1x32xf32>
    %cst_223 = arith.constant dense<0.000000e+00> : vector<1x32xf32>
    %822 = tpu.matmul %818, %680, %cst_223 {dimension_numbers = #tpu.dot_dimension_numbers<[1], [0], [0], [1], [0, 0, 1, 1], [], []>} : vector<1x32xf32>, vector<32x32xf32>, vector<1x32xf32> -> vector<1x32xf32>
    %cst_224 = arith.constant 3.125000e-02 : f32
    %823 = vector.broadcast %cst_224 : f32 to vector<1x32xf32>
    %824 = arith.mulf %822, %823 : vector<1x32xf32>
    %825 = arith.mulf %821, %821 : vector<1x32xf32>
    %826 = arith.subf %824, %825 : vector<1x32xf32>
    %cst_225 = arith.constant 9.99999974E-6 : f32
    %827 = vector.broadcast %cst_225 : f32 to vector<1x32xf32>
    %828 = arith.addf %826, %827 : vector<1x32xf32>
    %829 = math.rsqrt %828 : vector<1x32xf32>
    %830 = vector.broadcast %821 : vector<1x32xf32> to vector<4x32xf32>
    %831 = arith.subf %813, %830 : vector<4x32xf32>
    %832 = vector.broadcast %829 : vector<1x32xf32> to vector<4x32xf32>
    %833 = arith.mulf %831, %832 : vector<4x32xf32>
    %834 = vector.broadcast %803 : vector<1x32xf32> to vector<4x32xf32>
    %835 = arith.mulf %833, %834 : vector<4x32xf32>
    %836 = vector.broadcast %804 : vector<1x32xf32> to vector<4x32xf32>
    %837 = arith.addf %835, %836 : vector<4x32xf32>
    %cst_226 = arith.constant 0.000000e+00 : f32
    %838 = vector.broadcast %cst_226 : f32 to vector<4x32xf32>
    %839 = arith.maximumf %837, %838 : vector<4x32xf32>
    %cst_227 = arith.constant dense<0.000000e+00> : vector<4x32xf32>
    %840 = tpu.matmul %839, %805, %cst_227 {dimension_numbers = #tpu.dot_dimension_numbers<[1], [0], [0], [1], [0, 0, 1, 1], [], []>} : vector<4x32xf32>, vector<32x32xf32>, vector<4x32xf32> -> vector<4x32xf32>
    %841 = vector.broadcast %806 : vector<1x32xf32> to vector<4x32xf32>
    %842 = arith.addf %840, %841 : vector<4x32xf32>
    %cst_228 = arith.constant dense<0.000000e+00> : vector<32xf32>
    %843 = vector.multi_reduction <add>, %842, %cst_228 [0] : vector<4x32xf32> to vector<32xf32>
    %844 = vector.shape_cast %843 : vector<32xf32> to vector<1x32xf32>
    %845 = arith.mulf %842, %842 : vector<4x32xf32>
    %cst_229 = arith.constant dense<0.000000e+00> : vector<32xf32>
    %846 = vector.multi_reduction <add>, %845, %cst_229 [0] : vector<4x32xf32> to vector<32xf32>
    %847 = vector.shape_cast %846 : vector<32xf32> to vector<1x32xf32>
    %cst_230 = arith.constant dense<0.000000e+00> : vector<1x32xf32>
    %848 = tpu.matmul %844, %680, %cst_230 {dimension_numbers = #tpu.dot_dimension_numbers<[1], [0], [0], [1], [0, 0, 1, 1], [], []>} : vector<1x32xf32>, vector<32x32xf32>, vector<1x32xf32> -> vector<1x32xf32>
    %cst_231 = arith.constant 3.125000e-02 : f32
    %849 = vector.broadcast %cst_231 : f32 to vector<1x32xf32>
    %850 = arith.mulf %848, %849 : vector<1x32xf32>
    %cst_232 = arith.constant dense<0.000000e+00> : vector<1x32xf32>
    %851 = tpu.matmul %847, %680, %cst_232 {dimension_numbers = #tpu.dot_dimension_numbers<[1], [0], [0], [1], [0, 0, 1, 1], [], []>} : vector<1x32xf32>, vector<32x32xf32>, vector<1x32xf32> -> vector<1x32xf32>
    %cst_233 = arith.constant 3.125000e-02 : f32
    %852 = vector.broadcast %cst_233 : f32 to vector<1x32xf32>
    %853 = arith.mulf %851, %852 : vector<1x32xf32>
    %854 = arith.mulf %850, %850 : vector<1x32xf32>
    %855 = arith.subf %853, %854 : vector<1x32xf32>
    %cst_234 = arith.constant 9.99999974E-6 : f32
    %856 = vector.broadcast %cst_234 : f32 to vector<1x32xf32>
    %857 = arith.addf %855, %856 : vector<1x32xf32>
    %858 = math.rsqrt %857 : vector<1x32xf32>
    %859 = vector.broadcast %850 : vector<1x32xf32> to vector<4x32xf32>
    %860 = arith.subf %842, %859 : vector<4x32xf32>
    %861 = vector.broadcast %858 : vector<1x32xf32> to vector<4x32xf32>
    %862 = arith.mulf %860, %861 : vector<4x32xf32>
    %863 = vector.broadcast %807 : vector<1x32xf32> to vector<4x32xf32>
    %864 = arith.mulf %862, %863 : vector<4x32xf32>
    %865 = vector.broadcast %808 : vector<1x32xf32> to vector<4x32xf32>
    %866 = arith.addf %864, %865 : vector<4x32xf32>
    %cst_235 = arith.constant 0.000000e+00 : f32
    %867 = vector.broadcast %cst_235 : f32 to vector<4x32xf32>
    %868 = arith.maximumf %866, %867 : vector<4x32xf32>
    %c0_236 = arith.constant 0 : index
    %c0_237 = arith.constant 0 : index
    %c0_238 = arith.constant 0 : index
    %869 = vector.load %arg43[%c0_236, %c0_237, %c0_238] : memref<1x4x32xf32, #tpu.memory_space<vmem>>, vector<1x4x32xf32>
    %870 = vector.shape_cast %869 : vector<1x4x32xf32> to vector<4x32xf32>
    %871 = vector.shape_cast %868 : vector<4x32xf32> to vector<1x4x32xf32>
    tpu.vector_store %arg43[%c0_236, %c0_237, %c0_238], %871 {strides = array<i32>} : memref<1x4x32xf32, #tpu.memory_space<vmem>>, vector<1x4x32xf32>,
    return
  }
  func.func @transform_0(%arg0: i32) -> i32 {
    %c0_i32 = arith.constant 0 : i32
    %c0_i32_0 = arith.constant 0 : i32
    return %c0_i32 : i32
  }
  func.func @transform_1(%arg0: i32) -> (i32, i32, i32) {
    %c0_i32 = arith.constant 0 : i32
    %c0_i32_0 = arith.constant 0 : i32
    %c0_i32_1 = arith.constant 0 : i32
    return %arg0, %c0_i32, %c0_i32_0 : i32, i32, i32
  }
  func.func @transform_2(%arg0: i32) -> (i32, i32, i32) {
    %c0_i32 = arith.constant 0 : i32
    %c0_i32_0 = arith.constant 0 : i32
    %c0_i32_1 = arith.constant 0 : i32
    return %arg0, %c0_i32, %c0_i32_0 : i32, i32, i32
  }
  func.func @transform_3(%arg0: i32) -> (i32, i32) {
    %c0_i32 = arith.constant 0 : i32
    %c0_i32_0 = arith.constant 0 : i32
    %c0_i32_1 = arith.constant 0 : i32
    return %c0_i32, %c0_i32_0 : i32, i32
  }
  func.func @transform_4(%arg0: i32) -> (i32, i32) {
    %c0_i32 = arith.constant 0 : i32
    %c0_i32_0 = arith.constant 0 : i32
    %c0_i32_1 = arith.constant 0 : i32
    return %c0_i32, %c0_i32_0 : i32, i32
  }
  func.func @transform_5(%arg0: i32) -> (i32, i32) {
    %c0_i32 = arith.constant 0 : i32
    %c0_i32_0 = arith.constant 0 : i32
    %c0_i32_1 = arith.constant 0 : i32
    return %c0_i32, %c0_i32_0 : i32, i32
  }
  func.func @transform_6(%arg0: i32) -> (i32, i32) {
    %c0_i32 = arith.constant 0 : i32
    %c0_i32_0 = arith.constant 0 : i32
    %c0_i32_1 = arith.constant 0 : i32
    return %c0_i32, %c0_i32_0 : i32, i32
  }
  func.func @transform_7(%arg0: i32) -> (i32, i32) {
    %c0_i32 = arith.constant 0 : i32
    %c0_i32_0 = arith.constant 0 : i32
    %c0_i32_1 = arith.constant 0 : i32
    return %c0_i32, %c0_i32_0 : i32, i32
  }
  func.func @transform_8(%arg0: i32) -> (i32, i32) {
    %c0_i32 = arith.constant 0 : i32
    %c0_i32_0 = arith.constant 0 : i32
    %c0_i32_1 = arith.constant 0 : i32
    return %c0_i32, %c0_i32_0 : i32, i32
  }
  func.func @transform_9(%arg0: i32) -> (i32, i32) {
    %c0_i32 = arith.constant 0 : i32
    %c0_i32_0 = arith.constant 0 : i32
    %c0_i32_1 = arith.constant 0 : i32
    return %c0_i32, %c0_i32_0 : i32, i32
  }
  func.func @transform_10(%arg0: i32) -> (i32, i32) {
    %c0_i32 = arith.constant 0 : i32
    %c0_i32_0 = arith.constant 0 : i32
    %c0_i32_1 = arith.constant 0 : i32
    return %c0_i32, %c0_i32_0 : i32, i32
  }
  func.func @transform_11(%arg0: i32) -> (i32, i32) {
    %c0_i32 = arith.constant 0 : i32
    %c0_i32_0 = arith.constant 0 : i32
    %c0_i32_1 = arith.constant 0 : i32
    return %c0_i32, %c0_i32_0 : i32, i32
  }
  func.func @transform_12(%arg0: i32) -> (i32, i32) {
    %c0_i32 = arith.constant 0 : i32
    %c0_i32_0 = arith.constant 0 : i32
    %c0_i32_1 = arith.constant 0 : i32
    return %c0_i32, %c0_i32_0 : i32, i32
  }
  func.func @transform_13(%arg0: i32) -> (i32, i32) {
    %c0_i32 = arith.constant 0 : i32
    %c0_i32_0 = arith.constant 0 : i32
    %c0_i32_1 = arith.constant 0 : i32
    return %c0_i32, %c0_i32_0 : i32, i32
  }
  func.func @transform_14(%arg0: i32) -> (i32, i32) {
    %c0_i32 = arith.constant 0 : i32
    %c0_i32_0 = arith.constant 0 : i32
    %c0_i32_1 = arith.constant 0 : i32
    return %c0_i32, %c0_i32_0 : i32, i32
  }
  func.func @transform_15(%arg0: i32) -> (i32, i32, i32) {
    %c0_i32 = arith.constant 0 : i32
    %c0_i32_0 = arith.constant 0 : i32
    %c0_i32_1 = arith.constant 0 : i32
    %c0_i32_2 = arith.constant 0 : i32
    return %c0_i32, %c0_i32_0, %c0_i32_1 : i32, i32, i32
  }
  func.func @transform_16(%arg0: i32) -> (i32, i32) {
    %c0_i32 = arith.constant 0 : i32
    %c0_i32_0 = arith.constant 0 : i32
    %c0_i32_1 = arith.constant 0 : i32
    return %c0_i32, %c0_i32_0 : i32, i32
  }
  func.func @transform_17(%arg0: i32) -> (i32, i32) {
    %c0_i32 = arith.constant 0 : i32
    %c0_i32_0 = arith.constant 0 : i32
    %c0_i32_1 = arith.constant 0 : i32
    return %c0_i32, %c0_i32_0 : i32, i32
  }
  func.func @transform_18(%arg0: i32) -> (i32, i32) {
    %c0_i32 = arith.constant 0 : i32
    %c0_i32_0 = arith.constant 0 : i32
    %c0_i32_1 = arith.constant 0 : i32
    return %c0_i32, %c0_i32_0 : i32, i32
  }
  func.func @transform_19(%arg0: i32) -> (i32, i32) {
    %c0_i32 = arith.constant 0 : i32
    %c0_i32_0 = arith.constant 0 : i32
    %c0_i32_1 = arith.constant 0 : i32
    return %c0_i32, %c0_i32_0 : i32, i32
  }
  func.func @transform_20(%arg0: i32) -> (i32, i32) {
    %c0_i32 = arith.constant 0 : i32
    %c0_i32_0 = arith.constant 0 : i32
    %c0_i32_1 = arith.constant 0 : i32
    return %c0_i32, %c0_i32_0 : i32, i32
  }
  func.func @transform_21(%arg0: i32) -> (i32, i32) {
    %c0_i32 = arith.constant 0 : i32
    %c0_i32_0 = arith.constant 0 : i32
    %c0_i32_1 = arith.constant 0 : i32
    return %c0_i32, %c0_i32_0 : i32, i32
  }
  func.func @transform_22(%arg0: i32) -> (i32, i32) {
    %c0_i32 = arith.constant 0 : i32
    %c0_i32_0 = arith.constant 0 : i32
    %c0_i32_1 = arith.constant 0 : i32
    return %c0_i32, %c0_i32_0 : i32, i32
  }
  func.func @transform_23(%arg0: i32) -> (i32, i32) {
    %c0_i32 = arith.constant 0 : i32
    %c0_i32_0 = arith.constant 0 : i32
    %c0_i32_1 = arith.constant 0 : i32
    return %c0_i32, %c0_i32_0 : i32, i32
  }
  func.func @transform_24(%arg0: i32) -> (i32, i32) {
    %c0_i32 = arith.constant 0 : i32
    %c0_i32_0 = arith.constant 0 : i32
    %c0_i32_1 = arith.constant 0 : i32
    return %c0_i32, %c0_i32_0 : i32, i32
  }
  func.func @transform_25(%arg0: i32) -> (i32, i32) {
    %c0_i32 = arith.constant 0 : i32
    %c0_i32_0 = arith.constant 0 : i32
    %c0_i32_1 = arith.constant 0 : i32
    return %c0_i32, %c0_i32_0 : i32, i32
  }
  func.func @transform_26(%arg0: i32) -> (i32, i32) {
    %c0_i32 = arith.constant 0 : i32
    %c0_i32_0 = arith.constant 0 : i32
    %c0_i32_1 = arith.constant 0 : i32
    return %c0_i32, %c0_i32_0 : i32, i32
  }
  func.func @transform_27(%arg0: i32) -> (i32, i32) {
    %c0_i32 = arith.constant 0 : i32
    %c0_i32_0 = arith.constant 0 : i32
    %c0_i32_1 = arith.constant 0 : i32
    return %c0_i32, %c0_i32_0 : i32, i32
  }
  func.func @transform_28(%arg0: i32) -> (i32, i32) {
    %c0_i32 = arith.constant 0 : i32
    %c0_i32_0 = arith.constant 0 : i32
    %c0_i32_1 = arith.constant 0 : i32
    return %c0_i32, %c0_i32_0 : i32, i32
  }
  func.func @transform_29(%arg0: i32) -> (i32, i32) {
    %c0_i32 = arith.constant 0 : i32
    %c0_i32_0 = arith.constant 0 : i32
    %c0_i32_1 = arith.constant 0 : i32
    return %c0_i32, %c0_i32_0 : i32, i32
  }
  func.func @transform_30(%arg0: i32) -> (i32, i32) {
    %c0_i32 = arith.constant 0 : i32
    %c0_i32_0 = arith.constant 0 : i32
    %c0_i32_1 = arith.constant 0 : i32
    return %c0_i32, %c0_i32_0 : i32, i32
  }
  func.func @transform_31(%arg0: i32) -> (i32, i32) {
    %c0_i32 = arith.constant 0 : i32
    %c0_i32_0 = arith.constant 0 : i32
    %c0_i32_1 = arith.constant 0 : i32
    return %c0_i32, %c0_i32_0 : i32, i32
  }
  func.func @transform_32(%arg0: i32) -> (i32, i32) {
    %c0_i32 = arith.constant 0 : i32
    %c0_i32_0 = arith.constant 0 : i32
    %c0_i32_1 = arith.constant 0 : i32
    return %c0_i32, %c0_i32_0 : i32, i32
  }
  func.func @transform_33(%arg0: i32) -> (i32, i32) {
    %c0_i32 = arith.constant 0 : i32
    %c0_i32_0 = arith.constant 0 : i32
    %c0_i32_1 = arith.constant 0 : i32
    return %c0_i32, %c0_i32_0 : i32, i32
  }
  func.func @transform_34(%arg0: i32) -> (i32, i32) {
    %c0_i32 = arith.constant 0 : i32
    %c0_i32_0 = arith.constant 0 : i32
    %c0_i32_1 = arith.constant 0 : i32
    return %c0_i32, %c0_i32_0 : i32, i32
  }
  func.func @transform_35(%arg0: i32) -> (i32, i32) {
    %c0_i32 = arith.constant 0 : i32
    %c0_i32_0 = arith.constant 0 : i32
    %c0_i32_1 = arith.constant 0 : i32
    return %c0_i32, %c0_i32_0 : i32, i32
  }
  func.func @transform_36(%arg0: i32) -> (i32, i32) {
    %c0_i32 = arith.constant 0 : i32
    %c0_i32_0 = arith.constant 0 : i32
    %c0_i32_1 = arith.constant 0 : i32
    return %c0_i32, %c0_i32_0 : i32, i32
  }
  func.func @transform_37(%arg0: i32) -> (i32, i32) {
    %c0_i32 = arith.constant 0 : i32
    %c0_i32_0 = arith.constant 0 : i32
    %c0_i32_1 = arith.constant 0 : i32
    return %c0_i32, %c0_i32_0 : i32, i32
  }
  func.func @transform_38(%arg0: i32) -> (i32, i32) {
    %c0_i32 = arith.constant 0 : i32
    %c0_i32_0 = arith.constant 0 : i32
    %c0_i32_1 = arith.constant 0 : i32
    return %c0_i32, %c0_i32_0 : i32, i32
  }
  func.func @transform_39(%arg0: i32) -> (i32, i32) {
    %c0_i32 = arith.constant 0 : i32
    %c0_i32_0 = arith.constant 0 : i32
    %c0_i32_1 = arith.constant 0 : i32
    return %c0_i32, %c0_i32_0 : i32, i32
  }
  func.func @transform_40(%arg0: i32) -> (i32, i32, i32) {
    %c0_i32 = arith.constant 0 : i32
    %c0_i32_0 = arith.constant 0 : i32
    %c0_i32_1 = arith.constant 0 : i32
    return %arg0, %c0_i32, %c0_i32_0 : i32, i32, i32
  }
  func.func @transform_41(%arg0: i32) -> (i32, i32, i32) {
    %c0_i32 = arith.constant 0 : i32
    %c0_i32_0 = arith.constant 0 : i32
    %c0_i32_1 = arith.constant 0 : i32
    return %arg0, %c0_i32, %c0_i32_0 : i32, i32, i32
  }
  func.func @transform_42(%arg0: i32) -> (i32, i32, i32) {
    %c0_i32 = arith.constant 0 : i32
    %c0_i32_0 = arith.constant 0 : i32
    %c0_i32_1 = arith.constant 0 : i32
    return %arg0, %c0_i32, %c0_i32_0 : i32, i32, i32
  }
  func.func @transform_43(%arg0: i32) -> (i32, i32, i32) {
    %c0_i32 = arith.constant 0 : i32
    %c0_i32_0 = arith.constant 0 : i32
    %c0_i32_1 = arith.constant 0 : i32
    return %arg0, %c0_i32, %c0_i32_0 : i32, i32, i32
  }
}

</mosaic_0001>

<llo_original>
// kernel: model_forward.1
$region0: #{model_forward.1}
  #allocation0 [shape = 'u32[]', space=smem, size = 0x4, offset = 0x4, fixed_abs, tag = 'smem constant byte address 0x4 - core index']
  #allocation1 [shape = 'u32[72,128]{1,0:T(1,128)}', space=vmem, size = 0x9000, scoped, tag = 'internal scratch']
  %s0 = inlined_call_operand.smem [shape: u32[44], index: -1, kind: input, shape index: {}]
  %s1 = sld [smem:[%s0]]
  %s2 = scalar_lea.smem %s0, 1
  %s3 = sld [smem:[%s2]]
  %s4 = scalar_lea.smem %s0, 2
  %s5 = sld [smem:[%s4]]
  %s6 = scalar_lea.smem %s0, 3
  %s7 = sld [smem:[%s6]]
  %s8 = scalar_lea.smem %s0, 4
  %s9 = sld [smem:[%s8]]
  %s10 = scalar_lea.smem %s0, 5
  %s11 = sld [smem:[%s10]]
  %s12 = scalar_lea.smem %s0, 6
  %s13 = sld [smem:[%s12]]
  %s14 = scalar_lea.smem %s0, 7
  %s15 = sld [smem:[%s14]]
  %s16 = scalar_lea.smem %s0, 8
  %s17 = sld [smem:[%s16]]
  %s18 = scalar_lea.smem %s0, 9
  %s19 = sld [smem:[%s18]]
  %s20 = scalar_lea.smem %s0, 10
  %s21 = sld [smem:[%s20]]
  %s22 = scalar_lea.smem %s0, 11
  %s23 = sld [smem:[%s22]]
  %s24 = scalar_lea.smem %s0, 12
  %s25 = sld [smem:[%s24]]
  %s26 = scalar_lea.smem %s0, 13
  %s27 = sld [smem:[%s26]]
  %s28 = scalar_lea.smem %s0, 14
  %s29 = sld [smem:[%s28]]
  %s30 = scalar_lea.smem %s0, 15
  %s31 = sld [smem:[%s30]]
  %s32 = scalar_lea.smem %s0, 16
  %s33 = sld [smem:[%s32]]
  %s34 = scalar_lea.smem %s0, 17
  %s35 = sld [smem:[%s34]]
  %s36 = scalar_lea.smem %s0, 18
  %s37 = sld [smem:[%s36]]
  %s38 = scalar_lea.smem %s0, 19
  %s39 = sld [smem:[%s38]]
  %s40 = scalar_lea.smem %s0, 20
  %s41 = sld [smem:[%s40]]
  %s42 = scalar_lea.smem %s0, 21
  %s43 = sld [smem:[%s42]]
  %s44 = scalar_lea.smem %s0, 22
  %s45 = sld [smem:[%s44]]
  %s46 = scalar_lea.smem %s0, 23
  %s47 = sld [smem:[%s46]]
  %s48 = scalar_lea.smem %s0, 24
  %s49 = sld [smem:[%s48]]
  %s50 = scalar_lea.smem %s0, 25
  %s51 = sld [smem:[%s50]]
  %s52 = scalar_lea.smem %s0, 26
  %s53 = sld [smem:[%s52]]
  %s54 = scalar_lea.smem %s0, 27
  %s55 = sld [smem:[%s54]]
  %s56 = scalar_lea.smem %s0, 28
  %s57 = sld [smem:[%s56]]
  %s58 = scalar_lea.smem %s0, 29
  %s59 = sld [smem:[%s58]]
  %s60 = scalar_lea.smem %s0, 30
  %s61 = sld [smem:[%s60]]
  %s62 = scalar_lea.smem %s0, 31
  %s63 = sld [smem:[%s62]]
  %s64 = scalar_lea.smem %s0, 32
  %s65 = sld [smem:[%s64]]
  %s66 = scalar_lea.smem %s0, 33
  %s67 = sld [smem:[%s66]]
  %s68 = scalar_lea.smem %s0, 34
  %s69 = sld [smem:[%s68]]
  %s70 = scalar_lea.smem %s0, 35
  %s71 = sld [smem:[%s70]]
  %s72 = scalar_lea.smem %s0, 36
  %s73 = sld [smem:[%s72]]
  %s74 = scalar_lea.smem %s0, 37
  %s75 = sld [smem:[%s74]]
  %s76 = scalar_lea.smem %s0, 38
  %s77 = sld [smem:[%s76]]
  %s78 = scalar_lea.smem %s0, 39
  %s79 = sld [smem:[%s78]]
  %s80 = scalar_lea.smem %s0, 40
  %s81 = sld [smem:[%s80]]
  %s82 = scalar_lea.smem %s0, 41
  %s83 = sld [smem:[%s82]]
  %s84 = scalar_lea.smem %s0, 42
  %s85 = sld [smem:[%s84]]
  %s86 = scalar_lea.smem %s0, 43
  %s87 = sld [smem:[%s86]]
  %88 = xla_tuple %s81, %s83, %s85, %s87
  %s89 = sld [smem:[#allocation0]]
  $region221: #{model_forward.1} parent=0
    _
  %s91 = ssub.s32 1, %s89
  %s92 = scalar_select 0, %s91, %s89
  $region1: #{model_forward.1} parent=0
    #allocation2 [shape = 'u8[512]{0}', space=smem, size = 0x200, scoped, tag = 'input window, operand 0, single buffered']
    #allocation3 [shape = 's32[2]{0}', space=sflag, size = 0x8, scoped, tag = 'scoped memory for model_forward.1']
    #allocation4 [shape = 's32[2]{0}', space=sflag, size = 0x8, scoped, tag = 'scoped memory for model_forward.1']
    #allocation5 [shape = 'u8[16384]{0}', space=vmem, size = 0x4000, scoped, tag = 'output window, operand 0']
    #allocation6 [shape = 'u8[8192]{0}', space=vmem, size = 0x2000, scoped, tag = 'output window, operand 1']
    #allocation7 [shape = 's32[2]{0}', space=sflag, size = 0x8, scoped, tag = 'scoped memory for model_forward.1']
    #allocation8 [shape = 'u8[4096]{0}', space=vmem, size = 0x1000, scoped, tag = 'output window, operand 2']
    #allocation9 [shape = 'u8[8192]{0}', space=vmem, size = 0x2000, scoped, tag = 'output window, operand 3']
    #allocation10 [shape = 's32[2]{0}', space=sflag, size = 0x8, scoped, tag = 'scoped memory for model_forward.1']
    %93 = vsyncpa [#allocation4], 0
    %94 = vsyncpa [#allocation3], 0
    %s95 = scalar_lea.sflag [#allocation3], 1
    %96 = vsyncpa %s95, 0
    %97 = vsyncpa [#allocation7], 0
    %s98 = scalar_lea.sflag [#allocation7], 1
    %99 = vsyncpa %s98, 0
    %100 = vsyncpa [#allocation10], 0
    %s101 = scalar_lea.sflag [#allocation10], 1
    %102 = vsyncpa %s101, 0
    loop: start=0, step=1, limit=4
    $region2: #{model_forward.1} parent=1 // loop_pre_header
      _
    $region3: #{model_forward.1} parent=1 // loop_header
      %s104 = sphi 0, %s108
      %p105 = scmp.ge.s32.totalorder %s104, 4
      %s112 = sphi 0, %s112
      %s114 = sphi 0, %s112
      %s115 = sphi 0, %s114
      %s129 = sphi 0, %s115
      %s135 = sphi 0, %s137
      %s138 = sphi 0, %s135
      %s139 = sphi 0, %s138
      %s155 = sphi 0, %s139
      %s161 = sphi 0, %s163
      %s164 = sphi 0, %s161
      %s165 = sphi 0, %s164
      %s181 = sphi 0, %s165
      %s185 = sphi 0, %s185
      %s187 = sphi 0, %s185
      %s188 = sphi 0, %s187
      %s202 = sphi 0, %s188
      %s206 = sphi 0, %s206
      %s208 = sphi 0, %s206
      %s209 = sphi 0, %s208
      %s223 = sphi 0, %s209
      %s227 = sphi 0, %s227
      %s229 = sphi 0, %s227
      %s230 = sphi 0, %s229
      %s244 = sphi 0, %s230
      %s248 = sphi 0, %s248
      %s250 = sphi 0, %s248
      %s251 = sphi 0, %s250
      %s265 = sphi 0, %s251
      %s269 = sphi 0, %s269
      %s271 = sphi 0, %s269
      %s272 = sphi 0, %s271
      %s286 = sphi 0, %s272
      %s290 = sphi 0, %s290
      %s292 = sphi 0, %s290
      %s293 = sphi 0, %s292
      %s307 = sphi 0, %s293
      %s311 = sphi 0, %s311
      %s313 = sphi 0, %s311
      %s314 = sphi 0, %s313
      %s328 = sphi 0, %s314
      %s332 = sphi 0, %s332
      %s334 = sphi 0, %s332
      %s335 = sphi 0, %s334
      %s349 = sphi 0, %s335
      %s353 = sphi 0, %s353
      %s355 = sphi 0, %s353
      %s356 = sphi 0, %s355
      %s370 = sphi 0, %s356
      %s374 = sphi 0, %s374
      %s376 = sphi 0, %s374
      %s377 = sphi 0, %s376
      %s391 = sphi 0, %s377
      %s395 = sphi 0, %s395
      %s397 = sphi 0, %s395
      %s398 = sphi 0, %s397
      %s412 = sphi 0, %s398
      %s416 = sphi 0, %s416
      %s418 = sphi 0, %s416
      %s419 = sphi 0, %s418
      %s433 = sphi 0, %s419
      %s437 = sphi 0, %s437
      %s439 = sphi 0, %s437
      %s440 = sphi 0, %s439
      %s454 = sphi 0, %s440
      %s458 = sphi 0, %s458
      %s460 = sphi 0, %s458
      %s461 = sphi 0, %s460
      %s475 = sphi 0, %s461
      %s479 = sphi 0, %s479
      %s481 = sphi 0, %s479
      %s482 = sphi 0, %s481
      %s496 = sphi 0, %s482
      %s500 = sphi 0, %s500
      %s502 = sphi 0, %s500
      %s503 = sphi 0, %s502
      %s517 = sphi 0, %s503
      %s521 = sphi 0, %s521
      %s523 = sphi 0, %s521
      %s524 = sphi 0, %s523
      %s538 = sphi 0, %s524
      %s542 = sphi 0, %s542
      %s544 = sphi 0, %s542
      %s545 = sphi 0, %s544
      %s559 = sphi 0, %s545
      %s563 = sphi 0, %s563
      %s565 = sphi 0, %s563
      %s566 = sphi 0, %s565
      %s580 = sphi 0, %s566
      %s584 = sphi 0, %s584
      %s586 = sphi 0, %s584
      %s587 = sphi 0, %s586
      %s601 = sphi 0, %s587
      %s605 = sphi 0, %s605
      %s607 = sphi 0, %s605
      %s608 = sphi 0, %s607
      %s622 = sphi 0, %s608
      %s626 = sphi 0, %s626
      %s628 = sphi 0, %s626
      %s629 = sphi 0, %s628
      %s643 = sphi 0, %s629
      %s647 = sphi 0, %s647
      %s649 = sphi 0, %s647
      %s650 = sphi 0, %s649
      %s664 = sphi 0, %s650
      %s668 = sphi 0, %s668
      %s670 = sphi 0, %s668
      %s671 = sphi 0, %s670
      %s685 = sphi 0, %s671
      %s689 = sphi 0, %s689
      %s691 = sphi 0, %s689
      %s692 = sphi 0, %s691
      %s706 = sphi 0, %s692
      %s710 = sphi 0, %s710
      %s712 = sphi 0, %s710
      %s713 = sphi 0, %s712
      %s727 = sphi 0, %s713
      %s731 = sphi 0, %s731
      %s733 = sphi 0, %s731
      %s734 = sphi 0, %s733
      %s748 = sphi 0, %s734
      %s752 = sphi 0, %s752
      %s754 = sphi 0, %s752
      %s755 = sphi 0, %s754
      %s769 = sphi 0, %s755
      %s773 = sphi 0, %s773
      %s775 = sphi 0, %s773
      %s776 = sphi 0, %s775
      %s790 = sphi 0, %s776
      %s794 = sphi 0, %s794
      %s796 = sphi 0, %s794
      %s797 = sphi 0, %s796
      %s811 = sphi 0, %s797
      %s815 = sphi 0, %s815
      %s817 = sphi 0, %s815
      %s818 = sphi 0, %s817
      %s832 = sphi 0, %s818
      %s836 = sphi 0, %s836
      %s838 = sphi 0, %s836
      %s839 = sphi 0, %s838
      %s853 = sphi 0, %s839
      %s857 = sphi 0, %s857
      %s859 = sphi 0, %s857
      %s860 = sphi 0, %s859
      %s874 = sphi 0, %s860
      %s878 = sphi 0, %s878
      %s880 = sphi 0, %s878
      %s881 = sphi 0, %s880
      %s895 = sphi 0, %s881
      %s899 = sphi 0, %s899
      %s901 = sphi 0, %s899
      %s902 = sphi 0, %s901
      %s916 = sphi 0, %s902
      %s920 = sphi 0, %s920
      %s922 = sphi 0, %s920
      %s923 = sphi 0, %s922
      %s937 = sphi 0, %s923
      %s941 = sphi 0, %s941
      %s943 = sphi 0, %s941
      %s944 = sphi 0, %s943
      %s958 = sphi 0, %s944
      %s964 = sphi 0, %s966
      %s967 = sphi 0, %s964
      %s968 = sphi 0, %s967
      %s984 = sphi 0, %s968
      %s990 = sphi 0, %s992
      %s993 = sphi 0, %s990
      %s994 = sphi 0, %s993
      %s1010 = sphi 0, %s994
      %s1016 = sphi 0, %s1018
      %s1019 = sphi 0, %s1016
      %s1020 = sphi 0, %s1019
      %s1036 = sphi 0, %s1020
      %s1042 = sphi 0, %s1044
      %s1045 = sphi 0, %s1042
      %s1046 = sphi 0, %s1045
      %s1062 = sphi 0, %s1046
    $region4: #{model_forward.1} parent=1 // loop_header_branch
      %107 = sbr.rel (%p105) target = $region8
    $region5: #{model_forward.1} parent=1 // loop_body
      %s109 = ssub.s32 %s104, 1
      %s110 = ssub.s32 %s104, 2
      %s111 = sadd.s32 %s104, 1
      %s113 = sadd.s32 %s112, 1
      %p116 = scmp.eq.s32.totalorder %s104, 1
      %p117 = scmp.ne.s32.totalorder %s112, %s114
      %p118 = scmp.eq.s32.totalorder %s104, 0
      %p119 = por %p117, %p118
      %p120 = scmp.ne.s32.totalorder %s112, %s114
      %p121 = scmp.eq.s32.totalorder %s109, 1
      %p122 = por %p120, %p121
      %p123 = scmp.ne.s32.totalorder %s114, %s115
      %p124 = scmp.eq.s32.totalorder %s109, 0
      %p125 = por %p123, %p124
      %p126 = scmp.ne.s32.totalorder %s114, %s115
      %p127 = scmp.eq.s32.totalorder %s110, 1
      %p128 = por %p126, %p127
      %p130 = scmp.ne.s32.totalorder %s115, %s129
      %p131 = scmp.eq.s32.totalorder %s110, 0
      %p132 = por %p130, %p131
      %s133 = ssub.s32 %s104, %s111
      %p134 = scmp.eq.s32.totalorder %s133, 0
      %s136 = sadd.s32 %s135, 1
      %s137 = scalar_select %p134, %s135, %s136
      %p140 = pneg %p134
      %p141 = scmp.eq.s32.totalorder %s104, 1
      %p142 = por %p140, %p141
      %p143 = scmp.ne.s32.totalorder %s135, %s138
      %p144 = scmp.eq.s32.totalorder %s104, 0
      %p145 = por %p143, %p144
      %p146 = scmp.ne.s32.totalorder %s135, %s138
      %p147 = scmp.eq.s32.totalorder %s109, 1
      %p148 = por %p146, %p147
      %p149 = scmp.ne.s32.totalorder %s138, %s139
      %p150 = scmp.eq.s32.totalorder %s109, 0
      %p151 = por %p149, %p150
      %p152 = scmp.ne.s32.totalorder %s138, %s139
      %p153 = scmp.eq.s32.totalorder %s110, 1
      %p154 = por %p152, %p153
      %p156 = scmp.ne.s32.totalorder %s139, %s155
      %p157 = scmp.eq.s32.totalorder %s110, 0
      %p158 = por %p156, %p157
      %s159 = ssub.s32 %s104, %s111
      %p160 = scmp.eq.s32.totalorder %s159, 0
      %s162 = sadd.s32 %s161, 1
      %s163 = scalar_select %p160, %s161, %s162
      %p166 = pneg %p160
      %p167 = scmp.eq.s32.totalorder %s104, 1
      %p168 = por %p166, %p167
      %p169 = scmp.ne.s32.totalorder %s161, %s164
      %p170 = scmp.eq.s32.totalorder %s104, 0
      %p171 = por %p169, %p170
      %p172 = scmp.ne.s32.totalorder %s161, %s164
      %p173 = scmp.eq.s32.totalorder %s109, 1
      %p174 = por %p172, %p173
      %p175 = scmp.ne.s32.totalorder %s164, %s165
      %p176 = scmp.eq.s32.totalorder %s109, 0
      %p177 = por %p175, %p176
      %p178 = scmp.ne.s32.totalorder %s164, %s165
      %p179 = scmp.eq.s32.totalorder %s110, 1
      %p180 = por %p178, %p179
      %p182 = scmp.ne.s32.totalorder %s165, %s181
      %p183 = scmp.eq.s32.totalorder %s110, 0
      %p184 = por %p182, %p183
      %s186 = sadd.s32 %s185, 1
      %p189 = scmp.eq.s32.totalorder %s104, 1
      %p190 = scmp.ne.s32.totalorder %s185, %s187
      %p191 = scmp.eq.s32.totalorder %s104, 0
      %p192 = por %p190, %p191
      %p193 = scmp.ne.s32.totalorder %s185, %s187
      %p194 = scmp.eq.s32.totalorder %s109, 1
      %p195 = por %p193, %p194
      %p196 = scmp.ne.s32.totalorder %s187, %s188
      %p197 = scmp.eq.s32.totalorder %s109, 0
      %p198 = por %p196, %p197
      %p199 = scmp.ne.s32.totalorder %s187, %s188
      %p200 = scmp.eq.s32.totalorder %s110, 1
      %p201 = por %p199, %p200
      %p203 = scmp.ne.s32.totalorder %s188, %s202
      %p204 = scmp.eq.s32.totalorder %s110, 0
      %p205 = por %p203, %p204
      %s207 = sadd.s32 %s206, 1
      %p210 = scmp.eq.s32.totalorder %s104, 1
      %p211 = scmp.ne.s32.totalorder %s206, %s208
      %p212 = scmp.eq.s32.totalorder %s104, 0
      %p213 = por %p211, %p212
      %p214 = scmp.ne.s32.totalorder %s206, %s208
      %p215 = scmp.eq.s32.totalorder %s109, 1
      %p216 = por %p214, %p215
      %p217 = scmp.ne.s32.totalorder %s208, %s209
      %p218 = scmp.eq.s32.totalorder %s109, 0
      %p219 = por %p217, %p218
      %p220 = scmp.ne.s32.totalorder %s208, %s209
      %p221 = scmp.eq.s32.totalorder %s110, 1
      %p222 = por %p220, %p221
      %p224 = scmp.ne.s32.totalorder %s209, %s223
      %p225 = scmp.eq.s32.totalorder %s110, 0
      %p226 = por %p224, %p225
      %s228 = sadd.s32 %s227, 1
      %p231 = scmp.eq.s32.totalorder %s104, 1
      %p232 = scmp.ne.s32.totalorder %s227, %s229
      %p233 = scmp.eq.s32.totalorder %s104, 0
      %p234 = por %p232, %p233
      %p235 = scmp.ne.s32.totalorder %s227, %s229
      %p236 = scmp.eq.s32.totalorder %s109, 1
      %p237 = por %p235, %p236
      %p238 = scmp.ne.s32.totalorder %s229, %s230
      %p239 = scmp.eq.s32.totalorder %s109, 0
      %p240 = por %p238, %p239
      %p241 = scmp.ne.s32.totalorder %s229, %s230
      %p242 = scmp.eq.s32.totalorder %s110, 1
      %p243 = por %p241, %p242
      %p245 = scmp.ne.s32.totalorder %s230, %s244
      %p246 = scmp.eq.s32.totalorder %s110, 0
      %p247 = por %p245, %p246
      %s249 = sadd.s32 %s248, 1
      %p252 = scmp.eq.s32.totalorder %s104, 1
      %p253 = scmp.ne.s32.totalorder %s248, %s250
      %p254 = scmp.eq.s32.totalorder %s104, 0
      %p255 = por %p253, %p254
      %p256 = scmp.ne.s32.totalorder %s248, %s250
      %p257 = scmp.eq.s32.totalorder %s109, 1
      %p258 = por %p256, %p257
      %p259 = scmp.ne.s32.totalorder %s250, %s251
      %p260 = scmp.eq.s32.totalorder %s109, 0
      %p261 = por %p259, %p260
      %p262 = scmp.ne.s32.totalorder %s250, %s251
      %p263 = scmp.eq.s32.totalorder %s110, 1
      %p264 = por %p262, %p263
      %p266 = scmp.ne.s32.totalorder %s251, %s265
      %p267 = scmp.eq.s32.totalorder %s110, 0
      %p268 = por %p266, %p267
      %s270 = sadd.s32 %s269, 1
      %p273 = scmp.eq.s32.totalorder %s104, 1
      %p274 = scmp.ne.s32.totalorder %s269, %s271
      %p275 = scmp.eq.s32.totalorder %s104, 0
      %p276 = por %p274, %p275
      %p277 = scmp.ne.s32.totalorder %s269, %s271
      %p278 = scmp.eq.s32.totalorder %s109, 1
      %p279 = por %p277, %p278
      %p280 = scmp.ne.s32.totalorder %s271, %s272
      %p281 = scmp.eq.s32.totalorder %s109, 0
      %p282 = por %p280, %p281
      %p283 = scmp.ne.s32.totalorder %s271, %s272
      %p284 = scmp.eq.s32.totalorder %s110, 1
      %p285 = por %p283, %p284
      %p287 = scmp.ne.s32.totalorder %s272, %s286
      %p288 = scmp.eq.s32.totalorder %s110, 0
      %p289 = por %p287, %p288
      %s291 = sadd.s32 %s290, 1
      %p294 = scmp.eq.s32.totalorder %s104, 1
      %p295 = scmp.ne.s32.totalorder %s290, %s292
      %p296 = scmp.eq.s32.totalorder %s104, 0
      %p297 = por %p295, %p296
      %p298 = scmp.ne.s32.totalorder %s290, %s292
      %p299 = scmp.eq.s32.totalorder %s109, 1
      %p300 = por %p298, %p299
      %p301 = scmp.ne.s32.totalorder %s292, %s293
      %p302 = scmp.eq.s32.totalorder %s109, 0
      %p303 = por %p301, %p302
      %p304 = scmp.ne.s32.totalorder %s292, %s293
      %p305 = scmp.eq.s32.totalorder %s110, 1
      %p306 = por %p304, %p305
      %p308 = scmp.ne.s32.totalorder %s293, %s307
      %p309 = scmp.eq.s32.totalorder %s110, 0
      %p310 = por %p308, %p309
      %s312 = sadd.s32 %s311, 1
      %p315 = scmp.eq.s32.totalorder %s104, 1
      %p316 = scmp.ne.s32.totalorder %s311, %s313
      %p317 = scmp.eq.s32.totalorder %s104, 0
      %p318 = por %p316, %p317
      %p319 = scmp.ne.s32.totalorder %s311, %s313
      %p320 = scmp.eq.s32.totalorder %s109, 1
      %p321 = por %p319, %p320
      %p322 = scmp.ne.s32.totalorder %s313, %s314
      %p323 = scmp.eq.s32.totalorder %s109, 0
      %p324 = por %p322, %p323
      %p325 = scmp.ne.s32.totalorder %s313, %s314
      %p326 = scmp.eq.s32.totalorder %s110, 1
      %p327 = por %p325, %p326
      %p329 = scmp.ne.s32.totalorder %s314, %s328
      %p330 = scmp.eq.s32.totalorder %s110, 0
      %p331 = por %p329, %p330
      %s333 = sadd.s32 %s332, 1
      %p336 = scmp.eq.s32.totalorder %s104, 1
      %p337 = scmp.ne.s32.totalorder %s332, %s334
      %p338 = scmp.eq.s32.totalorder %s104, 0
      %p339 = por %p337, %p338
      %p340 = scmp.ne.s32.totalorder %s332, %s334
      %p341 = scmp.eq.s32.totalorder %s109, 1
      %p342 = por %p340, %p341
      %p343 = scmp.ne.s32.totalorder %s334, %s335
      %p344 = scmp.eq.s32.totalorder %s109, 0
      %p345 = por %p343, %p344
      %p346 = scmp.ne.s32.totalorder %s334, %s335
      %p347 = scmp.eq.s32.totalorder %s110, 1
      %p348 = por %p346, %p347
      %p350 = scmp.ne.s32.totalorder %s335, %s349
      %p351 = scmp.eq.s32.totalorder %s110, 0
      %p352 = por %p350, %p351
      %s354 = sadd.s32 %s353, 1
      %p357 = scmp.eq.s32.totalorder %s104, 1
      %p358 = scmp.ne.s32.totalorder %s353, %s355
      %p359 = scmp.eq.s32.totalorder %s104, 0
      %p360 = por %p358, %p359
      %p361 = scmp.ne.s32.totalorder %s353, %s355
      %p362 = scmp.eq.s32.totalorder %s109, 1
      %p363 = por %p361, %p362
      %p364 = scmp.ne.s32.totalorder %s355, %s356
      %p365 = scmp.eq.s32.totalorder %s109, 0
      %p366 = por %p364, %p365
      %p367 = scmp.ne.s32.totalorder %s355, %s356
      %p368 = scmp.eq.s32.totalorder %s110, 1
      %p369 = por %p367, %p368
      %p371 = scmp.ne.s32.totalorder %s356, %s370
      %p372 = scmp.eq.s32.totalorder %s110, 0
      %p373 = por %p371, %p372
      %s375 = sadd.s32 %s374, 1
      %p378 = scmp.eq.s32.totalorder %s104, 1
      %p379 = scmp.ne.s32.totalorder %s374, %s376
      %p380 = scmp.eq.s32.totalorder %s104, 0
      %p381 = por %p379, %p380
      %p382 = scmp.ne.s32.totalorder %s374, %s376
      %p383 = scmp.eq.s32.totalorder %s109, 1
      %p384 = por %p382, %p383
      %p385 = scmp.ne.s32.totalorder %s376, %s377
      %p386 = scmp.eq.s32.totalorder %s109, 0
      %p387 = por %p385, %p386
      %p388 = scmp.ne.s32.totalorder %s376, %s377
      %p389 = scmp.eq.s32.totalorder %s110, 1
      %p390 = por %p388, %p389
      %p392 = scmp.ne.s32.totalorder %s377, %s391
      %p393 = scmp.eq.s32.totalorder %s110, 0
      %p394 = por %p392, %p393
      %s396 = sadd.s32 %s395, 1
      %p399 = scmp.eq.s32.totalorder %s104, 1
      %p400 = scmp.ne.s32.totalorder %s395, %s397
      %p401 = scmp.eq.s32.totalorder %s104, 0
      %p402 = por %p400, %p401
      %p403 = scmp.ne.s32.totalorder %s395, %s397
      %p404 = scmp.eq.s32.totalorder %s109, 1
      %p405 = por %p403, %p404
      %p406 = scmp.ne.s32.totalorder %s397, %s398
      %p407 = scmp.eq.s32.totalorder %s109, 0
      %p408 = por %p406, %p407
      %p409 = scmp.ne.s32.totalorder %s397, %s398
      %p410 = scmp.eq.s32.totalorder %s110, 1
      %p411 = por %p409, %p410
      %p413 = scmp.ne.s32.totalorder %s398, %s412
      %p414 = scmp.eq.s32.totalorder %s110, 0
      %p415 = por %p413, %p414
      %s417 = sadd.s32 %s416, 1
      %p420 = scmp.eq.s32.totalorder %s104, 1
      %p421 = scmp.ne.s32.totalorder %s416, %s418
      %p422 = scmp.eq.s32.totalorder %s104, 0
      %p423 = por %p421, %p422
      %p424 = scmp.ne.s32.totalorder %s416, %s418
      %p425 = scmp.eq.s32.totalorder %s109, 1
      %p426 = por %p424, %p425
      %p427 = scmp.ne.s32.totalorder %s418, %s419
      %p428 = scmp.eq.s32.totalorder %s109, 0
      %p429 = por %p427, %p428
      %p430 = scmp.ne.s32.totalorder %s418, %s419
      %p431 = scmp.eq.s32.totalorder %s110, 1
      %p432 = por %p430, %p431
      %p434 = scmp.ne.s32.totalorder %s419, %s433
      %p435 = scmp.eq.s32.totalorder %s110, 0
      %p436 = por %p434, %p435
      %s438 = sadd.s32 %s437, 1
      %p441 = scmp.eq.s32.totalorder %s104, 1
      %p442 = scmp.ne.s32.totalorder %s437, %s439
      %p443 = scmp.eq.s32.totalorder %s104, 0
      %p444 = por %p442, %p443
      %p445 = scmp.ne.s32.totalorder %s437, %s439
      %p446 = scmp.eq.s32.totalorder %s109, 1
      %p447 = por %p445, %p446
      %p448 = scmp.ne.s32.totalorder %s439, %s440
      %p449 = scmp.eq.s32.totalorder %s109, 0
      %p450 = por %p448, %p449
      %p451 = scmp.ne.s32.totalorder %s439, %s440
      %p452 = scmp.eq.s32.totalorder %s110, 1
      %p453 = por %p451, %p452
      %p455 = scmp.ne.s32.totalorder %s440, %s454
      %p456 = scmp.eq.s32.totalorder %s110, 0
      %p457 = por %p455, %p456
      %s459 = sadd.s32 %s458, 1
      %p462 = scmp.eq.s32.totalorder %s104, 1
      %p463 = scmp.ne.s32.totalorder %s458, %s460
      %p464 = scmp.eq.s32.totalorder %s104, 0
      %p465 = por %p463, %p464
      %p466 = scmp.ne.s32.totalorder %s458, %s460
      %p467 = scmp.eq.s32.totalorder %s109, 1
      %p468 = por %p466, %p467
      %p469 = scmp.ne.s32.totalorder %s460, %s461
      %p470 = scmp.eq.s32.totalorder %s109, 0
      %p471 = por %p469, %p470
      %p472 = scmp.ne.s32.totalorder %s460, %s461
      %p473 = scmp.eq.s32.totalorder %s110, 1
      %p474 = por %p472, %p473
      %p476 = scmp.ne.s32.totalorder %s461, %s475
      %p477 = scmp.eq.s32.totalorder %s110, 0
      %p478 = por %p476, %p477
      %s480 = sadd.s32 %s479, 1
      %p483 = scmp.eq.s32.totalorder %s104, 1
      %p484 = scmp.ne.s32.totalorder %s479, %s481
      %p485 = scmp.eq.s32.totalorder %s104, 0
      %p486 = por %p484, %p485
      %p487 = scmp.ne.s32.totalorder %s479, %s481
      %p488 = scmp.eq.s32.totalorder %s109, 1
      %p489 = por %p487, %p488
      %p490 = scmp.ne.s32.totalorder %s481, %s482
      %p491 = scmp.eq.s32.totalorder %s109, 0
      %p492 = por %p490, %p491
      %p493 = scmp.ne.s32.totalorder %s481, %s482
      %p494 = scmp.eq.s32.totalorder %s110, 1
      %p495 = por %p493, %p494
      %p497 = scmp.ne.s32.totalorder %s482, %s496
      %p498 = scmp.eq.s32.totalorder %s110, 0
      %p499 = por %p497, %p498
      %s501 = sadd.s32 %s500, 1
      %p504 = scmp.eq.s32.totalorder %s104, 1
      %p505 = scmp.ne.s32.totalorder %s500, %s502
      %p506 = scmp.eq.s32.totalorder %s104, 0
      %p507 = por %p505, %p506
      %p508 = scmp.ne.s32.totalorder %s500, %s502
      %p509 = scmp.eq.s32.totalorder %s109, 1
      %p510 = por %p508, %p509
      %p511 = scmp.ne.s32.totalorder %s502, %s503
      %p512 = scmp.eq.s32.totalorder %s109, 0
      %p513 = por %p511, %p512
      %p514 = scmp.ne.s32.totalorder %s502, %s503
      %p515 = scmp.eq.s32.totalorder %s110, 1
      %p516 = por %p514, %p515
      %p518 = scmp.ne.s32.totalorder %s503, %s517
      %p519 = scmp.eq.s32.totalorder %s110, 0
      %p520 = por %p518, %p519
      %s522 = sadd.s32 %s521, 1
      %p525 = scmp.eq.s32.totalorder %s104, 1
      %p526 = scmp.ne.s32.totalorder %s521, %s523
      %p527 = scmp.eq.s32.totalorder %s104, 0
      %p528 = por %p526, %p527
      %p529 = scmp.ne.s32.totalorder %s521, %s523
      %p530 = scmp.eq.s32.totalorder %s109, 1
      %p531 = por %p529, %p530
      %p532 = scmp.ne.s32.totalorder %s523, %s524
      %p533 = scmp.eq.s32.totalorder %s109, 0
      %p534 = por %p532, %p533
      %p535 = scmp.ne.s32.totalorder %s523, %s524
      %p536 = scmp.eq.s32.totalorder %s110, 1
      %p537 = por %p535, %p536
      %p539 = scmp.ne.s32.totalorder %s524, %s538
      %p540 = scmp.eq.s32.totalorder %s110, 0
      %p541 = por %p539, %p540
      %s543 = sadd.s32 %s542, 1
      %p546 = scmp.eq.s32.totalorder %s104, 1
      %p547 = scmp.ne.s32.totalorder %s542, %s544
      %p548 = scmp.eq.s32.totalorder %s104, 0
      %p549 = por %p547, %p548
      %p550 = scmp.ne.s32.totalorder %s542, %s544
      %p551 = scmp.eq.s32.totalorder %s109, 1
      %p552 = por %p550, %p551
      %p553 = scmp.ne.s32.totalorder %s544, %s545
      %p554 = scmp.eq.s32.totalorder %s109, 0
      %p555 = por %p553, %p554
      %p556 = scmp.ne.s32.totalorder %s544, %s545
      %p557 = scmp.eq.s32.totalorder %s110, 1
      %p558 = por %p556, %p557
      %p560 = scmp.ne.s32.totalorder %s545, %s559
      %p561 = scmp.eq.s32.totalorder %s110, 0
      %p562 = por %p560, %p561
      %s564 = sadd.s32 %s563, 1
      %p567 = scmp.eq.s32.totalorder %s104, 1
      %p568 = scmp.ne.s32.totalorder %s563, %s565
      %p569 = scmp.eq.s32.totalorder %s104, 0
      %p570 = por %p568, %p569
      %p571 = scmp.ne.s32.totalorder %s563, %s565
      %p572 = scmp.eq.s32.totalorder %s109, 1
      %p573 = por %p571, %p572
      %p574 = scmp.ne.s32.totalorder %s565, %s566
      %p575 = scmp.eq.s32.totalorder %s109, 0
      %p576 = por %p574, %p575
      %p577 = scmp.ne.s32.totalorder %s565, %s566
      %p578 = scmp.eq.s32.totalorder %s110, 1
      %p579 = por %p577, %p578
      %p581 = scmp.ne.s32.totalorder %s566, %s580
      %p582 = scmp.eq.s32.totalorder %s110, 0
      %p583 = por %p581, %p582
      %s585 = sadd.s32 %s584, 1
      %p588 = scmp.eq.s32.totalorder %s104, 1
      %p589 = scmp.ne.s32.totalorder %s584, %s586
      %p590 = scmp.eq.s32.totalorder %s104, 0
      %p591 = por %p589, %p590
      %p592 = scmp.ne.s32.totalorder %s584, %s586
      %p593 = scmp.eq.s32.totalorder %s109, 1
      %p594 = por %p592, %p593
      %p595 = scmp.ne.s32.totalorder %s586, %s587
      %p596 = scmp.eq.s32.totalorder %s109, 0
      %p597 = por %p595, %p596
      %p598 = scmp.ne.s32.totalorder %s586, %s587
      %p599 = scmp.eq.s32.totalorder %s110, 1
      %p600 = por %p598, %p599
      %p602 = scmp.ne.s32.totalorder %s587, %s601
      %p603 = scmp.eq.s32.totalorder %s110, 0
      %p604 = por %p602, %p603
      %s606 = sadd.s32 %s605, 1
      %p609 = scmp.eq.s32.totalorder %s104, 1
      %p610 = scmp.ne.s32.totalorder %s605, %s607
      %p611 = scmp.eq.s32.totalorder %s104, 0
      %p612 = por %p610, %p611
      %p613 = scmp.ne.s32.totalorder %s605, %s607
      %p614 = scmp.eq.s32.totalorder %s109, 1
      %p615 = por %p613, %p614
      %p616 = scmp.ne.s32.totalorder %s607, %s608
      %p617 = scmp.eq.s32.totalorder %s109, 0
      %p618 = por %p616, %p617
      %p619 = scmp.ne.s32.totalorder %s607, %s608
      %p620 = scmp.eq.s32.totalorder %s110, 1
      %p621 = por %p619, %p620
      %p623 = scmp.ne.s32.totalorder %s608, %s622
      %p624 = scmp.eq.s32.totalorder %s110, 0
      %p625 = por %p623, %p624
      %s627 = sadd.s32 %s626, 1
      %p630 = scmp.eq.s32.totalorder %s104, 1
      %p631 = scmp.ne.s32.totalorder %s626, %s628
      %p632 = scmp.eq.s32.totalorder %s104, 0
      %p633 = por %p631, %p632
      %p634 = scmp.ne.s32.totalorder %s626, %s628
      %p635 = scmp.eq.s32.totalorder %s109, 1
      %p636 = por %p634, %p635
      %p637 = scmp.ne.s32.totalorder %s628, %s629
      %p638 = scmp.eq.s32.totalorder %s109, 0
      %p639 = por %p637, %p638
      %p640 = scmp.ne.s32.totalorder %s628, %s629
      %p641 = scmp.eq.s32.totalorder %s110, 1
      %p642 = por %p640, %p641
      %p644 = scmp.ne.s32.totalorder %s629, %s643
      %p645 = scmp.eq.s32.totalorder %s110, 0
      %p646 = por %p644, %p645
      %s648 = sadd.s32 %s647, 1
      %p651 = scmp.eq.s32.totalorder %s104, 1
      %p652 = scmp.ne.s32.totalorder %s647, %s649
      %p653 = scmp.eq.s32.totalorder %s104, 0
      %p654 = por %p652, %p653
      %p655 = scmp.ne.s32.totalorder %s647, %s649
      %p656 = scmp.eq.s32.totalorder %s109, 1
      %p657 = por %p655, %p656
      %p658 = scmp.ne.s32.totalorder %s649, %s650
      %p659 = scmp.eq.s32.totalorder %s109, 0
      %p660 = por %p658, %p659
      %p661 = scmp.ne.s32.totalorder %s649, %s650
      %p662 = scmp.eq.s32.totalorder %s110, 1
      %p663 = por %p661, %p662
      %p665 = scmp.ne.s32.totalorder %s650, %s664
      %p666 = scmp.eq.s32.totalorder %s110, 0
      %p667 = por %p665, %p666
      %s669 = sadd.s32 %s668, 1
      %p672 = scmp.eq.s32.totalorder %s104, 1
      %p673 = scmp.ne.s32.totalorder %s668, %s670
      %p674 = scmp.eq.s32.totalorder %s104, 0
      %p675 = por %p673, %p674
      %p676 = scmp.ne.s32.totalorder %s668, %s670
      %p677 = scmp.eq.s32.totalorder %s109, 1
      %p678 = por %p676, %p677
      %p679 = scmp.ne.s32.totalorder %s670, %s671
      %p680 = scmp.eq.s32.totalorder %s109, 0
      %p681 = por %p679, %p680
      %p682 = scmp.ne.s32.totalorder %s670, %s671
      %p683 = scmp.eq.s32.totalorder %s110, 1
      %p684 = por %p682, %p683
      %p686 = scmp.ne.s32.totalorder %s671, %s685
      %p687 = scmp.eq.s32.totalorder %s110, 0
      %p688 = por %p686, %p687
      %s690 = sadd.s32 %s689, 1
      %p693 = scmp.eq.s32.totalorder %s104, 1
      %p694 = scmp.ne.s32.totalorder %s689, %s691
      %p695 = scmp.eq.s32.totalorder %s104, 0
      %p696 = por %p694, %p695
      %p697 = scmp.ne.s32.totalorder %s689, %s691
      %p698 = scmp.eq.s32.totalorder %s109, 1
      %p699 = por %p697, %p698
      %p700 = scmp.ne.s32.totalorder %s691, %s692
      %p701 = scmp.eq.s32.totalorder %s109, 0
      %p702 = por %p700, %p701
      %p703 = scmp.ne.s32.totalorder %s691, %s692
      %p704 = scmp.eq.s32.totalorder %s110, 1
      %p705 = por %p703, %p704
      %p707 = scmp.ne.s32.totalorder %s692, %s706
      %p708 = scmp.eq.s32.totalorder %s110, 0
      %p709 = por %p707, %p708
      %s711 = sadd.s32 %s710, 1
      %p714 = scmp.eq.s32.totalorder %s104, 1
      %p715 = scmp.ne.s32.totalorder %s710, %s712
      %p716 = scmp.eq.s32.totalorder %s104, 0
      %p717 = por %p715, %p716
      %p718 = scmp.ne.s32.totalorder %s710, %s712
      %p719 = scmp.eq.s32.totalorder %s109, 1
      %p720 = por %p718, %p719
      %p721 = scmp.ne.s32.totalorder %s712, %s713
      %p722 = scmp.eq.s32.totalorder %s109, 0
      %p723 = por %p721, %p722
      %p724 = scmp.ne.s32.totalorder %s712, %s713
      %p725 = scmp.eq.s32.totalorder %s110, 1
      %p726 = por %p724, %p725
      %p728 = scmp.ne.s32.totalorder %s713, %s727
      %p729 = scmp.eq.s32.totalorder %s110, 0
      %p730 = por %p728, %p729
      %s732 = sadd.s32 %s731, 1
      %p735 = scmp.eq.s32.totalorder %s104, 1
      %p736 = scmp.ne.s32.totalorder %s731, %s733
      %p737 = scmp.eq.s32.totalorder %s104, 0
      %p738 = por %p736, %p737
      %p739 = scmp.ne.s32.totalorder %s731, %s733
      %p740 = scmp.eq.s32.totalorder %s109, 1
      %p741 = por %p739, %p740
      %p742 = scmp.ne.s32.totalorder %s733, %s734
      %p743 = scmp.eq.s32.totalorder %s109, 0
      %p744 = por %p742, %p743
      %p745 = scmp.ne.s32.totalorder %s733, %s734
      %p746 = scmp.eq.s32.totalorder %s110, 1
      %p747 = por %p745, %p746
      %p749 = scmp.ne.s32.totalorder %s734, %s748
      %p750 = scmp.eq.s32.totalorder %s110, 0
      %p751 = por %p749, %p750
      %s753 = sadd.s32 %s752, 1
      %p756 = scmp.eq.s32.totalorder %s104, 1
      %p757 = scmp.ne.s32.totalorder %s752, %s754
      %p758 = scmp.eq.s32.totalorder %s104, 0
      %p759 = por %p757, %p758
      %p760 = scmp.ne.s32.totalorder %s752, %s754
      %p761 = scmp.eq.s32.totalorder %s109, 1
      %p762 = por %p760, %p761
      %p763 = scmp.ne.s32.totalorder %s754, %s755
      %p764 = scmp.eq.s32.totalorder %s109, 0
      %p765 = por %p763, %p764
      %p766 = scmp.ne.s32.totalorder %s754, %s755
      %p767 = scmp.eq.s32.totalorder %s110, 1
      %p768 = por %p766, %p767
      %p770 = scmp.ne.s32.totalorder %s755, %s769
      %p771 = scmp.eq.s32.totalorder %s110, 0
      %p772 = por %p770, %p771
      %s774 = sadd.s32 %s773, 1
      %p777 = scmp.eq.s32.totalorder %s104, 1
      %p778 = scmp.ne.s32.totalorder %s773, %s775
      %p779 = scmp.eq.s32.totalorder %s104, 0
      %p780 = por %p778, %p779
      %p781 = scmp.ne.s32.totalorder %s773, %s775
      %p782 = scmp.eq.s32.totalorder %s109, 1
      %p783 = por %p781, %p782
      %p784 = scmp.ne.s32.totalorder %s775, %s776
      %p785 = scmp.eq.s32.totalorder %s109, 0
      %p786 = por %p784, %p785
      %p787 = scmp.ne.s32.totalorder %s775, %s776
      %p788 = scmp.eq.s32.totalorder %s110, 1
      %p789 = por %p787, %p788
      %p791 = scmp.ne.s32.totalorder %s776, %s790
      %p792 = scmp.eq.s32.totalorder %s110, 0
      %p793 = por %p791, %p792
      %s795 = sadd.s32 %s794, 1
      %p798 = scmp.eq.s32.totalorder %s104, 1
      %p799 = scmp.ne.s32.totalorder %s794, %s796
      %p800 = scmp.eq.s32.totalorder %s104, 0
      %p801 = por %p799, %p800
      %p802 = scmp.ne.s32.totalorder %s794, %s796
      %p803 = scmp.eq.s32.totalorder %s109, 1
      %p804 = por %p802, %p803
      %p805 = scmp.ne.s32.totalorder %s796, %s797
      %p806 = scmp.eq.s32.totalorder %s109, 0
      %p807 = por %p805, %p806
      %p808 = scmp.ne.s32.totalorder %s796, %s797
      %p809 = scmp.eq.s32.totalorder %s110, 1
      %p810 = por %p808, %p809
      %p812 = scmp.ne.s32.totalorder %s797, %s811
      %p813 = scmp.eq.s32.totalorder %s110, 0
      %p814 = por %p812, %p813
      %s816 = sadd.s32 %s815, 1
      %p819 = scmp.eq.s32.totalorder %s104, 1
      %p820 = scmp.ne.s32.totalorder %s815, %s817
      %p821 = scmp.eq.s32.totalorder %s104, 0
      %p822 = por %p820, %p821
      %p823 = scmp.ne.s32.totalorder %s815, %s817
      %p824 = scmp.eq.s32.totalorder %s109, 1
      %p825 = por %p823, %p824
      %p826 = scmp.ne.s32.totalorder %s817, %s818
      %p827 = scmp.eq.s32.totalorder %s109, 0
      %p828 = por %p826, %p827
      %p829 = scmp.ne.s32.totalorder %s817, %s818
      %p830 = scmp.eq.s32.totalorder %s110, 1
      %p831 = por %p829, %p830
      %p833 = scmp.ne.s32.totalorder %s818, %s832
      %p834 = scmp.eq.s32.totalorder %s110, 0
      %p835 = por %p833, %p834
      %s837 = sadd.s32 %s836, 1
      %p840 = scmp.eq.s32.totalorder %s104, 1
      %p841 = scmp.ne.s32.totalorder %s836, %s838
      %p842 = scmp.eq.s32.totalorder %s104, 0
      %p843 = por %p841, %p842
      %p844 = scmp.ne.s32.totalorder %s836, %s838
      %p845 = scmp.eq.s32.totalorder %s109, 1
      %p846 = por %p844, %p845
      %p847 = scmp.ne.s32.totalorder %s838, %s839
      %p848 = scmp.eq.s32.totalorder %s109, 0
      %p849 = por %p847, %p848
      %p850 = scmp.ne.s32.totalorder %s838, %s839
      %p851 = scmp.eq.s32.totalorder %s110, 1
      %p852 = por %p850, %p851
      %p854 = scmp.ne.s32.totalorder %s839, %s853
      %p855 = scmp.eq.s32.totalorder %s110, 0
      %p856 = por %p854, %p855
      %s858 = sadd.s32 %s857, 1
      %p861 = scmp.eq.s32.totalorder %s104, 1
      %p862 = scmp.ne.s32.totalorder %s857, %s859
      %p863 = scmp.eq.s32.totalorder %s104, 0
      %p864 = por %p862, %p863
      %p865 = scmp.ne.s32.totalorder %s857, %s859
      %p866 = scmp.eq.s32.totalorder %s109, 1
      %p867 = por %p865, %p866
      %p868 = scmp.ne.s32.totalorder %s859, %s860
      %p869 = scmp.eq.s32.totalorder %s109, 0
      %p870 = por %p868, %p869
      %p871 = scmp.ne.s32.totalorder %s859, %s860
      %p872 = scmp.eq.s32.totalorder %s110, 1
      %p873 = por %p871, %p872
      %p875 = scmp.ne.s32.totalorder %s860, %s874
      %p876 = scmp.eq.s32.totalorder %s110, 0
      %p877 = por %p875, %p876
      %s879 = sadd.s32 %s878, 1
      %p882 = scmp.eq.s32.totalorder %s104, 1
      %p883 = scmp.ne.s32.totalorder %s878, %s880
      %p884 = scmp.eq.s32.totalorder %s104, 0
      %p885 = por %p883, %p884
      %p886 = scmp.ne.s32.totalorder %s878, %s880
      %p887 = scmp.eq.s32.totalorder %s109, 1
      %p888 = por %p886, %p887
      %p889 = scmp.ne.s32.totalorder %s880, %s881
      %p890 = scmp.eq.s32.totalorder %s109, 0
      %p891 = por %p889, %p890
      %p892 = scmp.ne.s32.totalorder %s880, %s881
      %p893 = scmp.eq.s32.totalorder %s110, 1
      %p894 = por %p892, %p893
      %p896 = scmp.ne.s32.totalorder %s881, %s895
      %p897 = scmp.eq.s32.totalorder %s110, 0
      %p898 = por %p896, %p897
      %s900 = sadd.s32 %s899, 1
      %p903 = scmp.eq.s32.totalorder %s104, 1
      %p904 = scmp.ne.s32.totalorder %s899, %s901
      %p905 = scmp.eq.s32.totalorder %s104, 0
      %p906 = por %p904, %p905
      %p907 = scmp.ne.s32.totalorder %s899, %s901
      %p908 = scmp.eq.s32.totalorder %s109, 1
      %p909 = por %p907, %p908
      %p910 = scmp.ne.s32.totalorder %s901, %s902
      %p911 = scmp.eq.s32.totalorder %s109, 0
      %p912 = por %p910, %p911
      %p913 = scmp.ne.s32.totalorder %s901, %s902
      %p914 = scmp.eq.s32.totalorder %s110, 1
      %p915 = por %p913, %p914
      %p917 = scmp.ne.s32.totalorder %s902, %s916
      %p918 = scmp.eq.s32.totalorder %s110, 0
      %p919 = por %p917, %p918
      %s921 = sadd.s32 %s920, 1
      %p924 = scmp.eq.s32.totalorder %s104, 1
      %p925 = scmp.ne.s32.totalorder %s920, %s922
      %p926 = scmp.eq.s32.totalorder %s104, 0
      %p927 = por %p925, %p926
      %p928 = scmp.ne.s32.totalorder %s920, %s922
      %p929 = scmp.eq.s32.totalorder %s109, 1
      %p930 = por %p928, %p929
      %p931 = scmp.ne.s32.totalorder %s922, %s923
      %p932 = scmp.eq.s32.totalorder %s109, 0
      %p933 = por %p931, %p932
      %p934 = scmp.ne.s32.totalorder %s922, %s923
      %p935 = scmp.eq.s32.totalorder %s110, 1
      %p936 = por %p934, %p935
      %p938 = scmp.ne.s32.totalorder %s923, %s937
      %p939 = scmp.eq.s32.totalorder %s110, 0
      %p940 = por %p938, %p939
      %s942 = sadd.s32 %s941, 1
      %p945 = scmp.eq.s32.totalorder %s104, 1
      %p946 = scmp.ne.s32.totalorder %s941, %s943
      %p947 = scmp.eq.s32.totalorder %s104, 0
      %p948 = por %p946, %p947
      %p949 = scmp.ne.s32.totalorder %s941, %s943
      %p950 = scmp.eq.s32.totalorder %s109, 1
      %p951 = por %p949, %p950
      %p952 = scmp.ne.s32.totalorder %s943, %s944
      %p953 = scmp.eq.s32.totalorder %s109, 0
      %p954 = por %p952, %p953
      %p955 = scmp.ne.s32.totalorder %s943, %s944
      %p956 = scmp.eq.s32.totalorder %s110, 1
      %p957 = por %p955, %p956
      %p959 = scmp.ne.s32.totalorder %s944, %s958
      %p960 = scmp.eq.s32.totalorder %s110, 0
      %p961 = por %p959, %p960
      %s962 = ssub.s32 %s104, %s111
      %p963 = scmp.eq.s32.totalorder %s962, 0
      %s965 = sadd.s32 %s964, 1
      %s966 = scalar_select %p963, %s964, %s965
      %p969 = pneg %p963
      %p970 = scmp.eq.s32.totalorder %s104, 1
      %p971 = por %p969, %p970
      %p972 = scmp.ne.s32.totalorder %s964, %s967
      %p973 = scmp.eq.s32.totalorder %s104, 0
      %p974 = por %p972, %p973
      %p975 = scmp.ne.s32.totalorder %s964, %s967
      %p976 = scmp.eq.s32.totalorder %s109, 1
      %p977 = por %p975, %p976
      %p978 = scmp.ne.s32.totalorder %s967, %s968
      %p979 = scmp.eq.s32.totalorder %s109, 0
      %p980 = por %p978, %p979
      %p981 = scmp.ne.s32.totalorder %s967, %s968
      %p982 = scmp.eq.s32.totalorder %s110, 1
      %p983 = por %p981, %p982
      %p985 = scmp.ne.s32.totalorder %s968, %s984
      %p986 = scmp.eq.s32.totalorder %s110, 0
      %p987 = por %p985, %p986
      %s988 = ssub.s32 %s104, %s111
      %p989 = scmp.eq.s32.totalorder %s988, 0
      %s991 = sadd.s32 %s990, 1
      %s992 = scalar_select %p989, %s990, %s991
      %p995 = pneg %p989
      %p996 = scmp.eq.s32.totalorder %s104, 1
      %p997 = por %p995, %p996
      %p998 = scmp.ne.s32.totalorder %s990, %s993
      %p999 = scmp.eq.s32.totalorder %s104, 0
      %p1000 = por %p998, %p999
      %p1001 = scmp.ne.s32.totalorder %s990, %s993
      %p1002 = scmp.eq.s32.totalorder %s109, 1
      %p1003 = por %p1001, %p1002
      %p1004 = scmp.ne.s32.totalorder %s993, %s994
      %p1005 = scmp.eq.s32.totalorder %s109, 0
      %p1006 = por %p1004, %p1005
      %p1007 = scmp.ne.s32.totalorder %s993, %s994
      %p1008 = scmp.eq.s32.totalorder %s110, 1
      %p1009 = por %p1007, %p1008
      %p1011 = scmp.ne.s32.totalorder %s994, %s1010
      %p1012 = scmp.eq.s32.totalorder %s110, 0
      %p1013 = por %p1011, %p1012
      %s1014 = ssub.s32 %s104, %s111
      %p1015 = scmp.eq.s32.totalorder %s1014, 0
      %s1017 = sadd.s32 %s1016, 1
      %s1018 = scalar_select %p1015, %s1016, %s1017
      %p1021 = pneg %p1015
      %p1022 = scmp.eq.s32.totalorder %s104, 1
      %p1023 = por %p1021, %p1022
      %p1024 = scmp.ne.s32.totalorder %s1016, %s1019
      %p1025 = scmp.eq.s32.totalorder %s104, 0
      %p1026 = por %p1024, %p1025
      %p1027 = scmp.ne.s32.totalorder %s1016, %s1019
      %p1028 = scmp.eq.s32.totalorder %s109, 1
      %p1029 = por %p1027, %p1028
      %p1030 = scmp.ne.s32.totalorder %s1019, %s1020
      %p1031 = scmp.eq.s32.totalorder %s109, 0
      %p1032 = por %p1030, %p1031
      %p1033 = scmp.ne.s32.totalorder %s1019, %s1020
      %p1034 = scmp.eq.s32.totalorder %s110, 1
      %p1035 = por %p1033, %p1034
      %p1037 = scmp.ne.s32.totalorder %s1020, %s1036
      %p1038 = scmp.eq.s32.totalorder %s110, 0
      %p1039 = por %p1037, %p1038
      %s1040 = ssub.s32 %s104, %s111
      %p1041 = scmp.eq.s32.totalorder %s1040, 0
      %s1043 = sadd.s32 %s1042, 1
      %s1044 = scalar_select %p1041, %s1042, %s1043
      %p1047 = pneg %p1041
      %p1048 = scmp.eq.s32.totalorder %s104, 1
      %p1049 = por %p1047, %p1048
      %p1050 = scmp.ne.s32.totalorder %s1042, %s1045
      %p1051 = scmp.eq.s32.totalorder %s104, 0
      %p1052 = por %p1050, %p1051
      %p1053 = scmp.ne.s32.totalorder %s1042, %s1045
      %p1054 = scmp.eq.s32.totalorder %s109, 1
      %p1055 = por %p1053, %p1054
      %p1056 = scmp.ne.s32.totalorder %s1045, %s1046
      %p1057 = scmp.eq.s32.totalorder %s109, 0
      %p1058 = por %p1056, %p1057
      %p1059 = scmp.ne.s32.totalorder %s1045, %s1046
      %p1060 = scmp.eq.s32.totalorder %s110, 1
      %p1061 = por %p1059, %p1060
      %p1063 = scmp.ne.s32.totalorder %s1046, %s1062
      %p1064 = scmp.eq.s32.totalorder %s110, 0
      %p1065 = por %p1063, %p1064
      %p1066 = scmp.le.s32.totalorder 1, %s104
      %p1067 = scmp.lt.s32.totalorder %s104, 3
      %p1068 = pnand %p1066, %p1067
      %p1069 = pneg %p1068
      // Predicated region
      $region9: #{model_forward.1} parent=5 // pred_check
        _
      $region10: #{model_forward.1} parent=5 // pred_check_branch
        %1071 = sbr.rel (%p1068) target = $region12
      $region11: #{model_forward.1} parent=5 // pred_region
        %s1072 = ssub.s32 %s104, 1
        // Predicated region
        $region13: #{model_forward.1} parent=11 // pred_check
          %p1073 = pneg %p125
        $region14: #{model_forward.1} parent=11 // pred_check_branch
          %1075 = sbr.rel (%p1073) target = $region16
        $region15: #{model_forward.1} parent=11 // pred_region
          %1077 = vsyncadd [#allocation4], 0
          %s1079 = sshll.u32 %s1, 4
          %s1080 = int_to_ptr.vmem [resolvable:$true] %s1079
          %1082 = dma.vmem_to_smem %s1080, 16, [#allocation2], [#allocation4]
        $region16: #{model_forward.1} parent=11 // pred_fallthru
          _
        // Predicated region
        $region17: #{model_forward.1} parent=11 // pred_check
          %p1083 = pneg %p198
        $region18: #{model_forward.1} parent=11 // pred_check_branch
          %1085 = sbr.rel (%p1083) target = $region20
        $region19: #{model_forward.1} parent=11 // pred_region
          _
        $region20: #{model_forward.1} parent=11 // pred_fallthru
          _
        // Predicated region
        $region21: #{model_forward.1} parent=11 // pred_check
          %p1086 = pneg %p219
        $region22: #{model_forward.1} parent=11 // pred_check_branch
          %1088 = sbr.rel (%p1086) target = $region24
        $region23: #{model_forward.1} parent=11 // pred_region
          _
        $region24: #{model_forward.1} parent=11 // pred_fallthru
          _
        // Predicated region
        $region25: #{model_forward.1} parent=11 // pred_check
          %p1089 = pneg %p240
        $region26: #{model_forward.1} parent=11 // pred_check_branch
          %1091 = sbr.rel (%p1089) target = $region28
        $region27: #{model_forward.1} parent=11 // pred_region
          _
        $region28: #{model_forward.1} parent=11 // pred_fallthru
          _
        // Predicated region
        $region29: #{model_forward.1} parent=11 // pred_check
          %p1092 = pneg %p261
        $region30: #{model_forward.1} parent=11 // pred_check_branch
          %1094 = sbr.rel (%p1092) target = $region32
        $region31: #{model_forward.1} parent=11 // pred_region
          _
        $region32: #{model_forward.1} parent=11 // pred_fallthru
          _
        // Predicated region
        $region33: #{model_forward.1} parent=11 // pred_check
          %p1095 = pneg %p282
        $region34: #{model_forward.1} parent=11 // pred_check_branch
          %1097 = sbr.rel (%p1095) target = $region36
        $region35: #{model_forward.1} parent=11 // pred_region
          _
        $region36: #{model_forward.1} parent=11 // pred_fallthru
          _
        // Predicated region
        $region37: #{model_forward.1} parent=11 // pred_check
          %p1098 = pneg %p303
        $region38: #{model_forward.1} parent=11 // pred_check_branch
          %1100 = sbr.rel (%p1098) target = $region40
        $region39: #{model_forward.1} parent=11 // pred_region
          _
        $region40: #{model_forward.1} parent=11 // pred_fallthru
          _
        // Predicated region
        $region41: #{model_forward.1} parent=11 // pred_check
          %p1101 = pneg %p324
        $region42: #{model_forward.1} parent=11 // pred_check_branch
          %1103 = sbr.rel (%p1101) target = $region44
        $region43: #{model_forward.1} parent=11 // pred_region
          _
        $region44: #{model_forward.1} parent=11 // pred_fallthru
          _
        // Predicated region
        $region45: #{model_forward.1} parent=11 // pred_check
          %p1104 = pneg %p345
        $region46: #{model_forward.1} parent=11 // pred_check_branch
          %1106 = sbr.rel (%p1104) target = $region48
        $region47: #{model_forward.1} parent=11 // pred_region
          _
        $region48: #{model_forward.1} parent=11 // pred_fallthru
          _
        // Predicated region
        $region49: #{model_forward.1} parent=11 // pred_check
          %p1107 = pneg %p366
        $region50: #{model_forward.1} parent=11 // pred_check_branch
          %1109 = sbr.rel (%p1107) target = $region52
        $region51: #{model_forward.1} parent=11 // pred_region
          _
        $region52: #{model_forward.1} parent=11 // pred_fallthru
          _
        // Predicated region
        $region53: #{model_forward.1} parent=11 // pred_check
          %p1110 = pneg %p387
        $region54: #{model_forward.1} parent=11 // pred_check_branch
          %1112 = sbr.rel (%p1110) target = $region56
        $region55: #{model_forward.1} parent=11 // pred_region
          _
        $region56: #{model_forward.1} parent=11 // pred_fallthru
          _
        // Predicated region
        $region57: #{model_forward.1} parent=11 // pred_check
          %p1113 = pneg %p408
        $region58: #{model_forward.1} parent=11 // pred_check_branch
          %1115 = sbr.rel (%p1113) target = $region60
        $region59: #{model_forward.1} parent=11 // pred_region
          _
        $region60: #{model_forward.1} parent=11 // pred_fallthru
          _
        // Predicated region
        $region61: #{model_forward.1} parent=11 // pred_check
          %p1116 = pneg %p429
        $region62: #{model_forward.1} parent=11 // pred_check_branch
          %1118 = sbr.rel (%p1116) target = $region64
        $region63: #{model_forward.1} parent=11 // pred_region
          _
        $region64: #{model_forward.1} parent=11 // pred_fallthru
          _
        // Predicated region
        $region65: #{model_forward.1} parent=11 // pred_check
          %p1119 = pneg %p450
        $region66: #{model_forward.1} parent=11 // pred_check_branch
          %1121 = sbr.rel (%p1119) target = $region68
        $region67: #{model_forward.1} parent=11 // pred_region
          _
        $region68: #{model_forward.1} parent=11 // pred_fallthru
          _
        // Predicated region
        $region69: #{model_forward.1} parent=11 // pred_check
          %p1122 = pneg %p471
        $region70: #{model_forward.1} parent=11 // pred_check_branch
          %1124 = sbr.rel (%p1122) target = $region72
        $region71: #{model_forward.1} parent=11 // pred_region
          _
        $region72: #{model_forward.1} parent=11 // pred_fallthru
          _
        // Predicated region
        $region73: #{model_forward.1} parent=11 // pred_check
          %p1125 = pneg %p492
        $region74: #{model_forward.1} parent=11 // pred_check_branch
          %1127 = sbr.rel (%p1125) target = $region76
        $region75: #{model_forward.1} parent=11 // pred_region
          _
        $region76: #{model_forward.1} parent=11 // pred_fallthru
          _
        // Predicated region
        $region77: #{model_forward.1} parent=11 // pred_check
          %p1128 = pneg %p513
        $region78: #{model_forward.1} parent=11 // pred_check_branch
          %1130 = sbr.rel (%p1128) target = $region80
        $region79: #{model_forward.1} parent=11 // pred_region
          _
        $region80: #{model_forward.1} parent=11 // pred_fallthru
          _
        // Predicated region
        $region81: #{model_forward.1} parent=11 // pred_check
          %p1131 = pneg %p534
        $region82: #{model_forward.1} parent=11 // pred_check_branch
          %1133 = sbr.rel (%p1131) target = $region84
        $region83: #{model_forward.1} parent=11 // pred_region
          _
        $region84: #{model_forward.1} parent=11 // pred_fallthru
          _
        // Predicated region
        $region85: #{model_forward.1} parent=11 // pred_check
          %p1134 = pneg %p555
        $region86: #{model_forward.1} parent=11 // pred_check_branch
          %1136 = sbr.rel (%p1134) target = $region88
        $region87: #{model_forward.1} parent=11 // pred_region
          _
        $region88: #{model_forward.1} parent=11 // pred_fallthru
          _
        // Predicated region
        $region89: #{model_forward.1} parent=11 // pred_check
          %p1137 = pneg %p576
        $region90: #{model_forward.1} parent=11 // pred_check_branch
          %1139 = sbr.rel (%p1137) target = $region92
        $region91: #{model_forward.1} parent=11 // pred_region
          _
        $region92: #{model_forward.1} parent=11 // pred_fallthru
          _
        // Predicated region
        $region93: #{model_forward.1} parent=11 // pred_check
          %p1140 = pneg %p597
        $region94: #{model_forward.1} parent=11 // pred_check_branch
          %1142 = sbr.rel (%p1140) target = $region96
        $region95: #{model_forward.1} parent=11 // pred_region
          _
        $region96: #{model_forward.1} parent=11 // pred_fallthru
          _
        // Predicated region
        $region97: #{model_forward.1} parent=11 // pred_check
          %p1143 = pneg %p618
        $region98: #{model_forward.1} parent=11 // pred_check_branch
          %1145 = sbr.rel (%p1143) target = $region100
        $region99: #{model_forward.1} parent=11 // pred_region
          _
        $region100: #{model_forward.1} parent=11 // pred_fallthru
          _
        // Predicated region
        $region101: #{model_forward.1} parent=11 // pred_check
          %p1146 = pneg %p639
        $region102: #{model_forward.1} parent=11 // pred_check_branch
          %1148 = sbr.rel (%p1146) target = $region104
        $region103: #{model_forward.1} parent=11 // pred_region
          _
        $region104: #{model_forward.1} parent=11 // pred_fallthru
          _
        // Predicated region
        $region105: #{model_forward.1} parent=11 // pred_check
          %p1149 = pneg %p660
        $region106: #{model_forward.1} parent=11 // pred_check_branch
          %1151 = sbr.rel (%p1149) target = $region108
        $region107: #{model_forward.1} parent=11 // pred_region
          _
        $region108: #{model_forward.1} parent=11 // pred_fallthru
          _
        // Predicated region
        $region109: #{model_forward.1} parent=11 // pred_check
          %p1152 = pneg %p681
        $region110: #{model_forward.1} parent=11 // pred_check_branch
          %1154 = sbr.rel (%p1152) target = $region112
        $region111: #{model_forward.1} parent=11 // pred_region
          _
        $region112: #{model_forward.1} parent=11 // pred_fallthru
          _
        // Predicated region
        $region113: #{model_forward.1} parent=11 // pred_check
          %p1155 = pneg %p702
        $region114: #{model_forward.1} parent=11 // pred_check_branch
          %1157 = sbr.rel (%p1155) target = $region116
        $region115: #{model_forward.1} parent=11 // pred_region
          _
        $region116: #{model_forward.1} parent=11 // pred_fallthru
          _
        // Predicated region
        $region117: #{model_forward.1} parent=11 // pred_check
          %p1158 = pneg %p723
        $region118: #{model_forward.1} parent=11 // pred_check_branch
          %1160 = sbr.rel (%p1158) target = $region120
        $region119: #{model_forward.1} parent=11 // pred_region
          _
        $region120: #{model_forward.1} parent=11 // pred_fallthru
          _
        // Predicated region
        $region121: #{model_forward.1} parent=11 // pred_check
          %p1161 = pneg %p744
        $region122: #{model_forward.1} parent=11 // pred_check_branch
          %1163 = sbr.rel (%p1161) target = $region124
        $region123: #{model_forward.1} parent=11 // pred_region
          _
        $region124: #{model_forward.1} parent=11 // pred_fallthru
          _
        // Predicated region
        $region125: #{model_forward.1} parent=11 // pred_check
          %p1164 = pneg %p765
        $region126: #{model_forward.1} parent=11 // pred_check_branch
          %1166 = sbr.rel (%p1164) target = $region128
        $region127: #{model_forward.1} parent=11 // pred_region
          _
        $region128: #{model_forward.1} parent=11 // pred_fallthru
          _
        // Predicated region
        $region129: #{model_forward.1} parent=11 // pred_check
          %p1167 = pneg %p786
        $region130: #{model_forward.1} parent=11 // pred_check_branch
          %1169 = sbr.rel (%p1167) target = $region132
        $region131: #{model_forward.1} parent=11 // pred_region
          _
        $region132: #{model_forward.1} parent=11 // pred_fallthru
          _
        // Predicated region
        $region133: #{model_forward.1} parent=11 // pred_check
          %p1170 = pneg %p807
        $region134: #{model_forward.1} parent=11 // pred_check_branch
          %1172 = sbr.rel (%p1170) target = $region136
        $region135: #{model_forward.1} parent=11 // pred_region
          _
        $region136: #{model_forward.1} parent=11 // pred_fallthru
          _
        // Predicated region
        $region137: #{model_forward.1} parent=11 // pred_check
          %p1173 = pneg %p828
        $region138: #{model_forward.1} parent=11 // pred_check_branch
          %1175 = sbr.rel (%p1173) target = $region140
        $region139: #{model_forward.1} parent=11 // pred_region
          _
        $region140: #{model_forward.1} parent=11 // pred_fallthru
          _
        // Predicated region
        $region141: #{model_forward.1} parent=11 // pred_check
          %p1176 = pneg %p849
        $region142: #{model_forward.1} parent=11 // pred_check_branch
          %1178 = sbr.rel (%p1176) target = $region144
        $region143: #{model_forward.1} parent=11 // pred_region
          _
        $region144: #{model_forward.1} parent=11 // pred_fallthru
          _
        // Predicated region
        $region145: #{model_forward.1} parent=11 // pred_check
          %p1179 = pneg %p870
        $region146: #{model_forward.1} parent=11 // pred_check_branch
          %1181 = sbr.rel (%p1179) target = $region148
        $region147: #{model_forward.1} parent=11 // pred_region
          _
        $region148: #{model_forward.1} parent=11 // pred_fallthru
          _
        // Predicated region
        $region149: #{model_forward.1} parent=11 // pred_check
          %p1182 = pneg %p891
        $region150: #{model_forward.1} parent=11 // pred_check_branch
          %1184 = sbr.rel (%p1182) target = $region152
        $region151: #{model_forward.1} parent=11 // pred_region
          _
        $region152: #{model_forward.1} parent=11 // pred_fallthru
          _
        // Predicated region
        $region153: #{model_forward.1} parent=11 // pred_check
          %p1185 = pneg %p912
        $region154: #{model_forward.1} parent=11 // pred_check_branch
          %1187 = sbr.rel (%p1185) target = $region156
        $region155: #{model_forward.1} parent=11 // pred_region
          _
        $region156: #{model_forward.1} parent=11 // pred_fallthru
          _
        // Predicated region
        $region157: #{model_forward.1} parent=11 // pred_check
          %p1188 = pneg %p933
        $region158: #{model_forward.1} parent=11 // pred_check_branch
          %1190 = sbr.rel (%p1188) target = $region160
        $region159: #{model_forward.1} parent=11 // pred_region
          _
        $region160: #{model_forward.1} parent=11 // pred_fallthru
          _
        // Predicated region
        $region161: #{model_forward.1} parent=11 // pred_check
          %p1191 = pneg %p954
        $region162: #{model_forward.1} parent=11 // pred_check_branch
          %1193 = sbr.rel (%p1191) target = $region164
        $region163: #{model_forward.1} parent=11 // pred_region
          _
        $region164: #{model_forward.1} parent=11 // pred_fallthru
          _
      $region12: #{model_forward.1} parent=5 // pred_fallthru
        _
      %p1194 = scmp.lt.s32.totalorder %s104, 2
      // Predicated region
      $region165: #{model_forward.1} parent=5 // pred_check
        %p1195 = pneg %p1194
      $region166: #{model_forward.1} parent=5 // pred_check_branch
        %1197 = sbr.rel (%p1195) target = $region168
      $region167: #{model_forward.1} parent=5 // pred_region
        // Predicated region
        $region169: #{model_forward.1} parent=167 // pred_check
          %p1198 = pneg %p145
        $region170: #{model_forward.1} parent=167 // pred_check_branch
          %1200 = sbr.rel (%p1198) target = $region172
        $region171: #{model_forward.1} parent=167 // pred_region
          %p1201 = scmp.lt.s32.totalorder %s104, 1
          %s1202 = scalar_select %p1201, %s104, 1
          %s1203 = smul.addr %s1202, 8
          %s1204 = scalar_lea.vmem %s3, %s1203
        $region172: #{model_forward.1} parent=167 // pred_fallthru
          _
        // Predicated region
        $region173: #{model_forward.1} parent=167 // pred_check
          %p1205 = pneg %p171
        $region174: #{model_forward.1} parent=167 // pred_check_branch
          %1207 = sbr.rel (%p1205) target = $region176
        $region175: #{model_forward.1} parent=167 // pred_region
          %p1208 = scmp.lt.s32.totalorder %s104, 1
          %s1209 = scalar_select %p1208, %s104, 1
          %s1210 = smul.addr %s1209, 2
          %s1211 = smul.addr %s1210, 8
          %s1212 = scalar_lea.vmem %s5, %s1211
        $region176: #{model_forward.1} parent=167 // pred_fallthru
          _
      $region168: #{model_forward.1} parent=5 // pred_fallthru
        _
      %p1213 = scmp.le.s32.totalorder 1, %s104
      %p1214 = scmp.lt.s32.totalorder %s104, 3
      %p1215 = pnand %p1213, %p1214
      %p1216 = pneg %p1215
      // Predicated region
      $region177: #{model_forward.1} parent=5 // pred_check
        _
      $region178: #{model_forward.1} parent=5 // pred_check_branch
        %1218 = sbr.rel (%p1215) target = $region180
      $region179: #{model_forward.1} parent=5 // pred_region
        %s1219 = ssub.s32 %s104, 1
        // Predicated region
        $region181: #{model_forward.1} parent=179 // pred_check
          %p1220 = pneg %p125
        $region182: #{model_forward.1} parent=179 // pred_check_branch
          %1222 = sbr.rel (%p1220) target = $region184
        $region183: #{model_forward.1} parent=179 // pred_region
          %1224 = dma.done [#allocation4], 16
        $region184: #{model_forward.1} parent=179 // pred_fallthru
          _
        %1225 = sfence
        %p1226 = pneg %p125
        %p1227 = pneg %p122
        %p1228 = scmp.lt.s32.totalorder %s109, 1
        %s1229 = scalar_select %p1228, %s109, 1
        %s1230 = smul.addr %s1229, 8
        %s1231 = scalar_lea.vmem %s3, %s1230
        %p1232 = pneg %p151
        %p1233 = pneg %p148
        %p1234 = scmp.lt.s32.totalorder %s109, 1
        %s1235 = scalar_select %p1234, %s109, 1
        %s1236 = smul.addr %s1235, 2
        %s1237 = smul.addr %s1236, 8
        %s1238 = scalar_lea.vmem %s5, %s1237
        %p1239 = pneg %p177
        %p1240 = pneg %p174
        %p1241 = pneg %p198
        %p1242 = pneg %p195
        %p1243 = pneg %p219
        %p1244 = pneg %p216
        %p1245 = pneg %p240
        %p1246 = pneg %p237
        %p1247 = pneg %p261
        %p1248 = pneg %p258
        %p1249 = pneg %p282
        %p1250 = pneg %p279
        %p1251 = pneg %p303
        %p1252 = pneg %p300
        %p1253 = pneg %p324
        %p1254 = pneg %p321
        %p1255 = pneg %p345
        %p1256 = pneg %p342
        %p1257 = pneg %p366
        %p1258 = pneg %p363
        %p1259 = pneg %p387
        %p1260 = pneg %p384
        %p1261 = pneg %p408
        %p1262 = pneg %p405
        %p1263 = pneg %p429
        %p1264 = pneg %p426
        %p1265 = pneg %p450
        %p1266 = pneg %p447
        %p1267 = pneg %p471
        %p1268 = pneg %p468
        %p1269 = pneg %p492
        %p1270 = pneg %p489
        %p1271 = pneg %p513
        %p1272 = pneg %p510
        %p1273 = pneg %p534
        %p1274 = pneg %p531
        %p1275 = pneg %p555
        %p1276 = pneg %p552
        %p1277 = pneg %p576
        %p1278 = pneg %p573
        %p1279 = pneg %p597
        %p1280 = pneg %p594
        %p1281 = pneg %p618
        %p1282 = pneg %p615
        %p1283 = pneg %p639
        %p1284 = pneg %p636
        %p1285 = pneg %p660
        %p1286 = pneg %p657
        %p1287 = pneg %p681
        %p1288 = pneg %p678
        %p1289 = pneg %p702
        %p1290 = pneg %p699
        %p1291 = pneg %p723
        %p1292 = pneg %p720
        %p1293 = pneg %p744
        %p1294 = pneg %p741
        %p1295 = pneg %p765
        %p1296 = pneg %p762
        %p1297 = pneg %p786
        %p1298 = pneg %p783
        %p1299 = pneg %p807
        %p1300 = pneg %p804
        %p1301 = pneg %p828
        %p1302 = pneg %p825
        %p1303 = pneg %p849
        %p1304 = pneg %p846
        %p1305 = pneg %p870
        %p1306 = pneg %p867
        %p1307 = pneg %p891
        %p1308 = pneg %p888
        %p1309 = pneg %p912
        %p1310 = pneg %p909
        %p1311 = pneg %p933
        %p1312 = pneg %p930
        %p1313 = pneg %p954
        %p1314 = pneg %p951
        %p1315 = pneg %p980
        %p1316 = pneg %p977
        %s1317 = sand.u32 %s967, 1
        %s1318 = scalar_lea.sflag [#allocation3], %s1317
        %s1319 = sand.u32 %s967, 1
        %s1320 = smul.addr %s1319, 16
        %s1321 = scalar_lea.vmem [#allocation5], %s1320
        %p1322 = pneg %p1006
        %p1323 = pneg %p1003
        %s1324 = sand.u32 %s109, 1
        %s1325 = scalar_lea.sflag [#allocation7], %s1324
        %s1326 = sand.u32 %s993, 1
        %s1327 = smul.addr %s1326, 8
        %s1328 = scalar_lea.vmem [#allocation6], %s1327
        %p1329 = pneg %p1032
        %p1330 = pneg %p1029
        %s1331 = sand.u32 %s109, 1
        %s1332 = scalar_lea.sflag [#allocation7], %s1331
        %s1333 = sand.u32 %s1019, 1
        %s1334 = smul.addr %s1333, 4
        %s1335 = scalar_lea.vmem [#allocation8], %s1334
        %p1336 = pneg %p1058
        %p1337 = pneg %p1055
        %s1338 = sand.u32 %s1045, 1
        %s1339 = scalar_lea.sflag [#allocation10], %s1338
        %s1340 = sand.u32 %s1045, 1
        %s1341 = smul.addr %s1340, 8
        %s1342 = scalar_lea.vmem [#allocation9], %s1341
        %p1343 = scmp.lt.s32.totalorder %s109, 1
        %s1344 = scalar_select %p1343, %s109, 1
        %s1345 = smul.addr %s1344, 8
        %s1346 = scalar_lea.vmem %s3, %s1345
        %p1347 = scmp.lt.s32.totalorder %s109, 1
        %s1348 = scalar_select %p1347, %s109, 1
        %s1349 = smul.addr %s1348, 2
        %s1350 = smul.addr %s1349, 8
        %s1351 = scalar_lea.vmem %s5, %s1350
        %s1352 = sld [smem:[#allocation2 + %s109]]
        %v1353 = vld [vmem:[%s1346] sm:$0xff]
        %v1354 = vld [vmem:[%s7] sm:$0xff]
        %v1355 = vld [vmem:[%s7 + $0x8] sm:$0xff]
        %v1356 = vld [vmem:[%s7 + $0x10] sm:$0xff]
        %v1357 = vld [vmem:[%s7 + $0x18] sm:$0xff]
        %v1358 = vld [vmem:[%s11] sm:$0x1]
        %v1360 = vperm.slane %v1358, 0
        %vm1362 = vcmask 261120
        %v1364 = vsel %vm1362, %v1353, 0
        %1366 = vmatpush.msra.mxu0 0.0
        %1367 = vmatpush.msra.mxu0 0.0
        %1368 = vmatpush.msra.mxu0 0.0
        %1369 = vmatpush.msra.mxu0 0.0
        %1370 = vmatpush.msra.mxu0 0.0
        %1371 = vmatpush.msra.mxu0 0.0
        %1372 = vmatpush.msra.mxu0 0.0
        %1373 = vmatpush.msra.mxu0 0.0
        %1374 = vmatpush.msra.mxu0 0.0
        %1375 = vmatpush.msra.mxu0 0.0
        %1376 = vmatpush.msra.mxu0 0.0
        %1377 = vmatpush.msra.mxu0 0.0
        %1378 = vmatpush.msra.mxu0 %v1357
        %1379 = vmatpush.msra.mxu0 %v1356
        %1380 = vmatpush.msra.mxu0 %v1355
        %1381 = vmatpush.msra.mxu0 %v1354
        %1382 = vmatmul.f32.gmra.mxu0 %v1364
        %v1383 = vpop.f32.mrf.mxu0
        %v1384 = vadd.f32 %v1360, %v1383
        %1385 = vdwg.mxu0
        %v1386 = vld [vmem:[%s15] sm:$0xff]
        %v1387 = vld [vmem:[%s15 + $0x8] sm:$0xff]
        %v1388 = vld [vmem:[%s15 + $0x10] sm:$0xff]
        %v1389 = vld [vmem:[%s15 + $0x18] sm:$0xff]
        %v1390 = vld [vmem:[%s19] sm:$0x1]
        %v1392 = vperm.slane %v1390, 0
        %1394 = vmatpush.msra.mxu0 0.0
        %1395 = vmatpush.msra.mxu0 0.0
        %1396 = vmatpush.msra.mxu0 0.0
        %1397 = vmatpush.msra.mxu0 0.0
        %1398 = vmatpush.msra.mxu0 0.0
        %1399 = vmatpush.msra.mxu0 0.0
        %1400 = vmatpush.msra.mxu0 0.0
        %1401 = vmatpush.msra.mxu0 0.0
        %1402 = vmatpush.msra.mxu0 0.0
        %1403 = vmatpush.msra.mxu0 0.0
        %1404 = vmatpush.msra.mxu0 0.0
        %1405 = vmatpush.msra.mxu0 0.0
        %1406 = vmatpush.msra.mxu0 %v1389
        %1407 = vmatpush.msra.mxu0 %v1388
        %1408 = vmatpush.msra.mxu0 %v1387
        %1409 = vmatpush.msra.mxu0 %v1386
        %1410 = vmatmul.f32.gmra.mxu0 %v1364
        %v1411 = vpop.f32.mrf.mxu0
        %v1412 = vadd.f32 %v1392, %v1411
        %1413 = vdwg.mxu0
        %v1414 = vld [vmem:[%s9] sm:$0xff]
        %v1415 = vld [vmem:[%s9 + $0x8] sm:$0xff]
        %v1416 = vld [vmem:[%s9 + $0x10] sm:$0xff]
        %v1417 = vld [vmem:[%s9 + $0x18] sm:$0xff]
        %v1418 = vld [vmem:[%s13] sm:$0x1]
        %v1419 = vld [vmem:[%s17] sm:$0xff]
        %v1420 = vld [vmem:[%s17 + $0x8] sm:$0xff]
        %v1421 = vld [vmem:[%s17 + $0x10] sm:$0xff]
        %v1422 = vld [vmem:[%s17 + $0x18] sm:$0xff]
        %v1423 = vld [vmem:[%s21] sm:$0x1]
        %v1425 = vsel %vm1362, 0.0, 0
        %1427 = vmatpush.msra.mxu0 0.0
        %1428 = vmatpush.msra.mxu0 0.0
        %1429 = vmatpush.msra.mxu0 0.0
        %1430 = vmatpush.msra.mxu0 0.0
        %1431 = vmatpush.msra.mxu0 0.0
        %1432 = vmatpush.msra.mxu0 0.0
        %1433 = vmatpush.msra.mxu0 0.0
        %1434 = vmatpush.msra.mxu0 0.0
        %1435 = vmatpush.msra.mxu0 0.0
        %1436 = vmatpush.msra.mxu0 0.0
        %1437 = vmatpush.msra.mxu0 0.0
        %1438 = vmatpush.msra.mxu0 0.0
        %1439 = vmatpush.msra.mxu0 %v1417
        %1440 = vmatpush.msra.mxu0 %v1416
        %1441 = vmatpush.msra.mxu0 %v1415
        %1442 = vmatpush.msra.mxu0 %v1414
        %1443 = vmatmul.f32.gmra.mxu0 %v1425
        %v1444 = vpop.f32.mrf.mxu0
        %v1445 = vadd.f32 %v1418, %v1444
        %1446 = vdwg.mxu0
        %v1447 = vadd.f32 %v1384, %v1445
        %v1448 = vxor.u32 %v1447, 2147483648
        %v1449 = vmul.f32 %v1448, 1.442695
        %v1450 = vpow.pop %v1449
        %v1451 = vadd.f32 %v1450, 1.0
        %v1452 = vrcp.pop %v1451
        %v1453 = vmul.f32 %v1451, %v1452
        %v1454 = vsub.f32 1.0, %v1453
        %v1455 = vmul.f32 %v1452, %v1454
        %v1456 = vadd.f32 %v1452, %v1455
        %vm1457 = vweird.f32 %v1451
        %vm1458 = vweird.f32 %v1452
        %vm1459 = vmor %vm1457, %vm1458
        %v1460 = vsel %vm1459, %v1452, %v1456
        %v1461 = vand.u32 2147483647, %v1451
        %vm1462 = vcmp.eq.f32.partialorder %v1461, 8.507059e+37
        %v1463 = vand.u32 %v1451, 2147483648
        %v1464 = vor.u32 1.1754944e-38, %v1463
        %v1465 = vsel %vm1462, %v1464, %v1460
        %v1466 = vmul.f32 1.0, %v1465
        %1468 = vrot.lane.b32.xlu0 %v1445, 64
        %v1469 = vpop.permute.xlu0 %1468
        %v1471 = vmul.f32 %v1466, %v1469
        %1473 = vrot.lane.b32.xlu0 %v1471, 64
        %v1474 = vpop.permute.xlu0 %1473
        %v1476 = vadd.f32 %v1384, %v1474
        %v1477 = vtanh.pop %v1476
        %v1478 = vsub.f32 1.0, %v1466
        %1480 = vrot.lane.b32.xlu0 %v1477, 96
        %v1481 = vpop.permute.xlu0 %1480
        %v1483 = vmul.f32 %v1478, %v1481
        %v1484 = vmul.f32 %v1466, 0.0
        %v1485 = vadd.f32 %v1483, %v1484
        %p1486 = scmp.gt.s32.totalorder %s1352, 0
        %s1487 = scalar_select %p1486, 1, 0
        %s1488 = scvt.s32.f32 %s1487
        %v1489 = vstv %s1488
        %v1490 = vmul.f32 %v1485, %v1489
        %s1491 = ssub.f32 1.0, %s1488
        %v1492 = vstv %s1491
        %v1493 = vmul.f32 %v1492, 0.0
        %v1494 = vadd.f32 %v1490, %v1493
        %1496 = vrot.lane.b32.xlu0 %v1494, 96
        %v1497 = vpop.permute.xlu0 %1496
        %v1498 = vsel %vm1362, %v1497, 0
        %1500 = vmatpush.msra.mxu0 0.0
        %1501 = vmatpush.msra.mxu0 0.0
        %1502 = vmatpush.msra.mxu0 0.0
        %1503 = vmatpush.msra.mxu0 0.0
        %1504 = vmatpush.msra.mxu0 0.0
        %1505 = vmatpush.msra.mxu0 0.0
        %1506 = vmatpush.msra.mxu0 0.0
        %1507 = vmatpush.msra.mxu0 0.0
        %1508 = vmatpush.msra.mxu0 0.0
        %1509 = vmatpush.msra.mxu0 0.0
        %1510 = vmatpush.msra.mxu0 0.0
        %1511 = vmatpush.msra.mxu0 0.0
        %1512 = vmatpush.msra.mxu0 %v1417
        %1513 = vmatpush.msra.mxu0 %v1416
        %1514 = vmatpush.msra.mxu0 %v1415
        %1515 = vmatpush.msra.mxu0 %v1414
        %1516 = vmatmul.f32.gmra.mxu0 %v1498
        %v1517 = vpop.f32.mrf.mxu0
        %v1518 = vadd.f32 %v1418, %v1517
        %1519 = vdwg.mxu0
        %v1521 = vrot.slane %v1518, 7
        %v1523 = vadd.f32 %v1384, %v1521
        %v1524 = vxor.u32 %v1523, 2147483648
        %v1525 = vmul.f32 %v1524, 1.442695
        %v1526 = vpow.pop %v1525
        %v1527 = vadd.f32 %v1526, 1.0
        %v1528 = vrcp.pop %v1527
        %v1529 = vmul.f32 %v1527, %v1528
        %v1530 = vsub.f32 1.0, %v1529
        %v1531 = vmul.f32 %v1528, %v1530
        %v1532 = vadd.f32 %v1528, %v1531
        %vm1533 = vweird.f32 %v1527
        %vm1534 = vweird.f32 %v1528
        %vm1535 = vmor %vm1533, %vm1534
        %v1536 = vsel %vm1535, %v1528, %v1532
        %v1537 = vand.u32 2147483647, %v1527
        %vm1538 = vcmp.eq.f32.partialorder %v1537, 8.507059e+37
        %v1539 = vand.u32 %v1527, 2147483648
        %v1540 = vor.u32 1.1754944e-38, %v1539
        %v1541 = vsel %vm1538, %v1540, %v1536
        %v1542 = vmul.f32 1.0, %v1541
        %1543 = vrot.lane.b32.xlu0 %v1521, 64
        %v1544 = vpop.permute.xlu0 %1543
        %v1546 = vmul.f32 %v1542, %v1544
        %1548 = vrot.lane.b32.xlu0 %v1546, 64
        %v1549 = vpop.permute.xlu0 %1548
        %v1551 = vadd.f32 %v1384, %v1549
        %v1552 = vtanh.pop %v1551
        %v1553 = vsub.f32 1.0, %v1542
        %1555 = vrot.lane.b32.xlu0 %v1552, 96
        %v1556 = vpop.permute.xlu0 %1555
        %v1558 = vmul.f32 %v1553, %v1556
        %v1559 = vrot.slane %v1494, 7
        %v1561 = vmul.f32 %v1542, %v1559
        %v1562 = vadd.f32 %v1558, %v1561
        %p1563 = scmp.gt.s32.totalorder %s1352, 1
        %s1564 = scalar_select %p1563, 1, 0
        %s1565 = scvt.s32.f32 %s1564
        %v1566 = vstv %s1565
        %v1567 = vmul.f32 %v1562, %v1566
        %s1568 = ssub.f32 1.0, %s1565
        %v1569 = vstv %s1568
        %v1570 = vmul.f32 %v1494, %v1569
        %v1572 = vrot.slane %v1570, 7
        %v1574 = vadd.f32 %v1567, %v1572
        %v1576 = vrot.slane %v1574, 1
        %1577 = vrot.lane.b32.xlu0 %v1576, 96
        %v1578 = vpop.permute.xlu0 %1577
        %v1579 = vsel %vm1362, %v1578, 0
        %1581 = vmatpush.msra.mxu0 0.0
        %1582 = vmatpush.msra.mxu0 0.0
        %1583 = vmatpush.msra.mxu0 0.0
        %1584 = vmatpush.msra.mxu0 0.0
        %1585 = vmatpush.msra.mxu0 0.0
        %1586 = vmatpush.msra.mxu0 0.0
        %1587 = vmatpush.msra.mxu0 0.0
        %1588 = vmatpush.msra.mxu0 0.0
        %1589 = vmatpush.msra.mxu0 0.0
        %1590 = vmatpush.msra.mxu0 0.0
        %1591 = vmatpush.msra.mxu0 0.0
        %1592 = vmatpush.msra.mxu0 0.0
        %1593 = vmatpush.msra.mxu0 %v1417
        %1594 = vmatpush.msra.mxu0 %v1416
        %1595 = vmatpush.msra.mxu0 %v1415
        %1596 = vmatpush.msra.mxu0 %v1414
        %1597 = vmatmul.f32.gmra.mxu0 %v1579
        %v1598 = vpop.f32.mrf.mxu0
        %v1599 = vadd.f32 %v1418, %v1598
        %1600 = vdwg.mxu0
        %v1602 = vrot.slane %v1599, 6
        %v1604 = vadd.f32 %v1384, %v1602
        %v1605 = vxor.u32 %v1604, 2147483648
        %v1606 = vmul.f32 %v1605, 1.442695
        %v1607 = vpow.pop %v1606
        %v1608 = vadd.f32 %v1607, 1.0
        %v1609 = vrcp.pop %v1608
        %v1610 = vmul.f32 %v1608, %v1609
        %v1611 = vsub.f32 1.0, %v1610
        %v1612 = vmul.f32 %v1609, %v1611
        %v1613 = vadd.f32 %v1609, %v1612
        %vm1614 = vweird.f32 %v1608
        %vm1615 = vweird.f32 %v1609
        %vm1616 = vmor %vm1614, %vm1615
        %v1617 = vsel %vm1616, %v1609, %v1613
        %v1618 = vand.u32 2147483647, %v1608
        %vm1619 = vcmp.eq.f32.partialorder %v1618, 8.507059e+37
        %v1620 = vand.u32 %v1608, 2147483648
        %v1621 = vor.u32 1.1754944e-38, %v1620
        %v1622 = vsel %vm1619, %v1621, %v1617
        %v1623 = vmul.f32 1.0, %v1622
        %1624 = vrot.lane.b32.xlu0 %v1602, 64
        %v1625 = vpop.permute.xlu0 %1624
        %v1627 = vmul.f32 %v1623, %v1625
        %1629 = vrot.lane.b32.xlu0 %v1627, 64
        %v1630 = vpop.permute.xlu0 %1629
        %v1632 = vadd.f32 %v1384, %v1630
        %v1633 = vtanh.pop %v1632
        %v1634 = vsub.f32 1.0, %v1623
        %1636 = vrot.lane.b32.xlu0 %v1633, 96
        %v1637 = vpop.permute.xlu0 %1636
        %v1639 = vmul.f32 %v1634, %v1637
        %v1640 = vrot.slane %v1574, 7
        %v1642 = vmul.f32 %v1623, %v1640
        %v1643 = vadd.f32 %v1639, %v1642
        %p1644 = scmp.gt.s32.totalorder %s1352, 2
        %s1645 = scalar_select %p1644, 1, 0
        %s1646 = scvt.s32.f32 %s1645
        %v1647 = vstv %s1646
        %v1648 = vmul.f32 %v1643, %v1647
        %s1649 = ssub.f32 1.0, %s1646
        %v1650 = vstv %s1649
        %v1651 = vmul.f32 %v1574, %v1650
        %v1653 = vrot.slane %v1651, 7
        %v1655 = vadd.f32 %v1648, %v1653
        %v1657 = vrot.slane %v1655, 2
        %1658 = vrot.lane.b32.xlu0 %v1657, 96
        %v1659 = vpop.permute.xlu0 %1658
        %v1660 = vsel %vm1362, %v1659, 0
        %1662 = vmatpush.msra.mxu0 0.0
        %1663 = vmatpush.msra.mxu0 0.0
        %1664 = vmatpush.msra.mxu0 0.0
        %1665 = vmatpush.msra.mxu0 0.0
        %1666 = vmatpush.msra.mxu0 0.0
        %1667 = vmatpush.msra.mxu0 0.0
        %1668 = vmatpush.msra.mxu0 0.0
        %1669 = vmatpush.msra.mxu0 0.0
        %1670 = vmatpush.msra.mxu0 0.0
        %1671 = vmatpush.msra.mxu0 0.0
        %1672 = vmatpush.msra.mxu0 0.0
        %1673 = vmatpush.msra.mxu0 0.0
        %1674 = vmatpush.msra.mxu0 %v1417
        %1675 = vmatpush.msra.mxu0 %v1416
        %1676 = vmatpush.msra.mxu0 %v1415
        %1677 = vmatpush.msra.mxu0 %v1414
        %1678 = vmatmul.f32.gmra.mxu0 %v1660
        %v1679 = vpop.f32.mrf.mxu0
        %v1680 = vadd.f32 %v1418, %v1679
        %1681 = vdwg.mxu0
        %v1683 = vrot.slane %v1680, 5
        %v1685 = vadd.f32 %v1384, %v1683
        %v1686 = vxor.u32 %v1685, 2147483648
        %v1687 = vmul.f32 %v1686, 1.442695
        %v1688 = vpow.pop %v1687
        %v1689 = vadd.f32 %v1688, 1.0
        %v1690 = vrcp.pop %v1689
        %v1691 = vmul.f32 %v1689, %v1690
        %v1692 = vsub.f32 1.0, %v1691
        %v1693 = vmul.f32 %v1690, %v1692
        %v1694 = vadd.f32 %v1690, %v1693
        %vm1695 = vweird.f32 %v1689
        %vm1696 = vweird.f32 %v1690
        %vm1697 = vmor %vm1695, %vm1696
        %v1698 = vsel %vm1697, %v1690, %v1694
        %v1699 = vand.u32 2147483647, %v1689
        %vm1700 = vcmp.eq.f32.partialorder %v1699, 8.507059e+37
        %v1701 = vand.u32 %v1689, 2147483648
        %v1702 = vor.u32 1.1754944e-38, %v1701
        %v1703 = vsel %vm1700, %v1702, %v1698
        %v1704 = vmul.f32 1.0, %v1703
        %1705 = vrot.lane.b32.xlu0 %v1683, 64
        %v1706 = vpop.permute.xlu0 %1705
        %v1708 = vmul.f32 %v1704, %v1706
        %1710 = vrot.lane.b32.xlu0 %v1708, 64
        %v1711 = vpop.permute.xlu0 %1710
        %v1713 = vadd.f32 %v1384, %v1711
        %v1714 = vtanh.pop %v1713
        %v1715 = vsub.f32 1.0, %v1704
        %1717 = vrot.lane.b32.xlu0 %v1714, 96
        %v1718 = vpop.permute.xlu0 %1717
        %v1720 = vmul.f32 %v1715, %v1718
        %v1721 = vrot.slane %v1655, 7
        %v1723 = vmul.f32 %v1704, %v1721
        %v1724 = vadd.f32 %v1720, %v1723
        %p1725 = scmp.gt.s32.totalorder %s1352, 3
        %s1726 = scalar_select %p1725, 1, 0
        %s1727 = scvt.s32.f32 %s1726
        %v1728 = vstv %s1727
        %v1729 = vmul.f32 %v1724, %v1728
        %s1730 = ssub.f32 1.0, %s1727
        %v1731 = vstv %s1730
        %v1732 = vmul.f32 %v1655, %v1731
        %v1734 = vrot.slane %v1732, 7
        %v1736 = vadd.f32 %v1729, %v1734
        %v1738 = vrot.slane %v1736, 3
        %1739 = vrot.lane.b32.xlu0 %v1738, 96
        %v1740 = vpop.permute.xlu0 %1739
        %v1741 = vsel %vm1362, %v1740, 0
        %1743 = vmatpush.msra.mxu0 0.0
        %1744 = vmatpush.msra.mxu0 0.0
        %1745 = vmatpush.msra.mxu0 0.0
        %1746 = vmatpush.msra.mxu0 0.0
        %1747 = vmatpush.msra.mxu0 0.0
        %1748 = vmatpush.msra.mxu0 0.0
        %1749 = vmatpush.msra.mxu0 0.0
        %1750 = vmatpush.msra.mxu0 0.0
        %1751 = vmatpush.msra.mxu0 0.0
        %1752 = vmatpush.msra.mxu0 0.0
        %1753 = vmatpush.msra.mxu0 0.0
        %1754 = vmatpush.msra.mxu0 0.0
        %1755 = vmatpush.msra.mxu0 %v1417
        %1756 = vmatpush.msra.mxu0 %v1416
        %1757 = vmatpush.msra.mxu0 %v1415
        %1758 = vmatpush.msra.mxu0 %v1414
        %1759 = vmatmul.f32.gmra.mxu0 %v1741
        %v1760 = vpop.f32.mrf.mxu0
        %v1761 = vadd.f32 %v1418, %v1760
        %1762 = vdwg.mxu0
        %v1764 = vrot.slane %v1761, 4
        %v1766 = vadd.f32 %v1384, %v1764
        %v1767 = vxor.u32 %v1766, 2147483648
        %v1768 = vmul.f32 %v1767, 1.442695
        %v1769 = vpow.pop %v1768
        %v1770 = vadd.f32 %v1769, 1.0
        %v1771 = vrcp.pop %v1770
        %v1772 = vmul.f32 %v1770, %v1771
        %v1773 = vsub.f32 1.0, %v1772
        %v1774 = vmul.f32 %v1771, %v1773
        %v1775 = vadd.f32 %v1771, %v1774
        %vm1776 = vweird.f32 %v1770
        %vm1777 = vweird.f32 %v1771
        %vm1778 = vmor %vm1776, %vm1777
        %v1779 = vsel %vm1778, %v1771, %v1775
        %v1780 = vand.u32 2147483647, %v1770
        %vm1781 = vcmp.eq.f32.partialorder %v1780, 8.507059e+37
        %v1782 = vand.u32 %v1770, 2147483648
        %v1783 = vor.u32 1.1754944e-38, %v1782
        %v1784 = vsel %vm1781, %v1783, %v1779
        %v1785 = vmul.f32 1.0, %v1784
        %1786 = vrot.lane.b32.xlu0 %v1764, 64
        %v1787 = vpop.permute.xlu0 %1786
        %v1789 = vmul.f32 %v1785, %v1787
        %1791 = vrot.lane.b32.xlu0 %v1789, 64
        %v1792 = vpop.permute.xlu0 %1791
        %v1794 = vadd.f32 %v1384, %v1792
        %v1795 = vtanh.pop %v1794
        %v1796 = vsub.f32 1.0, %v1785
        %1798 = vrot.lane.b32.xlu0 %v1795, 96
        %v1799 = vpop.permute.xlu0 %1798
        %v1801 = vmul.f32 %v1796, %v1799
        %v1802 = vrot.slane %v1736, 7
        %v1804 = vmul.f32 %v1785, %v1802
        %v1805 = vadd.f32 %v1801, %v1804
        %p1806 = scmp.gt.s32.totalorder %s1352, 4
        %s1807 = scalar_select %p1806, 1, 0
        %s1808 = scvt.s32.f32 %s1807
        %v1809 = vstv %s1808
        %v1810 = vmul.f32 %v1805, %v1809
        %s1811 = ssub.f32 1.0, %s1808
        %v1812 = vstv %s1811
        %v1813 = vmul.f32 %v1736, %v1812
        %v1815 = vrot.slane %v1813, 7
        %v1817 = vadd.f32 %v1810, %v1815
        %v1819 = vrot.slane %v1817, 4
        %1820 = vrot.lane.b32.xlu0 %v1819, 96
        %v1821 = vpop.permute.xlu0 %1820
        %v1822 = vsel %vm1362, %v1821, 0
        %1824 = vmatpush.msra.mxu0 0.0
        %1825 = vmatpush.msra.mxu0 0.0
        %1826 = vmatpush.msra.mxu0 0.0
        %1827 = vmatpush.msra.mxu0 0.0
        %1828 = vmatpush.msra.mxu0 0.0
        %1829 = vmatpush.msra.mxu0 0.0
        %1830 = vmatpush.msra.mxu0 0.0
        %1831 = vmatpush.msra.mxu0 0.0
        %1832 = vmatpush.msra.mxu0 0.0
        %1833 = vmatpush.msra.mxu0 0.0
        %1834 = vmatpush.msra.mxu0 0.0
        %1835 = vmatpush.msra.mxu0 0.0
        %1836 = vmatpush.msra.mxu0 %v1417
        %1837 = vmatpush.msra.mxu0 %v1416
        %1838 = vmatpush.msra.mxu0 %v1415
        %1839 = vmatpush.msra.mxu0 %v1414
        %1840 = vmatmul.f32.gmra.mxu0 %v1822
        %v1841 = vpop.f32.mrf.mxu0
        %v1842 = vadd.f32 %v1418, %v1841
        %1843 = vdwg.mxu0
        %v1845 = vrot.slane %v1842, 3
        %v1847 = vadd.f32 %v1384, %v1845
        %v1848 = vxor.u32 %v1847, 2147483648
        %v1849 = vmul.f32 %v1848, 1.442695
        %v1850 = vpow.pop %v1849
        %v1851 = vadd.f32 %v1850, 1.0
        %v1852 = vrcp.pop %v1851
        %v1853 = vmul.f32 %v1851, %v1852
        %v1854 = vsub.f32 1.0, %v1853
        %v1855 = vmul.f32 %v1852, %v1854
        %v1856 = vadd.f32 %v1852, %v1855
        %vm1857 = vweird.f32 %v1851
        %vm1858 = vweird.f32 %v1852
        %vm1859 = vmor %vm1857, %vm1858
        %v1860 = vsel %vm1859, %v1852, %v1856
        %v1861 = vand.u32 2147483647, %v1851
        %vm1862 = vcmp.eq.f32.partialorder %v1861, 8.507059e+37
        %v1863 = vand.u32 %v1851, 2147483648
        %v1864 = vor.u32 1.1754944e-38, %v1863
        %v1865 = vsel %vm1862, %v1864, %v1860
        %v1866 = vmul.f32 1.0, %v1865
        %1867 = vrot.lane.b32.xlu0 %v1845, 64
        %v1868 = vpop.permute.xlu0 %1867
        %v1870 = vmul.f32 %v1866, %v1868
        %1872 = vrot.lane.b32.xlu0 %v1870, 64
        %v1873 = vpop.permute.xlu0 %1872
        %v1875 = vadd.f32 %v1384, %v1873
        %v1876 = vtanh.pop %v1875
        %v1877 = vsub.f32 1.0, %v1866
        %1879 = vrot.lane.b32.xlu0 %v1876, 96
        %v1880 = vpop.permute.xlu0 %1879
        %v1882 = vmul.f32 %v1877, %v1880
        %v1883 = vrot.slane %v1817, 7
        %v1885 = vmul.f32 %v1866, %v1883
        %v1886 = vadd.f32 %v1882, %v1885
        %p1887 = scmp.gt.s32.totalorder %s1352, 5
        %s1888 = scalar_select %p1887, 1, 0
        %s1889 = scvt.s32.f32 %s1888
        %v1890 = vstv %s1889
        %v1891 = vmul.f32 %v1886, %v1890
        %s1892 = ssub.f32 1.0, %s1889
        %v1893 = vstv %s1892
        %v1894 = vmul.f32 %v1817, %v1893
        %v1896 = vrot.slane %v1894, 7
        %v1898 = vadd.f32 %v1891, %v1896
        %v1900 = vrot.slane %v1898, 5
        %1901 = vrot.lane.b32.xlu0 %v1900, 96
        %v1902 = vpop.permute.xlu0 %1901
        %v1903 = vsel %vm1362, %v1902, 0
        %1905 = vmatpush.msra.mxu0 0.0
        %1906 = vmatpush.msra.mxu0 0.0
        %1907 = vmatpush.msra.mxu0 0.0
        %1908 = vmatpush.msra.mxu0 0.0
        %1909 = vmatpush.msra.mxu0 0.0
        %1910 = vmatpush.msra.mxu0 0.0
        %1911 = vmatpush.msra.mxu0 0.0
        %1912 = vmatpush.msra.mxu0 0.0
        %1913 = vmatpush.msra.mxu0 0.0
        %1914 = vmatpush.msra.mxu0 0.0
        %1915 = vmatpush.msra.mxu0 0.0
        %1916 = vmatpush.msra.mxu0 0.0
        %1917 = vmatpush.msra.mxu0 %v1417
        %1918 = vmatpush.msra.mxu0 %v1416
        %1919 = vmatpush.msra.mxu0 %v1415
        %1920 = vmatpush.msra.mxu0 %v1414
        %1921 = vmatmul.f32.gmra.mxu0 %v1903
        %v1922 = vpop.f32.mrf.mxu0
        %v1923 = vadd.f32 %v1418, %v1922
        %1924 = vdwg.mxu0
        %v1926 = vrot.slane %v1923, 2
        %v1928 = vadd.f32 %v1384, %v1926
        %v1929 = vxor.u32 %v1928, 2147483648
        %v1930 = vmul.f32 %v1929, 1.442695
        %v1931 = vpow.pop %v1930
        %v1932 = vadd.f32 %v1931, 1.0
        %v1933 = vrcp.pop %v1932
        %v1934 = vmul.f32 %v1932, %v1933
        %v1935 = vsub.f32 1.0, %v1934
        %v1936 = vmul.f32 %v1933, %v1935
        %v1937 = vadd.f32 %v1933, %v1936
        %vm1938 = vweird.f32 %v1932
        %vm1939 = vweird.f32 %v1933
        %vm1940 = vmor %vm1938, %vm1939
        %v1941 = vsel %vm1940, %v1933, %v1937
        %v1942 = vand.u32 2147483647, %v1932
        %vm1943 = vcmp.eq.f32.partialorder %v1942, 8.507059e+37
        %v1944 = vand.u32 %v1932, 2147483648
        %v1945 = vor.u32 1.1754944e-38, %v1944
        %v1946 = vsel %vm1943, %v1945, %v1941
        %v1947 = vmul.f32 1.0, %v1946
        %1948 = vrot.lane.b32.xlu0 %v1926, 64
        %v1949 = vpop.permute.xlu0 %1948
        %v1951 = vmul.f32 %v1947, %v1949
        %1953 = vrot.lane.b32.xlu0 %v1951, 64
        %v1954 = vpop.permute.xlu0 %1953
        %v1956 = vadd.f32 %v1384, %v1954
        %v1957 = vtanh.pop %v1956
        %v1958 = vsub.f32 1.0, %v1947
        %1960 = vrot.lane.b32.xlu0 %v1957, 96
        %v1961 = vpop.permute.xlu0 %1960
        %v1963 = vmul.f32 %v1958, %v1961
        %v1964 = vrot.slane %v1898, 7
        %v1966 = vmul.f32 %v1947, %v1964
        %v1967 = vadd.f32 %v1963, %v1966
        %p1968 = scmp.gt.s32.totalorder %s1352, 6
        %s1969 = scalar_select %p1968, 1, 0
        %s1970 = scvt.s32.f32 %s1969
        %v1971 = vstv %s1970
        %v1972 = vmul.f32 %v1967, %v1971
        %s1973 = ssub.f32 1.0, %s1970
        %v1974 = vstv %s1973
        %v1975 = vmul.f32 %v1898, %v1974
        %v1977 = vrot.slane %v1975, 7
        %v1979 = vadd.f32 %v1972, %v1977
        %v1981 = vrot.slane %v1979, 6
        %1982 = vrot.lane.b32.xlu0 %v1981, 96
        %v1983 = vpop.permute.xlu0 %1982
        %v1984 = vsel %vm1362, %v1983, 0
        %1986 = vmatpush.msra.mxu0 0.0
        %1987 = vmatpush.msra.mxu0 0.0
        %1988 = vmatpush.msra.mxu0 0.0
        %1989 = vmatpush.msra.mxu0 0.0
        %1990 = vmatpush.msra.mxu0 0.0
        %1991 = vmatpush.msra.mxu0 0.0
        %1992 = vmatpush.msra.mxu0 0.0
        %1993 = vmatpush.msra.mxu0 0.0
        %1994 = vmatpush.msra.mxu0 0.0
        %1995 = vmatpush.msra.mxu0 0.0
        %1996 = vmatpush.msra.mxu0 0.0
        %1997 = vmatpush.msra.mxu0 0.0
        %1998 = vmatpush.msra.mxu0 %v1417
        %1999 = vmatpush.msra.mxu0 %v1416
        %2000 = vmatpush.msra.mxu0 %v1415
        %2001 = vmatpush.msra.mxu0 %v1414
        %2002 = vmatmul.f32.gmra.mxu0 %v1984
        %v2003 = vpop.f32.mrf.mxu0
        %v2004 = vadd.f32 %v1418, %v2003
        %2005 = vdwg.mxu0
        %v2007 = vrot.slane %v2004, 1
        %v2009 = vadd.f32 %v1384, %v2007
        %v2010 = vxor.u32 %v2009, 2147483648
        %v2011 = vmul.f32 %v2010, 1.442695
        %v2012 = vpow.pop %v2011
        %v2013 = vadd.f32 %v2012, 1.0
        %v2014 = vrcp.pop %v2013
        %v2015 = vmul.f32 %v2013, %v2014
        %v2016 = vsub.f32 1.0, %v2015
        %v2017 = vmul.f32 %v2014, %v2016
        %v2018 = vadd.f32 %v2014, %v2017
        %vm2019 = vweird.f32 %v2013
        %vm2020 = vweird.f32 %v2014
        %vm2021 = vmor %vm2019, %vm2020
        %v2022 = vsel %vm2021, %v2014, %v2018
        %v2023 = vand.u32 2147483647, %v2013
        %vm2024 = vcmp.eq.f32.partialorder %v2023, 8.507059e+37
        %v2025 = vand.u32 %v2013, 2147483648
        %v2026 = vor.u32 1.1754944e-38, %v2025
        %v2027 = vsel %vm2024, %v2026, %v2022
        %v2028 = vmul.f32 1.0, %v2027
        %2029 = vrot.lane.b32.xlu0 %v2007, 64
        %v2030 = vpop.permute.xlu0 %2029
        %v2032 = vmul.f32 %v2028, %v2030
        %2034 = vrot.lane.b32.xlu0 %v2032, 64
        %v2035 = vpop.permute.xlu0 %2034
        %v2037 = vadd.f32 %v1384, %v2035
        %v2038 = vtanh.pop %v2037
        %v2039 = vsub.f32 1.0, %v2028
        %2041 = vrot.lane.b32.xlu0 %v2038, 96
        %v2042 = vpop.permute.xlu0 %2041
        %v2044 = vmul.f32 %v2039, %v2042
        %v2045 = vrot.slane %v1979, 7
        %v2047 = vmul.f32 %v2028, %v2045
        %v2048 = vadd.f32 %v2044, %v2047
        %p2049 = scmp.gt.s32.totalorder %s1352, 7
        %s2050 = scalar_select %p2049, 1, 0
        %s2051 = scvt.s32.f32 %s2050
        %v2052 = vstv %s2051
        %v2053 = vmul.f32 %v2048, %v2052
        %2054 = vmatpush.msra.mxu0 0.0
        %2055 = vmatpush.msra.mxu0 0.0
        %2056 = vmatpush.msra.mxu0 0.0
        %2057 = vmatpush.msra.mxu0 0.0
        %2058 = vmatpush.msra.mxu0 0.0
        %2059 = vmatpush.msra.mxu0 0.0
        %2060 = vmatpush.msra.mxu0 0.0
        %2061 = vmatpush.msra.mxu0 0.0
        %2062 = vmatpush.msra.mxu0 0.0
        %2063 = vmatpush.msra.mxu0 0.0
        %2064 = vmatpush.msra.mxu0 0.0
        %2065 = vmatpush.msra.mxu0 0.0
        %2066 = vmatpush.msra.mxu0 %v1422
        %2067 = vmatpush.msra.mxu0 %v1421
        %2068 = vmatpush.msra.mxu0 %v1420
        %2069 = vmatpush.msra.mxu0 %v1419
        %2070 = vmatmul.f32.gmra.mxu0 %v1425
        %v2071 = vpop.f32.mrf.mxu0
        %v2072 = vadd.f32 %v1423, %v2071
        %2073 = vdwg.mxu0
        %v2075 = vrot.slane %v2072, 1
        %v2077 = vadd.f32 %v1412, %v2075
        %v2078 = vxor.u32 %v2077, 2147483648
        %v2079 = vmul.f32 %v2078, 1.442695
        %v2080 = vpow.pop %v2079
        %v2081 = vadd.f32 %v2080, 1.0
        %v2082 = vrcp.pop %v2081
        %v2083 = vmul.f32 %v2081, %v2082
        %v2084 = vsub.f32 1.0, %v2083
        %v2085 = vmul.f32 %v2082, %v2084
        %v2086 = vadd.f32 %v2082, %v2085
        %vm2087 = vweird.f32 %v2081
        %vm2088 = vweird.f32 %v2082
        %vm2089 = vmor %vm2087, %vm2088
        %v2090 = vsel %vm2089, %v2082, %v2086
        %v2091 = vand.u32 2147483647, %v2081
        %vm2092 = vcmp.eq.f32.partialorder %v2091, 8.507059e+37
        %v2093 = vand.u32 %v2081, 2147483648
        %v2094 = vor.u32 1.1754944e-38, %v2093
        %v2095 = vsel %vm2092, %v2094, %v2090
        %v2096 = vmul.f32 1.0, %v2095
        %2097 = vrot.lane.b32.xlu0 %v2075, 64
        %v2098 = vpop.permute.xlu0 %2097
        %v2100 = vmul.f32 %v2096, %v2098
        %2102 = vrot.lane.b32.xlu0 %v2100, 64
        %v2103 = vpop.permute.xlu0 %2102
        %v2105 = vadd.f32 %v1412, %v2103
        %v2106 = vtanh.pop %v2105
        %v2107 = vsub.f32 1.0, %v2096
        %2109 = vrot.lane.b32.xlu0 %v2106, 96
        %v2110 = vpop.permute.xlu0 %2109
        %v2112 = vmul.f32 %v2107, %v2110
        %v2113 = vmul.f32 %v2096, 0.0
        %v2114 = vadd.f32 %v2112, %v2113
        %v2115 = vmul.f32 %v2114, %v2052
        %s2116 = ssub.f32 1.0, %s2051
        %v2117 = vstv %s2116
        %v2118 = vmul.f32 %v2117, 0.0
        %v2119 = vadd.f32 %v2115, %v2118
        %v2121 = vrot.slane %v2119, 7
        %2122 = vrot.lane.b32.xlu0 %v2121, 96
        %v2123 = vpop.permute.xlu0 %2122
        %v2124 = vsel %vm1362, %v2123, 0
        %2126 = vmatpush.msra.mxu0 0.0
        %2127 = vmatpush.msra.mxu0 0.0
        %2128 = vmatpush.msra.mxu0 0.0
        %2129 = vmatpush.msra.mxu0 0.0
        %2130 = vmatpush.msra.mxu0 0.0
        %2131 = vmatpush.msra.mxu0 0.0
        %2132 = vmatpush.msra.mxu0 0.0
        %2133 = vmatpush.msra.mxu0 0.0
        %2134 = vmatpush.msra.mxu0 0.0
        %2135 = vmatpush.msra.mxu0 0.0
        %2136 = vmatpush.msra.mxu0 0.0
        %2137 = vmatpush.msra.mxu0 0.0
        %2138 = vmatpush.msra.mxu0 %v1422
        %2139 = vmatpush.msra.mxu0 %v1421
        %2140 = vmatpush.msra.mxu0 %v1420
        %2141 = vmatpush.msra.mxu0 %v1419
        %2142 = vmatmul.f32.gmra.mxu0 %v2124
        %v2143 = vpop.f32.mrf.mxu0
        %v2144 = vadd.f32 %v1423, %v2143
        %2145 = vdwg.mxu0
        %v2147 = vrot.slane %v2144, 2
        %v2149 = vadd.f32 %v1412, %v2147
        %v2150 = vxor.u32 %v2149, 2147483648
        %v2151 = vmul.f32 %v2150, 1.442695
        %v2152 = vpow.pop %v2151
        %v2153 = vadd.f32 %v2152, 1.0
        %v2154 = vrcp.pop %v2153
        %v2155 = vmul.f32 %v2153, %v2154
        %v2156 = vsub.f32 1.0, %v2155
        %v2157 = vmul.f32 %v2154, %v2156
        %v2158 = vadd.f32 %v2154, %v2157
        %vm2159 = vweird.f32 %v2153
        %vm2160 = vweird.f32 %v2154
        %vm2161 = vmor %vm2159, %vm2160
        %v2162 = vsel %vm2161, %v2154, %v2158
        %v2163 = vand.u32 2147483647, %v2153
        %vm2164 = vcmp.eq.f32.partialorder %v2163, 8.507059e+37
        %v2165 = vand.u32 %v2153, 2147483648
        %v2166 = vor.u32 1.1754944e-38, %v2165
        %v2167 = vsel %vm2164, %v2166, %v2162
        %v2168 = vmul.f32 1.0, %v2167
        %2169 = vrot.lane.b32.xlu0 %v2147, 64
        %v2170 = vpop.permute.xlu0 %2169
        %v2172 = vmul.f32 %v2168, %v2170
        %2174 = vrot.lane.b32.xlu0 %v2172, 64
        %v2175 = vpop.permute.xlu0 %2174
        %v2177 = vadd.f32 %v1412, %v2175
        %v2178 = vtanh.pop %v2177
        %v2179 = vsub.f32 1.0, %v2168
        %2181 = vrot.lane.b32.xlu0 %v2178, 96
        %v2182 = vpop.permute.xlu0 %2181
        %v2184 = vmul.f32 %v2179, %v2182
        %v2185 = vrot.slane %v2119, 1
        %v2187 = vmul.f32 %v2168, %v2185
        %v2188 = vadd.f32 %v2184, %v2187
        %v2189 = vmul.f32 %v2188, %v1971
        %v2190 = vmul.f32 %v2119, %v1974
        %v2192 = vrot.slane %v2190, 1
        %v2194 = vadd.f32 %v2189, %v2192
        %v2196 = vrot.slane %v2194, 6
        %2197 = vrot.lane.b32.xlu0 %v2196, 96
        %v2198 = vpop.permute.xlu0 %2197
        %v2199 = vsel %vm1362, %v2198, 0
        %2201 = vmatpush.msra.mxu0 0.0
        %2202 = vmatpush.msra.mxu0 0.0
        %2203 = vmatpush.msra.mxu0 0.0
        %2204 = vmatpush.msra.mxu0 0.0
        %2205 = vmatpush.msra.mxu0 0.0
        %2206 = vmatpush.msra.mxu0 0.0
        %2207 = vmatpush.msra.mxu0 0.0
        %2208 = vmatpush.msra.mxu0 0.0
        %2209 = vmatpush.msra.mxu0 0.0
        %2210 = vmatpush.msra.mxu0 0.0
        %2211 = vmatpush.msra.mxu0 0.0
        %2212 = vmatpush.msra.mxu0 0.0
        %2213 = vmatpush.msra.mxu0 %v1422
        %2214 = vmatpush.msra.mxu0 %v1421
        %2215 = vmatpush.msra.mxu0 %v1420
        %2216 = vmatpush.msra.mxu0 %v1419
        %2217 = vmatmul.f32.gmra.mxu0 %v2199
        %v2218 = vpop.f32.mrf.mxu0
        %v2219 = vadd.f32 %v1423, %v2218
        %2220 = vdwg.mxu0
        %v2222 = vrot.slane %v2219, 3
        %v2224 = vadd.f32 %v1412, %v2222
        %v2225 = vxor.u32 %v2224, 2147483648
        %v2226 = vmul.f32 %v2225, 1.442695
        %v2227 = vpow.pop %v2226
        %v2228 = vadd.f32 %v2227, 1.0
        %v2229 = vrcp.pop %v2228
        %v2230 = vmul.f32 %v2228, %v2229
        %v2231 = vsub.f32 1.0, %v2230
        %v2232 = vmul.f32 %v2229, %v2231
        %v2233 = vadd.f32 %v2229, %v2232
        %vm2234 = vweird.f32 %v2228
        %vm2235 = vweird.f32 %v2229
        %vm2236 = vmor %vm2234, %vm2235
        %v2237 = vsel %vm2236, %v2229, %v2233
        %v2238 = vand.u32 2147483647, %v2228
        %vm2239 = vcmp.eq.f32.partialorder %v2238, 8.507059e+37
        %v2240 = vand.u32 %v2228, 2147483648
        %v2241 = vor.u32 1.1754944e-38, %v2240
        %v2242 = vsel %vm2239, %v2241, %v2237
        %v2243 = vmul.f32 1.0, %v2242
        %2244 = vrot.lane.b32.xlu0 %v2222, 64
        %v2245 = vpop.permute.xlu0 %2244
        %v2247 = vmul.f32 %v2243, %v2245
        %2249 = vrot.lane.b32.xlu0 %v2247, 64
        %v2250 = vpop.permute.xlu0 %2249
        %v2252 = vadd.f32 %v1412, %v2250
        %v2253 = vtanh.pop %v2252
        %v2254 = vsub.f32 1.0, %v2243
        %2256 = vrot.lane.b32.xlu0 %v2253, 96
        %v2257 = vpop.permute.xlu0 %2256
        %v2259 = vmul.f32 %v2254, %v2257
        %v2260 = vrot.slane %v2194, 1
        %v2262 = vmul.f32 %v2243, %v2260
        %v2263 = vadd.f32 %v2259, %v2262
        %v2264 = vmul.f32 %v2263, %v1890
        %v2265 = vmul.f32 %v2194, %v1893
        %v2267 = vrot.slane %v2265, 1
        %v2269 = vadd.f32 %v2264, %v2267
        %v2271 = vrot.slane %v2269, 5
        %2272 = vrot.lane.b32.xlu0 %v2271, 96
        %v2273 = vpop.permute.xlu0 %2272
        %v2274 = vsel %vm1362, %v2273, 0
        %2276 = vmatpush.msra.mxu0 0.0
        %2277 = vmatpush.msra.mxu0 0.0
        %2278 = vmatpush.msra.mxu0 0.0
        %2279 = vmatpush.msra.mxu0 0.0
        %2280 = vmatpush.msra.mxu0 0.0
        %2281 = vmatpush.msra.mxu0 0.0
        %2282 = vmatpush.msra.mxu0 0.0
        %2283 = vmatpush.msra.mxu0 0.0
        %2284 = vmatpush.msra.mxu0 0.0
        %2285 = vmatpush.msra.mxu0 0.0
        %2286 = vmatpush.msra.mxu0 0.0
        %2287 = vmatpush.msra.mxu0 0.0
        %2288 = vmatpush.msra.mxu0 %v1422
        %2289 = vmatpush.msra.mxu0 %v1421
        %2290 = vmatpush.msra.mxu0 %v1420
        %2291 = vmatpush.msra.mxu0 %v1419
        %2292 = vmatmul.f32.gmra.mxu0 %v2274
        %v2293 = vpop.f32.mrf.mxu0
        %v2294 = vadd.f32 %v1423, %v2293
        %2295 = vdwg.mxu0
        %v2297 = vrot.slane %v2294, 4
        %v2299 = vadd.f32 %v1412, %v2297
        %v2300 = vxor.u32 %v2299, 2147483648
        %v2301 = vmul.f32 %v2300, 1.442695
        %v2302 = vpow.pop %v2301
        %v2303 = vadd.f32 %v2302, 1.0
        %v2304 = vrcp.pop %v2303
        %v2305 = vmul.f32 %v2303, %v2304
        %v2306 = vsub.f32 1.0, %v2305
        %v2307 = vmul.f32 %v2304, %v2306
        %v2308 = vadd.f32 %v2304, %v2307
        %vm2309 = vweird.f32 %v2303
        %vm2310 = vweird.f32 %v2304
        %vm2311 = vmor %vm2309, %vm2310
        %v2312 = vsel %vm2311, %v2304, %v2308
        %v2313 = vand.u32 2147483647, %v2303
        %vm2314 = vcmp.eq.f32.partialorder %v2313, 8.507059e+37
        %v2315 = vand.u32 %v2303, 2147483648
        %v2316 = vor.u32 1.1754944e-38, %v2315
        %v2317 = vsel %vm2314, %v2316, %v2312
        %v2318 = vmul.f32 1.0, %v2317
        %2319 = vrot.lane.b32.xlu0 %v2297, 64
        %v2320 = vpop.permute.xlu0 %2319
        %v2322 = vmul.f32 %v2318, %v2320
        %2324 = vrot.lane.b32.xlu0 %v2322, 64
        %v2325 = vpop.permute.xlu0 %2324
        %v2327 = vadd.f32 %v1412, %v2325
        %v2328 = vtanh.pop %v2327
        %v2329 = vsub.f32 1.0, %v2318
        %2331 = vrot.lane.b32.xlu0 %v2328, 96
        %v2332 = vpop.permute.xlu0 %2331
        %v2334 = vmul.f32 %v2329, %v2332
        %v2335 = vrot.slane %v2269, 1
        %v2337 = vmul.f32 %v2318, %v2335
        %v2338 = vadd.f32 %v2334, %v2337
        %v2339 = vmul.f32 %v2338, %v1809
        %v2340 = vmul.f32 %v2269, %v1812
        %v2342 = vrot.slane %v2340, 1
        %v2344 = vadd.f32 %v2339, %v2342
        %v2346 = vrot.slane %v2344, 4
        %2347 = vrot.lane.b32.xlu0 %v2346, 96
        %v2348 = vpop.permute.xlu0 %2347
        %v2349 = vsel %vm1362, %v2348, 0
        %2351 = vmatpush.msra.mxu0 0.0
        %2352 = vmatpush.msra.mxu0 0.0
        %2353 = vmatpush.msra.mxu0 0.0
        %2354 = vmatpush.msra.mxu0 0.0
        %2355 = vmatpush.msra.mxu0 0.0
        %2356 = vmatpush.msra.mxu0 0.0
        %2357 = vmatpush.msra.mxu0 0.0
        %2358 = vmatpush.msra.mxu0 0.0
        %2359 = vmatpush.msra.mxu0 0.0
        %2360 = vmatpush.msra.mxu0 0.0
        %2361 = vmatpush.msra.mxu0 0.0
        %2362 = vmatpush.msra.mxu0 0.0
        %2363 = vmatpush.msra.mxu0 %v1422
        %2364 = vmatpush.msra.mxu0 %v1421
        %2365 = vmatpush.msra.mxu0 %v1420
        %2366 = vmatpush.msra.mxu0 %v1419
        %2367 = vmatmul.f32.gmra.mxu0 %v2349
        %v2368 = vpop.f32.mrf.mxu0
        %v2369 = vadd.f32 %v1423, %v2368
        %2370 = vdwg.mxu0
        %v2372 = vrot.slane %v2369, 5
        %v2374 = vadd.f32 %v1412, %v2372
        %v2375 = vxor.u32 %v2374, 2147483648
        %v2376 = vmul.f32 %v2375, 1.442695
        %v2377 = vpow.pop %v2376
        %v2378 = vadd.f32 %v2377, 1.0
        %v2379 = vrcp.pop %v2378
        %v2380 = vmul.f32 %v2378, %v2379
        %v2381 = vsub.f32 1.0, %v2380
        %v2382 = vmul.f32 %v2379, %v2381
        %v2383 = vadd.f32 %v2379, %v2382
        %vm2384 = vweird.f32 %v2378
        %vm2385 = vweird.f32 %v2379
        %vm2386 = vmor %vm2384, %vm2385
        %v2387 = vsel %vm2386, %v2379, %v2383
        %v2388 = vand.u32 2147483647, %v2378
        %vm2389 = vcmp.eq.f32.partialorder %v2388, 8.507059e+37
        %v2390 = vand.u32 %v2378, 2147483648
        %v2391 = vor.u32 1.1754944e-38, %v2390
        %v2392 = vsel %vm2389, %v2391, %v2387
        %v2393 = vmul.f32 1.0, %v2392
        %2394 = vrot.lane.b32.xlu0 %v2372, 64
        %v2395 = vpop.permute.xlu0 %2394
        %v2397 = vmul.f32 %v2393, %v2395
        %2399 = vrot.lane.b32.xlu0 %v2397, 64
        %v2400 = vpop.permute.xlu0 %2399
        %v2402 = vadd.f32 %v1412, %v2400
        %v2403 = vtanh.pop %v2402
        %v2404 = vsub.f32 1.0, %v2393
        %2406 = vrot.lane.b32.xlu0 %v2403, 96
        %v2407 = vpop.permute.xlu0 %2406
        %v2409 = vmul.f32 %v2404, %v2407
        %v2410 = vrot.slane %v2344, 1
        %v2412 = vmul.f32 %v2393, %v2410
        %v2413 = vadd.f32 %v2409, %v2412
        %v2414 = vmul.f32 %v2413, %v1728
        %v2415 = vmul.f32 %v2344, %v1731
        %v2417 = vrot.slane %v2415, 1
        %v2419 = vadd.f32 %v2414, %v2417
        %v2421 = vrot.slane %v2419, 3
        %2422 = vrot.lane.b32.xlu0 %v2421, 96
        %v2423 = vpop.permute.xlu0 %2422
        %v2424 = vsel %vm1362, %v2423, 0
        %2426 = vmatpush.msra.mxu0 0.0
        %2427 = vmatpush.msra.mxu0 0.0
        %2428 = vmatpush.msra.mxu0 0.0
        %2429 = vmatpush.msra.mxu0 0.0
        %2430 = vmatpush.msra.mxu0 0.0
        %2431 = vmatpush.msra.mxu0 0.0
        %2432 = vmatpush.msra.mxu0 0.0
        %2433 = vmatpush.msra.mxu0 0.0
        %2434 = vmatpush.msra.mxu0 0.0
        %2435 = vmatpush.msra.mxu0 0.0
        %2436 = vmatpush.msra.mxu0 0.0
        %2437 = vmatpush.msra.mxu0 0.0
        %2438 = vmatpush.msra.mxu0 %v1422
        %2439 = vmatpush.msra.mxu0 %v1421
        %2440 = vmatpush.msra.mxu0 %v1420
        %2441 = vmatpush.msra.mxu0 %v1419
        %2442 = vmatmul.f32.gmra.mxu0 %v2424
        %v2443 = vpop.f32.mrf.mxu0
        %v2444 = vadd.f32 %v1423, %v2443
        %2445 = vdwg.mxu0
        %v2447 = vrot.slane %v2444, 6
        %v2449 = vadd.f32 %v1412, %v2447
        %v2450 = vxor.u32 %v2449, 2147483648
        %v2451 = vmul.f32 %v2450, 1.442695
        %v2452 = vpow.pop %v2451
        %v2453 = vadd.f32 %v2452, 1.0
        %v2454 = vrcp.pop %v2453
        %v2455 = vmul.f32 %v2453, %v2454
        %v2456 = vsub.f32 1.0, %v2455
        %v2457 = vmul.f32 %v2454, %v2456
        %v2458 = vadd.f32 %v2454, %v2457
        %vm2459 = vweird.f32 %v2453
        %vm2460 = vweird.f32 %v2454
        %vm2461 = vmor %vm2459, %vm2460
        %v2462 = vsel %vm2461, %v2454, %v2458
        %v2463 = vand.u32 2147483647, %v2453
        %vm2464 = vcmp.eq.f32.partialorder %v2463, 8.507059e+37
        %v2465 = vand.u32 %v2453, 2147483648
        %v2466 = vor.u32 1.1754944e-38, %v2465
        %v2467 = vsel %vm2464, %v2466, %v2462
        %v2468 = vmul.f32 1.0, %v2467
        %2469 = vrot.lane.b32.xlu0 %v2447, 64
        %v2470 = vpop.permute.xlu0 %2469
        %v2472 = vmul.f32 %v2468, %v2470
        %2474 = vrot.lane.b32.xlu0 %v2472, 64
        %v2475 = vpop.permute.xlu0 %2474
        %v2477 = vadd.f32 %v1412, %v2475
        %v2478 = vtanh.pop %v2477
        %v2479 = vsub.f32 1.0, %v2468
        %2481 = vrot.lane.b32.xlu0 %v2478, 96
        %v2482 = vpop.permute.xlu0 %2481
        %v2484 = vmul.f32 %v2479, %v2482
        %v2485 = vrot.slane %v2419, 1
        %v2487 = vmul.f32 %v2468, %v2485
        %v2488 = vadd.f32 %v2484, %v2487
        %v2489 = vmul.f32 %v2488, %v1647
        %v2490 = vmul.f32 %v2419, %v1650
        %v2492 = vrot.slane %v2490, 1
        %v2494 = vadd.f32 %v2489, %v2492
        %v2496 = vrot.slane %v2494, 2
        %2497 = vrot.lane.b32.xlu0 %v2496, 96
        %v2498 = vpop.permute.xlu0 %2497
        %v2499 = vsel %vm1362, %v2498, 0
        %2501 = vmatpush.msra.mxu0 0.0
        %2502 = vmatpush.msra.mxu0 0.0
        %2503 = vmatpush.msra.mxu0 0.0
        %2504 = vmatpush.msra.mxu0 0.0
        %2505 = vmatpush.msra.mxu0 0.0
        %2506 = vmatpush.msra.mxu0 0.0
        %2507 = vmatpush.msra.mxu0 0.0
        %2508 = vmatpush.msra.mxu0 0.0
        %2509 = vmatpush.msra.mxu0 0.0
        %2510 = vmatpush.msra.mxu0 0.0
        %2511 = vmatpush.msra.mxu0 0.0
        %2512 = vmatpush.msra.mxu0 0.0
        %2513 = vmatpush.msra.mxu0 %v1422
        %2514 = vmatpush.msra.mxu0 %v1421
        %2515 = vmatpush.msra.mxu0 %v1420
        %2516 = vmatpush.msra.mxu0 %v1419
        %2517 = vmatmul.f32.gmra.mxu0 %v2499
        %v2518 = vpop.f32.mrf.mxu0
        %v2519 = vadd.f32 %v1423, %v2518
        %2520 = vdwg.mxu0
        %v2522 = vrot.slane %v2519, 7
        %v2524 = vadd.f32 %v1412, %v2522
        %v2525 = vxor.u32 %v2524, 2147483648
        %v2526 = vmul.f32 %v2525, 1.442695
        %v2527 = vpow.pop %v2526
        %v2528 = vadd.f32 %v2527, 1.0
        %v2529 = vrcp.pop %v2528
        %v2530 = vmul.f32 %v2528, %v2529
        %v2531 = vsub.f32 1.0, %v2530
        %v2532 = vmul.f32 %v2529, %v2531
        %v2533 = vadd.f32 %v2529, %v2532
        %vm2534 = vweird.f32 %v2528
        %vm2535 = vweird.f32 %v2529
        %vm2536 = vmor %vm2534, %vm2535
        %v2537 = vsel %vm2536, %v2529, %v2533
        %v2538 = vand.u32 2147483647, %v2528
        %vm2539 = vcmp.eq.f32.partialorder %v2538, 8.507059e+37
        %v2540 = vand.u32 %v2528, 2147483648
        %v2541 = vor.u32 1.1754944e-38, %v2540
        %v2542 = vsel %vm2539, %v2541, %v2537
        %v2543 = vmul.f32 1.0, %v2542
        %2544 = vrot.lane.b32.xlu0 %v2522, 64
        %v2545 = vpop.permute.xlu0 %2544
        %v2547 = vmul.f32 %v2543, %v2545
        %2549 = vrot.lane.b32.xlu0 %v2547, 64
        %v2550 = vpop.permute.xlu0 %2549
        %v2552 = vadd.f32 %v1412, %v2550
        %v2553 = vtanh.pop %v2552
        %v2554 = vsub.f32 1.0, %v2543
        %2556 = vrot.lane.b32.xlu0 %v2553, 96
        %v2557 = vpop.permute.xlu0 %2556
        %v2559 = vmul.f32 %v2554, %v2557
        %v2560 = vrot.slane %v2494, 1
        %v2562 = vmul.f32 %v2543, %v2560
        %v2563 = vadd.f32 %v2559, %v2562
        %v2564 = vmul.f32 %v2563, %v1566
        %v2565 = vmul.f32 %v2494, %v1569
        %v2567 = vrot.slane %v2565, 1
        %v2569 = vadd.f32 %v2564, %v2567
        %v2571 = vrot.slane %v2569, 1
        %2572 = vrot.lane.b32.xlu0 %v2571, 96
        %v2573 = vpop.permute.xlu0 %2572
        %v2574 = vsel %vm1362, %v2573, 0
        %2576 = vmatpush.msra.mxu0 0.0
        %2577 = vmatpush.msra.mxu0 0.0
        %2578 = vmatpush.msra.mxu0 0.0
        %2579 = vmatpush.msra.mxu0 0.0
        %2580 = vmatpush.msra.mxu0 0.0
        %2581 = vmatpush.msra.mxu0 0.0
        %2582 = vmatpush.msra.mxu0 0.0
        %2583 = vmatpush.msra.mxu0 0.0
        %2584 = vmatpush.msra.mxu0 0.0
        %2585 = vmatpush.msra.mxu0 0.0
        %2586 = vmatpush.msra.mxu0 0.0
        %2587 = vmatpush.msra.mxu0 0.0
        %2588 = vmatpush.msra.mxu0 %v1422
        %2589 = vmatpush.msra.mxu0 %v1421
        %2590 = vmatpush.msra.mxu0 %v1420
        %2591 = vmatpush.msra.mxu0 %v1419
        %2592 = vmatmul.f32.gmra.mxu0 %v2574
        %v2593 = vpop.f32.mrf.mxu0
        %v2594 = vadd.f32 %v1423, %v2593
        %2595 = vdwg.mxu0
        %v2596 = vadd.f32 %v1412, %v2594
        %v2597 = vxor.u32 %v2596, 2147483648
        %v2598 = vmul.f32 %v2597, 1.442695
        %v2599 = vpow.pop %v2598
        %v2600 = vadd.f32 %v2599, 1.0
        %v2601 = vrcp.pop %v2600
        %v2602 = vmul.f32 %v2600, %v2601
        %v2603 = vsub.f32 1.0, %v2602
        %v2604 = vmul.f32 %v2601, %v2603
        %v2605 = vadd.f32 %v2601, %v2604
        %vm2606 = vweird.f32 %v2600
        %vm2607 = vweird.f32 %v2601
        %vm2608 = vmor %vm2606, %vm2607
        %v2609 = vsel %vm2608, %v2601, %v2605
        %v2610 = vand.u32 2147483647, %v2600
        %vm2611 = vcmp.eq.f32.partialorder %v2610, 8.507059e+37
        %v2612 = vand.u32 %v2600, 2147483648
        %v2613 = vor.u32 1.1754944e-38, %v2612
        %v2614 = vsel %vm2611, %v2613, %v2609
        %v2615 = vmul.f32 1.0, %v2614
        %2617 = vrot.lane.b32.xlu0 %v2594, 64
        %v2618 = vpop.permute.xlu0 %2617
        %v2620 = vmul.f32 %v2615, %v2618
        %2622 = vrot.lane.b32.xlu0 %v2620, 64
        %v2623 = vpop.permute.xlu0 %2622
        %v2625 = vadd.f32 %v1412, %v2623
        %v2626 = vtanh.pop %v2625
        %v2627 = vsub.f32 1.0, %v2615
        %2629 = vrot.lane.b32.xlu0 %v2626, 96
        %v2630 = vpop.permute.xlu0 %2629
        %v2632 = vmul.f32 %v2627, %v2630
        %v2634 = vmul.f32 %v2615, %v2571
        %v2635 = vadd.f32 %v2632, %v2634
        %v2636 = vmul.f32 %v2635, %v1489
        %vm2637 = vcmask 1040384
        %v2638 = vsel %vm2637, %v1490, %v1567
        %vm2639 = vcmask 1041408
        %v2640 = vsel %vm2639, %v2638, %v1648
        %vm2641 = vcmask 1042432
        %v2642 = vsel %vm2641, %v2640, %v1729
        %vm2643 = vcmask 1043456
        %v2644 = vsel %vm2643, %v2642, %v1810
        %vm2645 = vcmask 1044480
        %v2646 = vsel %vm2645, %v2644, %v1891
        %vm2647 = vcmask 1045504
        %v2648 = vsel %vm2647, %v2646, %v1972
        %vm2649 = vcmask 1046528
        %v2650 = vsel %vm2649, %v2648, %v2053
        %v2651 = vsel %vm2637, %v2636, %v2564
        %v2652 = vsel %vm2639, %v2651, %v2489
        %v2653 = vsel %vm2641, %v2652, %v2414
        %v2654 = vsel %vm2643, %v2653, %v2339
        %v2655 = vsel %vm2645, %v2654, %v2264
        %v2656 = vsel %vm2647, %v2655, %v2189
        %v2657 = vsel %vm2649, %v2656, %v2115
        %v2658 = vadd.f32 %v2650, %v2657
        %v2659 = vmul.f32 %v2658, 0.5
        %v2660 = vlaneseq
        %v2661 = vshrl.u32 %v2660, 7
        %v2662 = vld [vmem:[%s23] sm:$0xff]
        %v2663 = vld [vmem:[%s23 + $0x8] sm:$0xff]
        %v2664 = vld [vmem:[%s23 + $0x10] sm:$0xff]
        %v2665 = vld [vmem:[%s23 + $0x18] sm:$0xff]
        %v2666 = vld [vmem:[%s25] sm:$0x1]
        %v2668 = vperm.slane %v2666, 0
        %2671 = vrot.lane.b32.xlu0 %v2659, 96
        %v2672 = vpop.permute.xlu0 %2671
        %v2673 = vsel %vm1362, %v2672, 0
        %2675 = vmatpush.msra.mxu0 0.0
        %2676 = vmatpush.msra.mxu0 0.0
        %2677 = vmatpush.msra.mxu0 0.0
        %2678 = vmatpush.msra.mxu0 0.0
        %2679 = vmatpush.msra.mxu0 0.0
        %2680 = vmatpush.msra.mxu0 0.0
        %2681 = vmatpush.msra.mxu0 0.0
        %2682 = vmatpush.msra.mxu0 0.0
        %2683 = vmatpush.msra.mxu0 0.0
        %2684 = vmatpush.msra.mxu0 0.0
        %2685 = vmatpush.msra.mxu0 0.0
        %2686 = vmatpush.msra.mxu0 0.0
        %2687 = vmatpush.msra.mxu0 %v2665
        %2688 = vmatpush.msra.mxu0 %v2664
        %2689 = vmatpush.msra.mxu0 %v2663
        %2690 = vmatpush.msra.mxu0 %v2662
        %2691 = vmatmul.f32.gmra.mxu0 %v2673
        %v2692 = vpop.f32.mrf.mxu0
        %v2693 = vadd.f32 %v2668, %v2692
        %2694 = vdwg.mxu0
        %v2695 = vstv %s1352
        %vm2696 = vcmp.lt.s32.totalorder %v2661, %v2695
        %v2697 = vsel %vm2696, 1, 0
        %vm2698 = vcmp.eq.s32.totalorder %v2697, 1
        %v2699 = vsel %vm2698, %v2693, -1e+30
        %v2700 = vsel %vm1362, %v2699, -inf
        %v2701 = vrot.slane %v2700, 4
        %v2702 = vmax.f32 %v2700, %v2701
        %v2703 = vrot.slane %v2702, 2
        %v2704 = vmax.f32 %v2702, %v2703
        %v2705 = vrot.slane %v2704, 1
        %v2706 = vmax.f32 %v2704, %v2705
        %v2707 = vsub.f32 %v2699, %v2706
        %v2708 = vmul.f32 %v2707, 1.442695
        %v2709 = vpow.pop %v2708
        %v2710 = vsel %vm1362, %v2709, 0.0
        %v2711 = vrot.slane %v2710, 4
        %v2712 = vadd.f32 %v2710, %v2711
        %v2713 = vrot.slane %v2712, 2
        %v2714 = vadd.f32 %v2712, %v2713
        %v2715 = vrot.slane %v2714, 1
        %v2716 = vadd.f32 %v2714, %v2715
        %v2717 = vrcp.pop %v2716
        %v2718 = vmul.f32 %v2716, %v2717
        %v2719 = vsub.f32 1.0, %v2718
        %v2720 = vmul.f32 %v2717, %v2719
        %v2721 = vadd.f32 %v2717, %v2720
        %vm2722 = vweird.f32 %v2716
        %vm2723 = vweird.f32 %v2717
        %vm2724 = vmor %vm2722, %vm2723
        %v2725 = vsel %vm2724, %v2717, %v2721
        %v2726 = vand.u32 2147483647, %v2716
        %vm2727 = vcmp.eq.f32.partialorder %v2726, 8.507059e+37
        %v2728 = vand.u32 %v2716, 2147483648
        %v2729 = vor.u32 1.1754944e-38, %v2728
        %v2730 = vsel %vm2727, %v2729, %v2725
        %v2731 = vmul.f32 %v2709, %v2730
        %2732 = vst.msk [vmem:[%s1342] sm:$0xff] %vm1362, %v2731
        %2734 = vrot.lane.b32.xlu0 %v2731, 32
        %v2735 = vpop.permute.xlu0 %2734
        %v2737 = vmul.f32 %v2659, %v2735
        %vm2738 = vcmask 523520
        %v2739 = vsel %vm2738, %v2737, 0.0
        %v2740 = vrot.slane %v2739, 4
        %v2741 = vadd.f32 %v2739, %v2740
        %v2742 = vrot.slane %v2741, 2
        %v2743 = vadd.f32 %v2741, %v2742
        %v2744 = vrot.slane %v2743, 1
        %v2745 = vadd.f32 %v2743, %v2744
        %v2746 = vld [vmem:[%s33] sm:$0xff]
        %v2747 = vld [vmem:[%s33 + $0x8] sm:$0xff]
        %v2748 = vld [vmem:[%s33 + $0x10] sm:$0xff]
        %v2749 = vld [vmem:[%s33 + $0x18] sm:$0xff]
        %v2750 = vld [vmem:[%s1351] sm:$0xff]
        %v2751 = vld [vmem:[%s1351 + $0x8] sm:$0xff]
        %v2752 = vld [vmem:[%s27] sm:$0xff]
        %v2753 = vld [vmem:[%s27 + $0x8] sm:$0xff]
        %v2754 = vld [vmem:[%s27 + $0x10] sm:$0xff]
        %v2755 = vld [vmem:[%s27 + $0x18] sm:$0xff]
        %v2756 = vld [vmem:[%s27 + $0x20] sm:$0xff]
        %v2757 = vld [vmem:[%s27 + $0x28] sm:$0xff]
        %v2758 = vld [vmem:[%s27 + $0x30] sm:$0xff]
        %v2759 = vld [vmem:[%s27 + $0x38] sm:$0xff]
        %v2760 = vld [vmem:[%s29] sm:$0x1]
        %v2762 = vperm.slane %v2760, 0
        %vm2764 = vcmask 523264
        %v2766 = vsel %vm2764, %v2750, 0
        %v2769 = vsel %vm2764, %v2751, 0
        %2771 = vmatpush.msra.mxu0 0.0
        %2772 = vmatpush.msra.mxu0 0.0
        %2773 = vmatpush.msra.mxu0 0.0
        %2774 = vmatpush.msra.mxu0 0.0
        %2775 = vmatpush.msra.mxu0 0.0
        %2776 = vmatpush.msra.mxu0 0.0
        %2777 = vmatpush.msra.mxu0 0.0
        %2778 = vmatpush.msra.mxu0 0.0
        %2779 = vmatpush.msra.mxu0 %v2759
        %2780 = vmatpush.msra.mxu0 %v2758
        %2781 = vmatpush.msra.mxu0 %v2757
        %2782 = vmatpush.msra.mxu0 %v2756
        %2783 = vmatpush.msra.mxu0 %v2755
        %2784 = vmatpush.msra.mxu0 %v2754
        %2785 = vmatpush.msra.mxu0 %v2753
        %2786 = vmatpush.msra.mxu0 %v2752
        %2787 = vmatmul.f32.gmra.mxu0 %v2766
        %v2788 = vpop.f32.mrf.mxu0
        %v2789 = vadd.f32 %v2762, %v2788
        %2790 = vmatmul.f32.gmra.mxu0 %v2769
        %v2791 = vpop.f32.mrf.mxu0
        %v2792 = vadd.f32 %v2762, %v2791
        %2793 = vdwg.mxu0
        %2795 = vrot.lane.b32.xlu0 %v2745, 96
        %v2796 = vpop.permute.xlu0 %2795
        %v2798 = vadd.f32 %v2789, %v2796
        %v2799 = vadd.f32 %v2792, %v2796
        %v2800 = vld [vmem:[%s31] sm:$0xff]
        %v2801 = vld [vmem:[%s31 + $0x8] sm:$0xff]
        %v2802 = vadd.f32 %v2798, %v2800
        %v2803 = vadd.f32 %v2799, %v2801
        %v2804 = vld [vmem:[%s35] sm:$0xff]
        %v2805 = vld [vmem:[%s35 + $0x8] sm:$0xff]
        %v2806 = vld [vmem:[%s35 + $0x10] sm:$0xff]
        %v2807 = vld [vmem:[%s35 + $0x18] sm:$0xff]
        %v2809 = vsel %vm1362, %v2802, 0
        %v2812 = vsel %vm1362, %v2803, 0
        %2814 = vmatpush.msra.mxu0 0.0
        %2815 = vmatpush.msra.mxu0 0.0
        %2816 = vmatpush.msra.mxu0 0.0
        %2817 = vmatpush.msra.mxu0 0.0
        %2818 = vmatpush.msra.mxu0 0.0
        %2819 = vmatpush.msra.mxu0 0.0
        %2820 = vmatpush.msra.mxu0 0.0
        %2821 = vmatpush.msra.mxu0 0.0
        %2822 = vmatpush.msra.mxu0 0.0
        %2823 = vmatpush.msra.mxu0 0.0
        %2824 = vmatpush.msra.mxu0 0.0
        %2825 = vmatpush.msra.mxu0 0.0
        %2826 = vmatpush.msra.mxu0 %v2807
        %2827 = vmatpush.msra.mxu0 %v2806
        %2828 = vmatpush.msra.mxu0 %v2805
        %2829 = vmatpush.msra.mxu0 %v2804
        %2830 = vmatmul.f32.gmra.mxu0 %v2809
        %v2831 = vpop.f32.mrf.mxu0
        %v2832 = vadd.f32 0.0, %v2831
        %2833 = vmatmul.f32.gmra.mxu0 %v2812
        %v2834 = vpop.f32.mrf.mxu0
        %v2835 = vadd.f32 0.0, %v2834
        %2836 = vdwg.mxu0
        %v2837 = vld [vmem:[%s37] sm:$0x1]
        %v2838 = vld [vmem:[%s39] sm:$0x1]
        %v2839 = vsel %vm1362, %v2832, 0.0
        %v2840 = vsel %vm1362, %v2835, 0.0
        %v2841 = vadd.f32 %v2839, %v2840
        %v2842 = vrot.slane %v2841, 4
        %v2843 = vadd.f32 %v2841, %v2842
        %v2844 = vrot.slane %v2843, 2
        %v2845 = vadd.f32 %v2843, %v2844
        %v2846 = vrot.slane %v2845, 1
        %v2847 = vadd.f32 %v2845, %v2846
        %v2848 = vmul.f32 %v2832, %v2832
        %v2849 = vmul.f32 %v2835, %v2835
        %v2850 = vsel %vm1362, %v2848, 0.0
        %v2851 = vsel %vm1362, %v2849, 0.0
        %v2852 = vadd.f32 %v2850, %v2851
        %v2853 = vrot.slane %v2852, 4
        %v2854 = vadd.f32 %v2852, %v2853
        %v2855 = vrot.slane %v2854, 2
        %v2856 = vadd.f32 %v2854, %v2855
        %v2857 = vrot.slane %v2856, 1
        %v2858 = vadd.f32 %v2856, %v2857
        %v2860 = vsel %vm1362, %v2847, 0
        %2862 = vmatpush.msra.mxu0 0.0
        %2863 = vmatpush.msra.mxu0 0.0
        %2864 = vmatpush.msra.mxu0 0.0
        %2865 = vmatpush.msra.mxu0 0.0
        %2866 = vmatpush.msra.mxu0 0.0
        %2867 = vmatpush.msra.mxu0 0.0
        %2868 = vmatpush.msra.mxu0 0.0
        %2869 = vmatpush.msra.mxu0 0.0
        %2870 = vmatpush.msra.mxu0 0.0
        %2871 = vmatpush.msra.mxu0 0.0
        %2872 = vmatpush.msra.mxu0 0.0
        %2873 = vmatpush.msra.mxu0 0.0
        %2874 = vmatpush.msra.mxu0 %v2749
        %2875 = vmatpush.msra.mxu0 %v2748
        %2876 = vmatpush.msra.mxu0 %v2747
        %2877 = vmatpush.msra.mxu0 %v2746
        %2878 = vmatmul.f32.gmra.mxu0 %v2860
        %v2879 = vpop.f32.mrf.mxu0
        %v2880 = vadd.f32 0.0, %v2879
        %2881 = vdwg.mxu0
        %v2882 = vmul.f32 %v2880, 0.0078125
        %v2884 = vsel %vm1362, %v2858, 0
        %2886 = vmatpush.msra.mxu0 0.0
        %2887 = vmatpush.msra.mxu0 0.0
        %2888 = vmatpush.msra.mxu0 0.0
        %2889 = vmatpush.msra.mxu0 0.0
        %2890 = vmatpush.msra.mxu0 0.0
        %2891 = vmatpush.msra.mxu0 0.0
        %2892 = vmatpush.msra.mxu0 0.0
        %2893 = vmatpush.msra.mxu0 0.0
        %2894 = vmatpush.msra.mxu0 0.0
        %2895 = vmatpush.msra.mxu0 0.0
        %2896 = vmatpush.msra.mxu0 0.0
        %2897 = vmatpush.msra.mxu0 0.0
        %2898 = vmatpush.msra.mxu0 %v2749
        %2899 = vmatpush.msra.mxu0 %v2748
        %2900 = vmatpush.msra.mxu0 %v2747
        %2901 = vmatpush.msra.mxu0 %v2746
        %2902 = vmatmul.f32.gmra.mxu0 %v2884
        %v2903 = vpop.f32.mrf.mxu0
        %v2904 = vadd.f32 0.0, %v2903
        %2905 = vdwg.mxu0
        %v2906 = vmul.f32 %v2904, 0.0078125
        %v2907 = vmul.f32 %v2882, %v2882
        %v2908 = vsub.f32 %v2906, %v2907
        %v2909 = vadd.f32 %v2908, 1e-05
        %v2910 = vrsqrt.pop %v2909
        %v2911 = vmul.f32 %v2910, %v2909
        %v2912 = vmul.f32 %v2911, %v2910
        %v2913 = vmul.f32 0.5, %v2912
        %v2914 = vsub.f32 1.5, %v2913
        %v2915 = vmul.f32 %v2910, %v2914
        %vm2916 = vweird.f32 %v2909
        %vm2917 = vweird.f32 %v2910
        %vm2918 = vmor %vm2916, %vm2917
        %v2919 = vsel %vm2918, %v2910, %v2915
        %v2920 = vperm.slane %v2882, 0
        %v2921 = vsub.f32 %v2832, %v2920
        %v2922 = vsub.f32 %v2835, %v2920
        %v2923 = vperm.slane %v2919, 0
        %v2924 = vmul.f32 %v2921, %v2923
        %v2925 = vmul.f32 %v2922, %v2923
        %v2927 = vperm.slane %v2837, 0
        %v2929 = vmul.f32 %v2924, %v2927
        %v2930 = vmul.f32 %v2925, %v2927
        %v2932 = vperm.slane %v2838, 0
        %v2934 = vadd.f32 %v2929, %v2932
        %v2935 = vadd.f32 %v2930, %v2932
        %v2936 = vmax.f32 %v2934, 0.0
        %v2937 = vmax.f32 %v2935, 0.0
        %2938 = vst.msk [vmem:[%s1321] sm:$0xff] %vm1362, %v2936
        %2939 = vst.msk [vmem:[%s1321 + $0x8] sm:$0xff] %vm1362, %v2937
        %v2940 = vld [vmem:[%s41] sm:$0xff]
        %v2941 = vld [vmem:[%s43] sm:$0xff]
        %v2942 = vld [vmem:[%s45] sm:$0xff]
        %v2943 = vld [vmem:[%s47] sm:$0xff]
        %v2944 = vld [vmem:[%s47 + $0x8] sm:$0xff]
        %v2945 = vld [vmem:[%s47 + $0x10] sm:$0xff]
        %v2946 = vld [vmem:[%s47 + $0x18] sm:$0xff]
        %v2947 = vld [vmem:[%s47 + $0x20] sm:$0xff]
        %v2948 = vld [vmem:[%s47 + $0x28] sm:$0xff]
        %v2949 = vld [vmem:[%s47 + $0x30] sm:$0xff]
        %v2950 = vld [vmem:[%s47 + $0x38] sm:$0xff]
        %v2951 = vld [vmem:[%s47 + $0x40] sm:$0xff]
        %v2952 = vld [vmem:[%s47 + $0x48] sm:$0xff]
        %v2953 = vld [vmem:[%s47 + $0x50] sm:$0xff]
        %v2954 = vld [vmem:[%s47 + $0x58] sm:$0xff]
        %v2955 = vld [vmem:[%s49] sm:$0x1]
        %v2956 = vld [vmem:[%s51] sm:$0x1]
        %v2957 = vld [vmem:[%s53] sm:$0xff]
        %v2958 = vld [vmem:[%s53 + $0x8] sm:$0xff]
        %v2959 = vld [vmem:[%s53 + $0x10] sm:$0xff]
        %v2960 = vld [vmem:[%s53 + $0x18] sm:$0xff]
        %v2961 = vld [vmem:[%s55] sm:$0x1]
        %v2962 = vld [vmem:[%s57] sm:$0x1]
        %v2963 = vld [vmem:[%s59] sm:$0x1]
        %vm2964 = vcmask 130048
        %v2966 = vsel %vm2964, %v2940, 0
        %2968 = vmatpush.msra.mxu0 0.0
        %2969 = vmatpush.msra.mxu0 0.0
        %2970 = vmatpush.msra.mxu0 0.0
        %2971 = vmatpush.msra.mxu0 0.0
        %2972 = vmatpush.msra.mxu0 0.0
        %2973 = vmatpush.msra.mxu0 0.0
        %2974 = vmatpush.msra.mxu0 0.0
        %2975 = vmatpush.msra.mxu0 0.0
        %2976 = vmatpush.msra.mxu0 0.0
        %2977 = vmatpush.msra.mxu0 0.0
        %2978 = vmatpush.msra.mxu0 0.0
        %2979 = vmatpush.msra.mxu0 0.0
        %2980 = vmatpush.msra.mxu0 0.0
        %2981 = vmatpush.msra.mxu0 0.0
        %2982 = vmatpush.msra.mxu0 %v2937
        %2983 = vmatpush.msra.mxu0 %v2936
        %2984 = vmatmul.f32.gmra.mxu0 %v2966
        %v2985 = vpop.f32.mrf.mxu0
        %v2986 = vadd.f32 0.0, %v2985
        %2987 = vdwg.mxu0
        %v2989 = vsel %vm2964, %v2941, 0
        %2991 = vmatpush.msra.mxu0 0.0
        %2992 = vmatpush.msra.mxu0 0.0
        %2993 = vmatpush.msra.mxu0 0.0
        %2994 = vmatpush.msra.mxu0 0.0
        %2995 = vmatpush.msra.mxu0 0.0
        %2996 = vmatpush.msra.mxu0 0.0
        %2997 = vmatpush.msra.mxu0 0.0
        %2998 = vmatpush.msra.mxu0 0.0
        %2999 = vmatpush.msra.mxu0 0.0
        %3000 = vmatpush.msra.mxu0 0.0
        %3001 = vmatpush.msra.mxu0 0.0
        %3002 = vmatpush.msra.mxu0 0.0
        %3003 = vmatpush.msra.mxu0 0.0
        %3004 = vmatpush.msra.mxu0 0.0
        %3005 = vmatpush.msra.mxu0 %v2937
        %3006 = vmatpush.msra.mxu0 %v2936
        %3007 = vmatmul.f32.gmra.mxu0 %v2989
        %v3008 = vpop.f32.mrf.mxu0
        %v3009 = vadd.f32 0.0, %v3008
        %3010 = vdwg.mxu0
        %v3012 = vsel %vm2964, %v2942, 0
        %3014 = vmatpush.msra.mxu0 0.0
        %3015 = vmatpush.msra.mxu0 0.0
        %3016 = vmatpush.msra.mxu0 0.0
        %3017 = vmatpush.msra.mxu0 0.0
        %3018 = vmatpush.msra.mxu0 0.0
        %3019 = vmatpush.msra.mxu0 0.0
        %3020 = vmatpush.msra.mxu0 0.0
        %3021 = vmatpush.msra.mxu0 0.0
        %3022 = vmatpush.msra.mxu0 0.0
        %3023 = vmatpush.msra.mxu0 0.0
        %3024 = vmatpush.msra.mxu0 0.0
        %3025 = vmatpush.msra.mxu0 0.0
        %3026 = vmatpush.msra.mxu0 0.0
        %3027 = vmatpush.msra.mxu0 0.0
        %3028 = vmatpush.msra.mxu0 %v2937
        %3029 = vmatpush.msra.mxu0 %v2936
        %3030 = vmatmul.f32.gmra.mxu0 %v3012
        %v3031 = vpop.f32.mrf.mxu0
        %v3032 = vadd.f32 0.0, %v3031
        %3033 = vdwg.mxu0
        %3035 = vrot.lane.b32.xlu0 %v3009, 32
        %v3036 = vpop.permute.xlu0 %3035
        %3039 = vrot.lane.b32.xlu0 %v3032, 64
        %v3040 = vpop.permute.xlu0 %3039
        %v3042 = vsel %vm1362, %v2986, %v3036
        %v3043 = vsel %vm2764, %v3042, %v3040
        %vm3044 = vcmask 785408
        %v3046 = vsel %vm3044, %v3043, 0
        %3048 = vmatpush.msra.mxu0 0.0
        %3049 = vmatpush.msra.mxu0 0.0
        %3050 = vmatpush.msra.mxu0 0.0
        %3051 = vmatpush.msra.mxu0 0.0
        %3052 = vmatpush.msra.mxu0 %v2954
        %3053 = vmatpush.msra.mxu0 %v2953
        %3054 = vmatpush.msra.mxu0 %v2952
        %3055 = vmatpush.msra.mxu0 %v2951
        %3056 = vmatpush.msra.mxu0 %v2950
        %3057 = vmatpush.msra.mxu0 %v2949
        %3058 = vmatpush.msra.mxu0 %v2948
        %3059 = vmatpush.msra.mxu0 %v2947
        %3060 = vmatpush.msra.mxu0 %v2946
        %3061 = vmatpush.msra.mxu0 %v2945
        %3062 = vmatpush.msra.mxu0 %v2944
        %3063 = vmatpush.msra.mxu0 %v2943
        %3064 = vmatmul.f32.gmra.mxu0 %v3046
        %v3065 = vpop.f32.mrf.mxu0
        %v3066 = vadd.f32 0.0, %v3065
        %3067 = vdwg.mxu0
        %v3068 = vsel %vm1362, %v3066, 0.0
        %v3069 = vrot.slane %v3068, 4
        %v3070 = vadd.f32 %v3068, %v3069
        %v3071 = vrot.slane %v3070, 2
        %v3072 = vadd.f32 %v3070, %v3071
        %v3073 = vrot.slane %v3072, 1
        %v3074 = vadd.f32 %v3072, %v3073
        %v3075 = vmul.f32 %v3066, %v3066
        %v3076 = vsel %vm1362, %v3075, 0.0
        %v3077 = vrot.slane %v3076, 4
        %v3078 = vadd.f32 %v3076, %v3077
        %v3079 = vrot.slane %v3078, 2
        %v3080 = vadd.f32 %v3078, %v3079
        %v3081 = vrot.slane %v3080, 1
        %v3082 = vadd.f32 %v3080, %v3081
        %v3084 = vsel %vm1362, %v3074, 0
        %3086 = vmatpush.msra.mxu0 0.0
        %3087 = vmatpush.msra.mxu0 0.0
        %3088 = vmatpush.msra.mxu0 0.0
        %3089 = vmatpush.msra.mxu0 0.0
        %3090 = vmatpush.msra.mxu0 0.0
        %3091 = vmatpush.msra.mxu0 0.0
        %3092 = vmatpush.msra.mxu0 0.0
        %3093 = vmatpush.msra.mxu0 0.0
        %3094 = vmatpush.msra.mxu0 0.0
        %3095 = vmatpush.msra.mxu0 0.0
        %3096 = vmatpush.msra.mxu0 0.0
        %3097 = vmatpush.msra.mxu0 0.0
        %3098 = vmatpush.msra.mxu0 %v2749
        %3099 = vmatpush.msra.mxu0 %v2748
        %3100 = vmatpush.msra.mxu0 %v2747
        %3101 = vmatpush.msra.mxu0 %v2746
        %3102 = vmatmul.f32.gmra.mxu0 %v3084
        %v3103 = vpop.f32.mrf.mxu0
        %v3104 = vadd.f32 0.0, %v3103
        %3105 = vdwg.mxu0
        %v3106 = vmul.f32 %v3104, 0.015625
        %v3108 = vsel %vm1362, %v3082, 0
        %3110 = vmatpush.msra.mxu0 0.0
        %3111 = vmatpush.msra.mxu0 0.0
        %3112 = vmatpush.msra.mxu0 0.0
        %3113 = vmatpush.msra.mxu0 0.0
        %3114 = vmatpush.msra.mxu0 0.0
        %3115 = vmatpush.msra.mxu0 0.0
        %3116 = vmatpush.msra.mxu0 0.0
        %3117 = vmatpush.msra.mxu0 0.0
        %3118 = vmatpush.msra.mxu0 0.0
        %3119 = vmatpush.msra.mxu0 0.0
        %3120 = vmatpush.msra.mxu0 0.0
        %3121 = vmatpush.msra.mxu0 0.0
        %3122 = vmatpush.msra.mxu0 %v2749
        %3123 = vmatpush.msra.mxu0 %v2748
        %3124 = vmatpush.msra.mxu0 %v2747
        %3125 = vmatpush.msra.mxu0 %v2746
        %3126 = vmatmul.f32.gmra.mxu0 %v3108
        %v3127 = vpop.f32.mrf.mxu0
        %v3128 = vadd.f32 0.0, %v3127
        %3129 = vdwg.mxu0
        %v3130 = vmul.f32 %v3128, 0.015625
        %v3131 = vmul.f32 %v3106, %v3106
        %v3132 = vsub.f32 %v3130, %v3131
        %v3133 = vadd.f32 %v3132, 1e-05
        %v3134 = vrsqrt.pop %v3133
        %v3135 = vmul.f32 %v3134, %v3133
        %v3136 = vmul.f32 %v3135, %v3134
        %v3137 = vmul.f32 0.5, %v3136
        %v3138 = vsub.f32 1.5, %v3137
        %v3139 = vmul.f32 %v3134, %v3138
        %vm3140 = vweird.f32 %v3133
        %vm3141 = vweird.f32 %v3134
        %vm3142 = vmor %vm3140, %vm3141
        %v3143 = vsel %vm3142, %v3134, %v3139
        %v3144 = vperm.slane %v3106, 0
        %v3145 = vsub.f32 %v3066, %v3144
        %v3146 = vperm.slane %v3143, 0
        %v3147 = vmul.f32 %v3145, %v3146
        %v3149 = vperm.slane %v2955, 0
        %v3151 = vmul.f32 %v3147, %v3149
        %v3153 = vperm.slane %v2956, 0
        %v3155 = vadd.f32 %v3151, %v3153
        %v3156 = vmax.f32 %v3155, 0.0
        %v3158 = vperm.slane %v2961, 0
        %v3161 = vsel %vm1362, %v3156, 0
        %3163 = vmatpush.msra.mxu0 0.0
        %3164 = vmatpush.msra.mxu0 0.0
        %3165 = vmatpush.msra.mxu0 0.0
        %3166 = vmatpush.msra.mxu0 0.0
        %3167 = vmatpush.msra.mxu0 0.0
        %3168 = vmatpush.msra.mxu0 0.0
        %3169 = vmatpush.msra.mxu0 0.0
        %3170 = vmatpush.msra.mxu0 0.0
        %3171 = vmatpush.msra.mxu0 0.0
        %3172 = vmatpush.msra.mxu0 0.0
        %3173 = vmatpush.msra.mxu0 0.0
        %3174 = vmatpush.msra.mxu0 0.0
        %3175 = vmatpush.msra.mxu0 %v2960
        %3176 = vmatpush.msra.mxu0 %v2959
        %3177 = vmatpush.msra.mxu0 %v2958
        %3178 = vmatpush.msra.mxu0 %v2957
        %3179 = vmatmul.f32.gmra.mxu0 %v3161
        %v3180 = vpop.f32.mrf.mxu0
        %v3181 = vadd.f32 %v3158, %v3180
        %3182 = vdwg.mxu0
        %v3183 = vsel %vm1362, %v3181, 0.0
        %v3184 = vrot.slane %v3183, 4
        %v3185 = vadd.f32 %v3183, %v3184
        %v3186 = vrot.slane %v3185, 2
        %v3187 = vadd.f32 %v3185, %v3186
        %v3188 = vrot.slane %v3187, 1
        %v3189 = vadd.f32 %v3187, %v3188
        %v3190 = vmul.f32 %v3181, %v3181
        %v3191 = vsel %vm1362, %v3190, 0.0
        %v3192 = vrot.slane %v3191, 4
        %v3193 = vadd.f32 %v3191, %v3192
        %v3194 = vrot.slane %v3193, 2
        %v3195 = vadd.f32 %v3193, %v3194
        %v3196 = vrot.slane %v3195, 1
        %v3197 = vadd.f32 %v3195, %v3196
        %v3199 = vsel %vm1362, %v3189, 0
        %3201 = vmatpush.msra.mxu0 0.0
        %3202 = vmatpush.msra.mxu0 0.0
        %3203 = vmatpush.msra.mxu0 0.0
        %3204 = vmatpush.msra.mxu0 0.0
        %3205 = vmatpush.msra.mxu0 0.0
        %3206 = vmatpush.msra.mxu0 0.0
        %3207 = vmatpush.msra.mxu0 0.0
        %3208 = vmatpush.msra.mxu0 0.0
        %3209 = vmatpush.msra.mxu0 0.0
        %3210 = vmatpush.msra.mxu0 0.0
        %3211 = vmatpush.msra.mxu0 0.0
        %3212 = vmatpush.msra.mxu0 0.0
        %3213 = vmatpush.msra.mxu0 %v2749
        %3214 = vmatpush.msra.mxu0 %v2748
        %3215 = vmatpush.msra.mxu0 %v2747
        %3216 = vmatpush.msra.mxu0 %v2746
        %3217 = vmatmul.f32.gmra.mxu0 %v3199
        %v3218 = vpop.f32.mrf.mxu0
        %v3219 = vadd.f32 0.0, %v3218
        %3220 = vdwg.mxu0
        %v3221 = vmul.f32 %v3219, 0.015625
        %v3223 = vsel %vm1362, %v3197, 0
        %3225 = vmatpush.msra.mxu0 0.0
        %3226 = vmatpush.msra.mxu0 0.0
        %3227 = vmatpush.msra.mxu0 0.0
        %3228 = vmatpush.msra.mxu0 0.0
        %3229 = vmatpush.msra.mxu0 0.0
        %3230 = vmatpush.msra.mxu0 0.0
        %3231 = vmatpush.msra.mxu0 0.0
        %3232 = vmatpush.msra.mxu0 0.0
        %3233 = vmatpush.msra.mxu0 0.0
        %3234 = vmatpush.msra.mxu0 0.0
        %3235 = vmatpush.msra.mxu0 0.0
        %3236 = vmatpush.msra.mxu0 0.0
        %3237 = vmatpush.msra.mxu0 %v2749
        %3238 = vmatpush.msra.mxu0 %v2748
        %3239 = vmatpush.msra.mxu0 %v2747
        %3240 = vmatpush.msra.mxu0 %v2746
        %3241 = vmatmul.f32.gmra.mxu0 %v3223
        %v3242 = vpop.f32.mrf.mxu0
        %v3243 = vadd.f32 0.0, %v3242
        %3244 = vdwg.mxu0
        %v3245 = vmul.f32 %v3243, 0.015625
        %v3246 = vmul.f32 %v3221, %v3221
        %v3247 = vsub.f32 %v3245, %v3246
        %v3248 = vadd.f32 %v3247, 1e-05
        %v3249 = vrsqrt.pop %v3248
        %v3250 = vmul.f32 %v3249, %v3248
        %v3251 = vmul.f32 %v3250, %v3249
        %v3252 = vmul.f32 0.5, %v3251
        %v3253 = vsub.f32 1.5, %v3252
        %v3254 = vmul.f32 %v3249, %v3253
        %vm3255 = vweird.f32 %v3248
        %vm3256 = vweird.f32 %v3249
        %vm3257 = vmor %vm3255, %vm3256
        %v3258 = vsel %vm3257, %v3249, %v3254
        %v3259 = vperm.slane %v3221, 0
        %v3260 = vsub.f32 %v3181, %v3259
        %v3261 = vperm.slane %v3258, 0
        %v3262 = vmul.f32 %v3260, %v3261
        %v3264 = vperm.slane %v2962, 0
        %v3266 = vmul.f32 %v3262, %v3264
        %v3268 = vperm.slane %v2963, 0
        %v3270 = vadd.f32 %v3266, %v3268
        %v3271 = vmax.f32 %v3270, 0.0
        %3272 = vst.msk [vmem:[%s1328] sm:$0xff] %vm1362, %v3271
        %v3273 = vld [vmem:[%s61] sm:$0xf]
        %v3274 = vld [vmem:[%s63] sm:$0xf]
        %v3275 = vld [vmem:[%s65] sm:$0xf]
        %v3276 = vld [vmem:[%s67] sm:$0xff]
        %v3277 = vld [vmem:[%s67 + $0x8] sm:$0xff]
        %v3278 = vld [vmem:[%s67 + $0x10] sm:$0xff]
        %v3279 = vld [vmem:[%s67 + $0x18] sm:$0xff]
        %v3280 = vld [vmem:[%s67 + $0x20] sm:$0xff]
        %v3281 = vld [vmem:[%s67 + $0x28] sm:$0xff]
        %v3282 = vld [vmem:[%s67 + $0x30] sm:$0xff]
        %v3283 = vld [vmem:[%s67 + $0x38] sm:$0xff]
        %v3284 = vld [vmem:[%s67 + $0x40] sm:$0xff]
        %v3285 = vld [vmem:[%s67 + $0x48] sm:$0xff]
        %v3286 = vld [vmem:[%s67 + $0x50] sm:$0xff]
        %v3287 = vld [vmem:[%s67 + $0x58] sm:$0xff]
        %v3288 = vld [vmem:[%s69] sm:$0x1]
        %v3289 = vld [vmem:[%s71] sm:$0x1]
        %v3290 = vld [vmem:[%s73] sm:$0xff]
        %v3291 = vld [vmem:[%s73 + $0x8] sm:$0xff]
        %v3292 = vld [vmem:[%s73 + $0x10] sm:$0xff]
        %v3293 = vld [vmem:[%s73 + $0x18] sm:$0xff]
        %v3294 = vld [vmem:[%s75] sm:$0x1]
        %v3295 = vld [vmem:[%s77] sm:$0x1]
        %v3296 = vld [vmem:[%s79] sm:$0x1]
        %vm3297 = vcmask 64512
        %v3299 = vsel %vm3297, %v3273, 0
        %3301 = vmatpush.msra.mxu0 0.0
        %3302 = vmatpush.msra.mxu0 0.0
        %3303 = vmatpush.msra.mxu0 0.0
        %3304 = vmatpush.msra.mxu0 0.0
        %3305 = vmatpush.msra.mxu0 0.0
        %3306 = vmatpush.msra.mxu0 0.0
        %3307 = vmatpush.msra.mxu0 0.0
        %3308 = vmatpush.msra.mxu0 0.0
        %3309 = vmatpush.msra.mxu0 0.0
        %3310 = vmatpush.msra.mxu0 0.0
        %3311 = vmatpush.msra.mxu0 0.0
        %3312 = vmatpush.msra.mxu0 0.0
        %3313 = vmatpush.msra.mxu0 0.0
        %3314 = vmatpush.msra.mxu0 0.0
        %3315 = vmatpush.msra.mxu0 0.0
        %3316 = vmatpush.msra.mxu0 %v3271
        %3317 = vmatmul.f32.gmra.mxu0 %v3299
        %v3318 = vpop.f32.mrf.mxu0
        %v3319 = vadd.f32 0.0, %v3318
        %3320 = vdwg.mxu0
        %v3322 = vsel %vm3297, %v3274, 0
        %3324 = vmatpush.msra.mxu0 0.0
        %3325 = vmatpush.msra.mxu0 0.0
        %3326 = vmatpush.msra.mxu0 0.0
        %3327 = vmatpush.msra.mxu0 0.0
        %3328 = vmatpush.msra.mxu0 0.0
        %3329 = vmatpush.msra.mxu0 0.0
        %3330 = vmatpush.msra.mxu0 0.0
        %3331 = vmatpush.msra.mxu0 0.0
        %3332 = vmatpush.msra.mxu0 0.0
        %3333 = vmatpush.msra.mxu0 0.0
        %3334 = vmatpush.msra.mxu0 0.0
        %3335 = vmatpush.msra.mxu0 0.0
        %3336 = vmatpush.msra.mxu0 0.0
        %3337 = vmatpush.msra.mxu0 0.0
        %3338 = vmatpush.msra.mxu0 0.0
        %3339 = vmatpush.msra.mxu0 %v3271
        %3340 = vmatmul.f32.gmra.mxu0 %v3322
        %v3341 = vpop.f32.mrf.mxu0
        %v3342 = vadd.f32 0.0, %v3341
        %3343 = vdwg.mxu0
        %v3345 = vsel %vm3297, %v3275, 0
        %3347 = vmatpush.msra.mxu0 0.0
        %3348 = vmatpush.msra.mxu0 0.0
        %3349 = vmatpush.msra.mxu0 0.0
        %3350 = vmatpush.msra.mxu0 0.0
        %3351 = vmatpush.msra.mxu0 0.0
        %3352 = vmatpush.msra.mxu0 0.0
        %3353 = vmatpush.msra.mxu0 0.0
        %3354 = vmatpush.msra.mxu0 0.0
        %3355 = vmatpush.msra.mxu0 0.0
        %3356 = vmatpush.msra.mxu0 0.0
        %3357 = vmatpush.msra.mxu0 0.0
        %3358 = vmatpush.msra.mxu0 0.0
        %3359 = vmatpush.msra.mxu0 0.0
        %3360 = vmatpush.msra.mxu0 0.0
        %3361 = vmatpush.msra.mxu0 0.0
        %3362 = vmatpush.msra.mxu0 %v3271
        %3363 = vmatmul.f32.gmra.mxu0 %v3345
        %v3364 = vpop.f32.mrf.mxu0
        %v3365 = vadd.f32 0.0, %v3364
        %3366 = vdwg.mxu0
        %3368 = vrot.lane.b32.xlu0 %v3342, 32
        %v3369 = vpop.permute.xlu0 %3368
        %3372 = vrot.lane.b32.xlu0 %v3365, 64
        %v3373 = vpop.permute.xlu0 %3372
        %v3375 = vsel %vm1362, %v3319, %v3369
        %v3376 = vsel %vm2764, %v3375, %v3373
        %v3378 = vsel %vm3044, %v3376, 0
        %3380 = vmatpush.msra.mxu0 0.0
        %3381 = vmatpush.msra.mxu0 0.0
        %3382 = vmatpush.msra.mxu0 0.0
        %3383 = vmatpush.msra.mxu0 0.0
        %3384 = vmatpush.msra.mxu0 %v3287
        %3385 = vmatpush.msra.mxu0 %v3286
        %3386 = vmatpush.msra.mxu0 %v3285
        %3387 = vmatpush.msra.mxu0 %v3284
        %3388 = vmatpush.msra.mxu0 %v3283
        %3389 = vmatpush.msra.mxu0 %v3282
        %3390 = vmatpush.msra.mxu0 %v3281
        %3391 = vmatpush.msra.mxu0 %v3280
        %3392 = vmatpush.msra.mxu0 %v3279
        %3393 = vmatpush.msra.mxu0 %v3278
        %3394 = vmatpush.msra.mxu0 %v3277
        %3395 = vmatpush.msra.mxu0 %v3276
        %3396 = vmatmul.f32.gmra.mxu0 %v3378
        %v3397 = vpop.f32.mrf.mxu0
        %v3398 = vadd.f32 0.0, %v3397
        %3399 = vdwg.mxu0
        %vm3400 = vcmask 257024
        %v3401 = vsel %vm3400, %v3398, 0.0
        %v3402 = vrot.slane %v3401, 4
        %v3403 = vadd.f32 %v3401, %v3402
        %v3404 = vrot.slane %v3403, 2
        %v3405 = vadd.f32 %v3403, %v3404
        %v3406 = vrot.slane %v3405, 1
        %v3407 = vadd.f32 %v3405, %v3406
        %v3408 = vmul.f32 %v3398, %v3398
        %v3409 = vsel %vm3400, %v3408, 0.0
        %v3410 = vrot.slane %v3409, 4
        %v3411 = vadd.f32 %v3409, %v3410
        %v3412 = vrot.slane %v3411, 2
        %v3413 = vadd.f32 %v3411, %v3412
        %v3414 = vrot.slane %v3413, 1
        %v3415 = vadd.f32 %v3413, %v3414
        %v3417 = vsel %vm1362, %v3407, 0
        %3419 = vmatpush.msra.mxu0 0.0
        %3420 = vmatpush.msra.mxu0 0.0
        %3421 = vmatpush.msra.mxu0 0.0
        %3422 = vmatpush.msra.mxu0 0.0
        %3423 = vmatpush.msra.mxu0 0.0
        %3424 = vmatpush.msra.mxu0 0.0
        %3425 = vmatpush.msra.mxu0 0.0
        %3426 = vmatpush.msra.mxu0 0.0
        %3427 = vmatpush.msra.mxu0 0.0
        %3428 = vmatpush.msra.mxu0 0.0
        %3429 = vmatpush.msra.mxu0 0.0
        %3430 = vmatpush.msra.mxu0 0.0
        %3431 = vmatpush.msra.mxu0 %v2749
        %3432 = vmatpush.msra.mxu0 %v2748
        %3433 = vmatpush.msra.mxu0 %v2747
        %3434 = vmatpush.msra.mxu0 %v2746
        %3435 = vmatmul.f32.gmra.mxu0 %v3417
        %v3436 = vpop.f32.mrf.mxu0
        %v3437 = vadd.f32 0.0, %v3436
        %3438 = vdwg.mxu0
        %v3439 = vmul.f32 %v3437, 0.03125
        %v3441 = vsel %vm1362, %v3415, 0
        %3443 = vmatpush.msra.mxu0 0.0
        %3444 = vmatpush.msra.mxu0 0.0
        %3445 = vmatpush.msra.mxu0 0.0
        %3446 = vmatpush.msra.mxu0 0.0
        %3447 = vmatpush.msra.mxu0 0.0
        %3448 = vmatpush.msra.mxu0 0.0
        %3449 = vmatpush.msra.mxu0 0.0
        %3450 = vmatpush.msra.mxu0 0.0
        %3451 = vmatpush.msra.mxu0 0.0
        %3452 = vmatpush.msra.mxu0 0.0
        %3453 = vmatpush.msra.mxu0 0.0
        %3454 = vmatpush.msra.mxu0 0.0
        %3455 = vmatpush.msra.mxu0 %v2749
        %3456 = vmatpush.msra.mxu0 %v2748
        %3457 = vmatpush.msra.mxu0 %v2747
        %3458 = vmatpush.msra.mxu0 %v2746
        %3459 = vmatmul.f32.gmra.mxu0 %v3441
        %v3460 = vpop.f32.mrf.mxu0
        %v3461 = vadd.f32 0.0, %v3460
        %3462 = vdwg.mxu0
        %v3463 = vmul.f32 %v3461, 0.03125
        %v3464 = vmul.f32 %v3439, %v3439
        %v3465 = vsub.f32 %v3463, %v3464
        %v3466 = vadd.f32 %v3465, 1e-05
        %v3467 = vrsqrt.pop %v3466
        %v3468 = vmul.f32 %v3467, %v3466
        %v3469 = vmul.f32 %v3468, %v3467
        %v3470 = vmul.f32 0.5, %v3469
        %v3471 = vsub.f32 1.5, %v3470
        %v3472 = vmul.f32 %v3467, %v3471
        %vm3473 = vweird.f32 %v3466
        %vm3474 = vweird.f32 %v3467
        %vm3475 = vmor %vm3473, %vm3474
        %v3476 = vsel %vm3475, %v3467, %v3472
        %v3477 = vperm.slane %v3439, 0
        %v3478 = vsub.f32 %v3398, %v3477
        %v3479 = vperm.slane %v3476, 0
        %v3480 = vmul.f32 %v3478, %v3479
        %v3482 = vperm.slane %v3288, 0
        %v3484 = vmul.f32 %v3480, %v3482
        %v3486 = vperm.slane %v3289, 0
        %v3488 = vadd.f32 %v3484, %v3486
        %v3489 = vmax.f32 %v3488, 0.0
        %v3491 = vperm.slane %v3294, 0
        %v3494 = vsel %vm1362, %v3489, 0
        %3496 = vmatpush.msra.mxu0 0.0
        %3497 = vmatpush.msra.mxu0 0.0
        %3498 = vmatpush.msra.mxu0 0.0
        %3499 = vmatpush.msra.mxu0 0.0
        %3500 = vmatpush.msra.mxu0 0.0
        %3501 = vmatpush.msra.mxu0 0.0
        %3502 = vmatpush.msra.mxu0 0.0
        %3503 = vmatpush.msra.mxu0 0.0
        %3504 = vmatpush.msra.mxu0 0.0
        %3505 = vmatpush.msra.mxu0 0.0
        %3506 = vmatpush.msra.mxu0 0.0
        %3507 = vmatpush.msra.mxu0 0.0
        %3508 = vmatpush.msra.mxu0 %v3293
        %3509 = vmatpush.msra.mxu0 %v3292
        %3510 = vmatpush.msra.mxu0 %v3291
        %3511 = vmatpush.msra.mxu0 %v3290
        %3512 = vmatmul.f32.gmra.mxu0 %v3494
        %v3513 = vpop.f32.mrf.mxu0
        %v3514 = vadd.f32 %v3491, %v3513
        %3515 = vdwg.mxu0
        %v3516 = vsel %vm3400, %v3514, 0.0
        %v3517 = vrot.slane %v3516, 4
        %v3518 = vadd.f32 %v3516, %v3517
        %v3519 = vrot.slane %v3518, 2
        %v3520 = vadd.f32 %v3518, %v3519
        %v3521 = vrot.slane %v3520, 1
        %v3522 = vadd.f32 %v3520, %v3521
        %v3523 = vmul.f32 %v3514, %v3514
        %v3524 = vsel %vm3400, %v3523, 0.0
        %v3525 = vrot.slane %v3524, 4
        %v3526 = vadd.f32 %v3524, %v3525
        %v3527 = vrot.slane %v3526, 2
        %v3528 = vadd.f32 %v3526, %v3527
        %v3529 = vrot.slane %v3528, 1
        %v3530 = vadd.f32 %v3528, %v3529
        %v3532 = vsel %vm1362, %v3522, 0
        %3534 = vmatpush.msra.mxu0 0.0
        %3535 = vmatpush.msra.mxu0 0.0
        %3536 = vmatpush.msra.mxu0 0.0
        %3537 = vmatpush.msra.mxu0 0.0
        %3538 = vmatpush.msra.mxu0 0.0
        %3539 = vmatpush.msra.mxu0 0.0
        %3540 = vmatpush.msra.mxu0 0.0
        %3541 = vmatpush.msra.mxu0 0.0
        %3542 = vmatpush.msra.mxu0 0.0
        %3543 = vmatpush.msra.mxu0 0.0
        %3544 = vmatpush.msra.mxu0 0.0
        %3545 = vmatpush.msra.mxu0 0.0
        %3546 = vmatpush.msra.mxu0 %v2749
        %3547 = vmatpush.msra.mxu0 %v2748
        %3548 = vmatpush.msra.mxu0 %v2747
        %3549 = vmatpush.msra.mxu0 %v2746
        %3550 = vmatmul.f32.gmra.mxu0 %v3532
        %v3551 = vpop.f32.mrf.mxu0
        %v3552 = vadd.f32 0.0, %v3551
        %3553 = vdwg.mxu0
        %v3554 = vmul.f32 %v3552, 0.03125
        %v3556 = vsel %vm1362, %v3530, 0
        %3558 = vmatpush.msra.mxu0 0.0
        %3559 = vmatpush.msra.mxu0 0.0
        %3560 = vmatpush.msra.mxu0 0.0
        %3561 = vmatpush.msra.mxu0 0.0
        %3562 = vmatpush.msra.mxu0 0.0
        %3563 = vmatpush.msra.mxu0 0.0
        %3564 = vmatpush.msra.mxu0 0.0
        %3565 = vmatpush.msra.mxu0 0.0
        %3566 = vmatpush.msra.mxu0 0.0
        %3567 = vmatpush.msra.mxu0 0.0
        %3568 = vmatpush.msra.mxu0 0.0
        %3569 = vmatpush.msra.mxu0 0.0
        %3570 = vmatpush.msra.mxu0 %v2749
        %3571 = vmatpush.msra.mxu0 %v2748
        %3572 = vmatpush.msra.mxu0 %v2747
        %3573 = vmatpush.msra.mxu0 %v2746
        %3574 = vmatmul.f32.gmra.mxu0 %v3556
        %v3575 = vpop.f32.mrf.mxu0
        %v3576 = vadd.f32 0.0, %v3575
        %3577 = vdwg.mxu0
        %v3578 = vmul.f32 %v3576, 0.03125
        %v3579 = vmul.f32 %v3554, %v3554
        %v3580 = vsub.f32 %v3578, %v3579
        %v3581 = vadd.f32 %v3580, 1e-05
        %v3582 = vrsqrt.pop %v3581
        %v3583 = vmul.f32 %v3582, %v3581
        %v3584 = vmul.f32 %v3583, %v3582
        %v3585 = vmul.f32 0.5, %v3584
        %v3586 = vsub.f32 1.5, %v3585
        %v3587 = vmul.f32 %v3582, %v3586
        %vm3588 = vweird.f32 %v3581
        %vm3589 = vweird.f32 %v3582
        %vm3590 = vmor %vm3588, %vm3589
        %v3591 = vsel %vm3590, %v3582, %v3587
        %v3592 = vperm.slane %v3554, 0
        %v3593 = vsub.f32 %v3514, %v3592
        %v3594 = vperm.slane %v3591, 0
        %v3595 = vmul.f32 %v3593, %v3594
        %v3597 = vperm.slane %v3295, 0
        %v3599 = vmul.f32 %v3595, %v3597
        %v3601 = vperm.slane %v3296, 0
        %v3603 = vadd.f32 %v3599, %v3601
        %v3604 = vmax.f32 %v3603, 0.0
        %3605 = vst.msk [vmem:[%s1335] sm:$0xf] %vm3400, %v3604
        %s3606 = sand.u32 %s967, 1
        %s3607 = scalar_lea.sflag [#allocation3], %s3606
        %s3608 = sand.u32 %s967, 1
        %s3609 = smul.addr %s3608, 16
        %s3610 = scalar_lea.vmem [#allocation5], %s3609
        %s3611 = sand.u32 %s109, 1
        %s3612 = scalar_lea.sflag [#allocation7], %s3611
        %s3613 = sand.u32 %s993, 1
        %s3614 = smul.addr %s3613, 8
        %s3615 = scalar_lea.vmem [#allocation6], %s3614
        %s3616 = sand.u32 %s109, 1
        %s3617 = scalar_lea.sflag [#allocation7], %s3616
        %s3618 = sand.u32 %s1019, 1
        %s3619 = smul.addr %s3618, 4
        %s3620 = scalar_lea.vmem [#allocation8], %s3619
        %s3621 = sand.u32 %s1045, 1
        %s3622 = scalar_lea.sflag [#allocation10], %s3621
        %s3623 = sand.u32 %s1045, 1
        %s3624 = smul.addr %s3623, 8
        %s3625 = scalar_lea.vmem [#allocation9], %s3624
        // Predicated region
        $region185: #{model_forward.1} parent=179 // pred_check
          %p3626 = pneg %p977
        $region186: #{model_forward.1} parent=179 // pred_check_branch
          %3628 = sbr.rel (%p3626) target = $region188
        $region187: #{model_forward.1} parent=179 // pred_region
          %3630 = vsyncadd %s3607, 0
          %s3631 = smul.addr %s109, 2
          %s3632 = smul.addr %s3631, 8
          %s3633 = scalar_lea.hbm %s81, %s3632
          %s3634 = sshll.u32 %s3610, 4
          %s3635 = int_to_ptr.vmem [resolvable:$true] %s3634
          %s3636 = sshll.u32 %s3633, 4
          %s3637 = int_to_ptr.hbm [resolvable:$true] %s3636
          %3642 = dma.vmem_to_hbm [thread:$0]  %s3635, 256, %s3637, %s3607, 128, 128, 8
        $region188: #{model_forward.1} parent=179 // pred_fallthru
          _
        // Predicated region
        $region189: #{model_forward.1} parent=179 // pred_check
          %p3643 = pneg %p1003
        $region190: #{model_forward.1} parent=179 // pred_check_branch
          %3645 = sbr.rel (%p3643) target = $region192
        $region191: #{model_forward.1} parent=179 // pred_region
          %3647 = vsyncadd %s3612, 0
          %s3648 = smul.addr %s109, 8
          %s3649 = scalar_lea.hbm %s83, %s3648
          %s3651 = sshll.u32 %s3615, 4
          %s3652 = int_to_ptr.vmem [resolvable:$true] %s3651
          %s3653 = sshll.u32 %s3649, 4
          %s3654 = int_to_ptr.hbm [resolvable:$true] %s3653
          %3656 = dma.vmem_to_hbm [thread:$0]  %s3652, 128, %s3654, %s3612
        $region192: #{model_forward.1} parent=179 // pred_fallthru
          _
        // Predicated region
        $region193: #{model_forward.1} parent=179 // pred_check
          %p3657 = pneg %p1029
        $region194: #{model_forward.1} parent=179 // pred_check_branch
          %3659 = sbr.rel (%p3657) target = $region196
        $region195: #{model_forward.1} parent=179 // pred_region
          %3661 = vsyncadd %s3617, 0
          %s3662 = smul.addr %s109, 4
          %s3663 = scalar_lea.hbm %s85, %s3662
          %s3665 = sshll.u32 %s3620, 4
          %s3666 = int_to_ptr.vmem [resolvable:$true] %s3665
          %s3667 = sshll.u32 %s3663, 4
          %s3668 = int_to_ptr.hbm [resolvable:$true] %s3667
          %3670 = dma.vmem_to_hbm [thread:$0]  %s3666, 64, %s3668, %s3617
        $region196: #{model_forward.1} parent=179 // pred_fallthru
          _
        // Predicated region
        $region197: #{model_forward.1} parent=179 // pred_check
          %p3671 = pneg %p1055
        $region198: #{model_forward.1} parent=179 // pred_check_branch
          %3673 = sbr.rel (%p3671) target = $region200
        $region199: #{model_forward.1} parent=179 // pred_region
          %3675 = vsyncadd %s3622, 0
          %s3676 = smul.addr %s109, 8
          %s3677 = scalar_lea.hbm %s87, %s3676
          %s3679 = sshll.u32 %s3625, 4
          %s3680 = int_to_ptr.vmem [resolvable:$true] %s3679
          %s3681 = sshll.u32 %s3677, 4
          %s3682 = int_to_ptr.hbm [resolvable:$true] %s3681
          %3684 = dma.vmem_to_hbm [thread:$0]  %s3680, 128, %s3682, %s3622
        $region200: #{model_forward.1} parent=179 // pred_fallthru
          _
      $region180: #{model_forward.1} parent=5 // pred_fallthru
        _
      %p3685 = scmp.le.s32.totalorder 2, %s104
      // Predicated region
      $region201: #{model_forward.1} parent=5 // pred_check
        %p3686 = pneg %p3685
      $region202: #{model_forward.1} parent=5 // pred_check_branch
        %3688 = sbr.rel (%p3686) target = $region204
      $region203: #{model_forward.1} parent=5 // pred_region
        %s3689 = ssub.s32 %s104, 2
        // Predicated region
        $region205: #{model_forward.1} parent=203 // pred_check
          %p3690 = pneg %p983
        $region206: #{model_forward.1} parent=203 // pred_check_branch
          %3692 = sbr.rel (%p3690) target = $region208
        $region207: #{model_forward.1} parent=203 // pred_region
          %s3693 = sand.u32 %s968, 1
          %s3694 = scalar_lea.sflag [#allocation3], %s3693
          %s3695 = sand.u32 %s968, 1
          %s3696 = smul.addr %s3695, 16
          %s3697 = scalar_lea.vmem [#allocation5], %s3696
          %3699 = dma.done %s3694, 256
        $region208: #{model_forward.1} parent=203 // pred_fallthru
          _
        // Predicated region
        $region209: #{model_forward.1} parent=203 // pred_check
          %p3700 = pneg %p1009
        $region210: #{model_forward.1} parent=203 // pred_check_branch
          %3702 = sbr.rel (%p3700) target = $region212
        $region211: #{model_forward.1} parent=203 // pred_region
          %s3703 = sand.u32 %s110, 1
          %s3704 = scalar_lea.sflag [#allocation7], %s3703
          %s3705 = sand.u32 %s994, 1
          %s3706 = smul.addr %s3705, 8
          %s3707 = scalar_lea.vmem [#allocation6], %s3706
          %3709 = dma.done %s3704, 128
        $region212: #{model_forward.1} parent=203 // pred_fallthru
          _
        // Predicated region
        $region213: #{model_forward.1} parent=203 // pred_check
          %p3710 = pneg %p1035
        $region214: #{model_forward.1} parent=203 // pred_check_branch
          %3712 = sbr.rel (%p3710) target = $region216
        $region215: #{model_forward.1} parent=203 // pred_region
          %s3713 = sand.u32 %s110, 1
          %s3714 = scalar_lea.sflag [#allocation7], %s3713
          %s3715 = sand.u32 %s1020, 1
          %s3716 = smul.addr %s3715, 4
          %s3717 = scalar_lea.vmem [#allocation8], %s3716
          %3719 = dma.done %s3714, 64
        $region216: #{model_forward.1} parent=203 // pred_fallthru
          _
        // Predicated region
        $region217: #{model_forward.1} parent=203 // pred_check
          %p3720 = pneg %p1061
        $region218: #{model_forward.1} parent=203 // pred_check_branch
          %3722 = sbr.rel (%p3720) target = $region220
        $region219: #{model_forward.1} parent=203 // pred_region
          %s3723 = sand.u32 %s1046, 1
          %s3724 = scalar_lea.sflag [#allocation10], %s3723
          %s3725 = sand.u32 %s1046, 1
          %s3726 = smul.addr %s3725, 8
          %s3727 = scalar_lea.vmem [#allocation9], %s3726
          %3729 = dma.done %s3724, 128
        $region220: #{model_forward.1} parent=203 // pred_fallthru
          _
      $region204: #{model_forward.1} parent=5 // pred_fallthru
        _
    $region6: #{model_forward.1} parent=1 // loop_footer
      %s108 = sadd.s32 1, %s104
    $region7: #{model_forward.1} parent=1 // loop_footer_branch
      %103 = sbr.rel target = $region3
    $region8: #{model_forward.1} parent=1 // loop_exit
      _
    %3730 = vsyncpa [#allocation3], 1
    %s3731 = scalar_lea.sflag [#allocation3], 1
    %3732 = vsyncpa %s3731, 1
    %3733 = vsyncpa [#allocation7], 1
    %s3734 = scalar_lea.sflag [#allocation7], 1
    %3735 = vsyncpa %s3734, 1
    %3736 = vsyncpa [#allocation10], 1
    %s3737 = scalar_lea.sflag [#allocation10], 1
    %3738 = vsyncpa %s3737, 1
    %3739 = vsyncpa [#allocation4], 1
    %s3740 = scalar_lea.sflag [#allocation4], 1
    %3741 = vsyncpa %s3740, 1

</llo_original>
